<compile_context>
chip_gen: v6e
topology: v6e:2x2x1
jax: 0.10.0
libtpu: 0.0.40
codegen_flags: <defaults>
</compile_context>

<pallas_src>
import jax
import jax.numpy as jnp
import numpy as np
from jax import lax
from jax.experimental import pallas as pl
from jax.experimental.pallas import tpu as pltpu


# --------------------------------------------------------------------------
# Fused kernel: conv1(+PReLU) -> conv2 -> channel attention -> residual.
# One batch element per grid step; all intermediates live in VMEM.
# --------------------------------------------------------------------------
def _rescab_kernel(x_ref, w1_ref, b1_ref, w2_ref, b2_ref,
                   wm1_ref, bm1_ref, wm2_ref, bm2_ref,
                   wa1_ref, ba1_ref, wa2_ref, ba2_ref,
                   alpha_ref,                      # (3,) SMEM: [a_block, a_max, a_avg]
                   o_ref,                          # (1, H, W, C)
                   xpad_ref,                       # VMEM (H+2, W+2, C) halo scratch
                   patch_ref):                     # VMEM (H*W, 9*C)  im2col scratch
    _, H, W, C = o_ref.shape

    # Zero the halo scratch; borders stay zero, interiors are overwritten below.
    xpad_ref[...] = jnp.zeros_like(xpad_ref)

    def conv3x3(src_hwc, w_ref, b_ref):
        # 3x3 conv, stride 1, pad 1, as a single im2col matmul (K = 9*C).
        xpad_ref[1:H + 1, 1:W + 1, :] = src_hwc
        for k in range(9):                              # static unroll over taps
            dy, dx = k // 3, k % 3
            patch_ref[:, k * C:(k + 1) * C] = (
                xpad_ref[dy:dy + H, dx:dx + W, :].reshape(H * W, C))
        return jnp.dot(patch_ref[...], w_ref[...],
                       preferred_element_type=jnp.float32) + b_ref[...]

    x = x_ref[0].astype(jnp.float32)                    # (H, W, C)

    y1 = conv3x3(x, w1_ref, b1_ref)                     # (H*W, C)
    a1 = alpha_ref[0]
    y1 = jnp.where(y1 >= 0, y1, a1 * y1)                # PReLU (scalar alpha)

    f = conv3x3(y1.reshape(H, W, C), w2_ref, b2_ref)    # (H*W, C)

    # --- Resca channel attention: pooling fused here, f never leaves VMEM ---
    f_max = jnp.max(f, axis=0, keepdims=True)           # (1, C)  AdaptiveMaxPool2d(1)
    f_avg = jnp.mean(f, axis=0, keepdims=True)          # (1, C)  AdaptiveAvgPool2d(1)

    def se(v, wA_ref, bA_ref, a, wB_ref, bB_ref):       # 1x1 -> PReLU -> 1x1
        h = jnp.dot(v, wA_ref[...], preferred_element_type=jnp.float32) + bA_ref[...]
        h = jnp.where(h >= 0, h, a * h)
        return jnp.dot(h, wB_ref[...], preferred_element_type=jnp.float32) + bB_ref[...]

    att = jax.nn.sigmoid(
        se(f_max, wm1_ref, bm1_ref, alpha_ref[1], wm2_ref, bm2_ref)
        + se(f_avg, wa1_ref, ba1_ref, alpha_ref[2], wa2_ref, ba2_ref))

    out = x.reshape(H * W, C) + att * f                 # residual + attention
    o_ref[...] = out.reshape(1, H, W, C).astype(o_ref.dtype)


# --------------------------------------------------------------------------
# ResCAB forward (NCHW in / NCHW out, matching the PyTorch module)
# --------------------------------------------------------------------------
def rescab_forward(x_nchw, params):
    x = jnp.transpose(x_nchw, (0, 2, 3, 1))             # NCHW -> NHWC (one pass)
    N, H, W, C = x.shape
    Cr = params["wm1"].shape[-1]

    # Conv weights as (9*Cin, Cout) so the kernel contracts over K = 9*Cin.
    w1 = params["w1"].reshape(9 * C, C)
    w2 = params["w2"].reshape(9 * C, C)
    alphas = jnp.concatenate([params["a1"].reshape(1),
                              params["am"].reshape(1),
                              params["aa"].reshape(1)]).astype(jnp.float32)

    full = lambda shape: pl.BlockSpec(shape, lambda n: (0,) * len(shape))

    out = pl.pallas_call(
        _rescab_kernel,
        out_shape=jax.ShapeDtypeStruct((N, H, W, C), jnp.float32),
        grid=(N,),
        in_specs=[
            pl.BlockSpec((1, H, W, C), lambda n: (n, 0, 0, 0)),   # x
            full((9 * C, C)), full((1, C)),                       # conv1 w, b
            full((9 * C, C)), full((1, C)),                       # conv2 w, b
            full((C, Cr)), full((1, Cr)), full((Cr, C)), full((1, C)),  # max branch
            full((C, Cr)), full((1, Cr)), full((Cr, C)), full((1, C)),  # avg branch
            pl.BlockSpec(memory_space=pltpu.MemorySpace.SMEM),     # alphas (3,)
        ],
        out_specs=pl.BlockSpec((1, H, W, C), lambda n: (n, 0, 0, 0)),
        scratch_shapes=[
            pltpu.VMEM((H + 2, W + 2, C), jnp.float32),            # halo scratch
            pltpu.VMEM((H * W, 9 * C), jnp.float32),               # im2col scratch
        ],
        input_output_aliases={0: 0},                               # reuse x's buffer
        compiler_params=pltpu.CompilerParams(
            dimension_semantics=("parallel",)),
    )(x, w1, params["b1"], w2, params["b2"],
      params["wm1"], params["bm1"], params["wm2"], params["bm2"],
      params["wa1"], params["ba1"], params["wa2"], params["ba2"],
      alphas)

    return jnp.transpose(out, (0, 3, 1, 2))             # NHWC -> NCHW


# --------------------------------------------------------------------------
# Deterministic parameter construction (synthetic; PyTorch __init__ shapes)
# --------------------------------------------------------------------------
def make_params(key, in_channels, reduction):
    c, cr = in_channels, in_channels // reduction
    ks = jax.random.split(key, 12)
    rnd = lambda k, shape, s=0.05: (s * jax.random.normal(k, shape)).astype(jnp.float32)
    return {
        # block: Conv3x3 -> PReLU -> Conv3x3   (weights stored as (9, Cin, Cout))
        "w1": rnd(ks[0], (9, c, c)), "b1": rnd(ks[1], (1, c)),
        "a1": jnp.full((1, 1), 0.25, jnp.float32),
        "w2": rnd(ks[2], (9, c, c)), "b2": rnd(ks[3], (1, c)),
        # Resca max branch: 1x1 conv (Cin,Cr) -> PReLU -> 1x1 conv (Cr,Cin)
        "wm1": rnd(ks[4], (c, cr)), "bm1": rnd(ks[5], (1, cr)),
        "am": jnp.full((1, 1), 0.25, jnp.float32),
        "wm2": rnd(ks[6], (cr, c)), "bm2": rnd(ks[7], (1, c)),
        # Resca avg branch
        "wa1": rnd(ks[8], (c, cr)), "ba1": rnd(ks[9], (1, cr)),
        "aa": jnp.full((1, 1), 0.25, jnp.float32),
        "wa2": rnd(ks[10], (cr, c)), "ba2": rnd(ks[11], (1, c)),
    }


# --------------------------------------------------------------------------
# Pure-JAX reference (independent of the kernel) for a sanity check
# --------------------------------------------------------------------------
def rescab_reference(x_nchw, p):
    x = jnp.transpose(x_nchw, (0, 2, 3, 1))

    def conv(xin, w9, b, alpha, prelu):
        hwio = w9.reshape(3, 3, xin.shape[-1], -1)
        y = lax.conv_general_dilated(
            xin, hwio, window_strides=(1, 1), padding="SAME",
            dimension_numbers=("NHWC", "HWIO", "NHWC")) + b.reshape(1, 1, 1, -1)
        if prelu:
            y = jnp.where(y >= 0, y, alpha[0, 0] * y)
        return y

    y1 = conv(x, p["w1"], p["b1"], p["a1"], True)
    f = conv(y1, p["w2"], p["b2"], p["a1"], False)

    def se(v, w1, b1, a, w2, b2):
        h = v @ w1 + b1
        h = jnp.where(h >= 0, h, a[0, 0] * h)
        return h @ w2 + b2

    f_max = jnp.max(f, axis=(1, 2))
    f_avg = jnp.mean(f, axis=(1, 2))
    att = jax.nn.sigmoid(se(f_max, p["wm1"], p["bm1"], p["am"], p["wm2"], p["bm2"])
                         + se(f_avg, p["wa1"], p["ba1"], p["aa"], p["wa2"], p["ba2"]))
    out = x + att[:, None, None, :] * f
    return jnp.transpose(out, (0, 3, 1, 2))


if __name__ == "__main__":
    in_channels, reduction = 8, 4
    N, H, W = 2, 16, 16

    key = jax.random.PRNGKey(0)
    kx, kp = jax.random.split(key)
    x = jax.random.normal(kx, (N, in_channels, H, W), dtype=jnp.float32)
    params = make_params(kp, in_channels, reduction)

    out = jax.block_until_ready(jax.jit(rescab_forward)(x, params))
    ref = jax.block_until_ready(rescab_reference(x, params))

    assert out.shape == (N, in_channels, H, W)
    np.testing.assert_allclose(np.asarray(out), np.asarray(ref),
                               rtol=1e-3, atol=1e-3)
    print("KERNEL_OK")
</pallas_src>

<mosaic_0001>
module attributes {stable_mosaic.version = 11 : i64} {
  func.func @_rescab_kernel(%arg0: i32, %arg1: memref<1x16x16x8xf32, #tpu.memory_space<vmem>>, %arg2: memref<72x8xf32, #tpu.memory_space<vmem>>, %arg3: memref<1x8xf32, #tpu.memory_space<vmem>>, %arg4: memref<72x8xf32, #tpu.memory_space<vmem>>, %arg5: memref<1x8xf32, #tpu.memory_space<vmem>>, %arg6: memref<8x2xf32, #tpu.memory_space<vmem>>, %arg7: memref<1x2xf32, #tpu.memory_space<vmem>>, %arg8: memref<2x8xf32, #tpu.memory_space<vmem>>, %arg9: memref<1x8xf32, #tpu.memory_space<vmem>>, %arg10: memref<8x2xf32, #tpu.memory_space<vmem>>, %arg11: memref<1x2xf32, #tpu.memory_space<vmem>>, %arg12: memref<2x8xf32, #tpu.memory_space<vmem>>, %arg13: memref<1x8xf32, #tpu.memory_space<vmem>>, %arg14: memref<3xf32, #tpu.memory_space<smem>>, %arg15: memref<1x16x16x8xf32, #tpu.memory_space<vmem>>, %arg16: memref<18x18x8xf32, #tpu.memory_space<vmem>>, %arg17: memref<256x72xf32, #tpu.memory_space<vmem>>) attributes {dimension_semantics = [#tpu.dimension_semantics<parallel>], iteration_bounds = array<i64: 2>, scalar_prefetch = 0 : i64, scratch_operands = 2 : i64, tpu.core_type = #tpu.core_type<tc>, window_params = [{transform_indices = @transform_0, window_bounds = array<i64: 1, 16, 16, 8>}, {pipeline_mode = #tpu.pipeline_mode<synchronous>, transform_indices = @transform_1, window_bounds = array<i64: 72, 8>}, {pipeline_mode = #tpu.pipeline_mode<synchronous>, transform_indices = @transform_2, window_bounds = array<i64: 1, 8>}, {pipeline_mode = #tpu.pipeline_mode<synchronous>, transform_indices = @transform_3, window_bounds = array<i64: 72, 8>}, {pipeline_mode = #tpu.pipeline_mode<synchronous>, transform_indices = @transform_4, window_bounds = array<i64: 1, 8>}, {pipeline_mode = #tpu.pipeline_mode<synchronous>, transform_indices = @transform_5, window_bounds = array<i64: 8, 2>}, {pipeline_mode = #tpu.pipeline_mode<synchronous>, transform_indices = @transform_6, window_bounds = array<i64: 1, 2>}, {pipeline_mode = #tpu.pipeline_mode<synchronous>, transform_indices = @transform_7, window_bounds = array<i64: 2, 8>}, {pipeline_mode = #tpu.pipeline_mode<synchronous>, transform_indices = @transform_8, window_bounds = array<i64: 1, 8>}, {pipeline_mode = #tpu.pipeline_mode<synchronous>, transform_indices = @transform_9, window_bounds = array<i64: 8, 2>}, {pipeline_mode = #tpu.pipeline_mode<synchronous>, transform_indices = @transform_10, window_bounds = array<i64: 1, 2>}, {pipeline_mode = #tpu.pipeline_mode<synchronous>, transform_indices = @transform_11, window_bounds = array<i64: 2, 8>}, {pipeline_mode = #tpu.pipeline_mode<synchronous>, transform_indices = @transform_12, window_bounds = array<i64: 1, 8>}, {transform_indices = @transform_13, window_bounds = array<i64: 3>}, {transform_indices = @transform_14, window_bounds = array<i64: 1, 16, 16, 8>}]} {
    %cst = arith.constant 0.000000e+00 : f32
    %0 = vector.broadcast %cst : f32 to vector<18x18x8xf32>
    %c0 = arith.constant 0 : index
    %c0_0 = arith.constant 0 : index
    %c0_1 = arith.constant 0 : index
    %1 = vector.load %arg16[%c0, %c0_0, %c0_1] : memref<18x18x8xf32, #tpu.memory_space<vmem>>, vector<18x18x8xf32>
    tpu.vector_store %arg16[%c0, %c0_0, %c0_1], %0 {strides = array<i32>} : memref<18x18x8xf32, #tpu.memory_space<vmem>>, vector<18x18x8xf32>,
    %c0_2 = arith.constant 0 : index
    %c0_3 = arith.constant 0 : index
    %c0_4 = arith.constant 0 : index
    %c0_5 = arith.constant 0 : index
    %2 = vector.load %arg1[%c0_2, %c0_3, %c0_4, %c0_5] : memref<1x16x16x8xf32, #tpu.memory_space<vmem>>, vector<1x16x16x8xf32>
    %3 = vector.shape_cast %2 : vector<1x16x16x8xf32> to vector<16x16x8xf32>
    %c1 = arith.constant 1 : index
    %c1_6 = arith.constant 1 : index
    %c0_7 = arith.constant 0 : index
    %4 = vector.load %arg16[%c1, %c1_6, %c0_7] : memref<18x18x8xf32, #tpu.memory_space<vmem>>, vector<16x16x8xf32>
    tpu.vector_store %arg16[%c1, %c1_6, %c0_7], %3 {strides = array<i32>} : memref<18x18x8xf32, #tpu.memory_space<vmem>>, vector<16x16x8xf32>,
    %c0_8 = arith.constant 0 : index
    %c0_9 = arith.constant 0 : index
    %c0_10 = arith.constant 0 : index
    %5 = vector.load %arg16[%c0_8, %c0_9, %c0_10] : memref<18x18x8xf32, #tpu.memory_space<vmem>>, vector<16x16x8xf32>
    %6 = vector.shape_cast %5 : vector<16x16x8xf32> to vector<256x8xf32>
    %c0_11 = arith.constant 0 : index
    %c0_12 = arith.constant 0 : index
    %7 = vector.load %arg17[%c0_11, %c0_12] : memref<256x72xf32, #tpu.memory_space<vmem>>, vector<256x8xf32>
    tpu.vector_store %arg17[%c0_11, %c0_12], %6 {strides = array<i32>} : memref<256x72xf32, #tpu.memory_space<vmem>>, vector<256x8xf32>,
    %c0_13 = arith.constant 0 : index
    %c1_14 = arith.constant 1 : index
    %c0_15 = arith.constant 0 : index
    %8 = vector.load %arg16[%c0_13, %c1_14, %c0_15] : memref<18x18x8xf32, #tpu.memory_space<vmem>>, vector<16x16x8xf32>
    %9 = vector.shape_cast %8 : vector<16x16x8xf32> to vector<256x8xf32>
    %c0_16 = arith.constant 0 : index
    %c8 = arith.constant 8 : index
    %10 = vector.load %arg17[%c0_16, %c8] : memref<256x72xf32, #tpu.memory_space<vmem>>, vector<256x8xf32>
    tpu.vector_store %arg17[%c0_16, %c8], %9 {strides = array<i32>} : memref<256x72xf32, #tpu.memory_space<vmem>>, vector<256x8xf32>,
    %c0_17 = arith.constant 0 : index
    %c2 = arith.constant 2 : index
    %c0_18 = arith.constant 0 : index
    %11 = vector.load %arg16[%c0_17, %c2, %c0_18] : memref<18x18x8xf32, #tpu.memory_space<vmem>>, vector<16x16x8xf32>
    %12 = vector.shape_cast %11 : vector<16x16x8xf32> to vector<256x8xf32>
    %c0_19 = arith.constant 0 : index
    %c16 = arith.constant 16 : index
    %13 = vector.load %arg17[%c0_19, %c16] : memref<256x72xf32, #tpu.memory_space<vmem>>, vector<256x8xf32>
    tpu.vector_store %arg17[%c0_19, %c16], %12 {strides = array<i32>} : memref<256x72xf32, #tpu.memory_space<vmem>>, vector<256x8xf32>,
    %c1_20 = arith.constant 1 : index
    %c0_21 = arith.constant 0 : index
    %c0_22 = arith.constant 0 : index
    %14 = vector.load %arg16[%c1_20, %c0_21, %c0_22] : memref<18x18x8xf32, #tpu.memory_space<vmem>>, vector<16x16x8xf32>
    %15 = vector.shape_cast %14 : vector<16x16x8xf32> to vector<256x8xf32>
    %c0_23 = arith.constant 0 : index
    %c24 = arith.constant 24 : index
    %16 = vector.load %arg17[%c0_23, %c24] : memref<256x72xf32, #tpu.memory_space<vmem>>, vector<256x8xf32>
    tpu.vector_store %arg17[%c0_23, %c24], %15 {strides = array<i32>} : memref<256x72xf32, #tpu.memory_space<vmem>>, vector<256x8xf32>,
    %c1_24 = arith.constant 1 : index
    %c1_25 = arith.constant 1 : index
    %c0_26 = arith.constant 0 : index
    %17 = vector.load %arg16[%c1_24, %c1_25, %c0_26] : memref<18x18x8xf32, #tpu.memory_space<vmem>>, vector<16x16x8xf32>
    %18 = vector.shape_cast %17 : vector<16x16x8xf32> to vector<256x8xf32>
    %c0_27 = arith.constant 0 : index
    %c32 = arith.constant 32 : index
    %19 = vector.load %arg17[%c0_27, %c32] : memref<256x72xf32, #tpu.memory_space<vmem>>, vector<256x8xf32>
    tpu.vector_store %arg17[%c0_27, %c32], %18 {strides = array<i32>} : memref<256x72xf32, #tpu.memory_space<vmem>>, vector<256x8xf32>,
    %c1_28 = arith.constant 1 : index
    %c2_29 = arith.constant 2 : index
    %c0_30 = arith.constant 0 : index
    %20 = vector.load %arg16[%c1_28, %c2_29, %c0_30] : memref<18x18x8xf32, #tpu.memory_space<vmem>>, vector<16x16x8xf32>
    %21 = vector.shape_cast %20 : vector<16x16x8xf32> to vector<256x8xf32>
    %c0_31 = arith.constant 0 : index
    %c40 = arith.constant 40 : index
    %22 = vector.load %arg17[%c0_31, %c40] : memref<256x72xf32, #tpu.memory_space<vmem>>, vector<256x8xf32>
    tpu.vector_store %arg17[%c0_31, %c40], %21 {strides = array<i32>} : memref<256x72xf32, #tpu.memory_space<vmem>>, vector<256x8xf32>,
    %c2_32 = arith.constant 2 : index
    %c0_33 = arith.constant 0 : index
    %c0_34 = arith.constant 0 : index
    %23 = vector.load %arg16[%c2_32, %c0_33, %c0_34] : memref<18x18x8xf32, #tpu.memory_space<vmem>>, vector<16x16x8xf32>
    %24 = vector.shape_cast %23 : vector<16x16x8xf32> to vector<256x8xf32>
    %c0_35 = arith.constant 0 : index
    %c48 = arith.constant 48 : index
    %25 = vector.load %arg17[%c0_35, %c48] : memref<256x72xf32, #tpu.memory_space<vmem>>, vector<256x8xf32>
    tpu.vector_store %arg17[%c0_35, %c48], %24 {strides = array<i32>} : memref<256x72xf32, #tpu.memory_space<vmem>>, vector<256x8xf32>,
    %c2_36 = arith.constant 2 : index
    %c1_37 = arith.constant 1 : index
    %c0_38 = arith.constant 0 : index
    %26 = vector.load %arg16[%c2_36, %c1_37, %c0_38] : memref<18x18x8xf32, #tpu.memory_space<vmem>>, vector<16x16x8xf32>
    %27 = vector.shape_cast %26 : vector<16x16x8xf32> to vector<256x8xf32>
    %c0_39 = arith.constant 0 : index
    %c56 = arith.constant 56 : index
    %28 = vector.load %arg17[%c0_39, %c56] : memref<256x72xf32, #tpu.memory_space<vmem>>, vector<256x8xf32>
    tpu.vector_store %arg17[%c0_39, %c56], %27 {strides = array<i32>} : memref<256x72xf32, #tpu.memory_space<vmem>>, vector<256x8xf32>,
    %c2_40 = arith.constant 2 : index
    %c2_41 = arith.constant 2 : index
    %c0_42 = arith.constant 0 : index
    %29 = vector.load %arg16[%c2_40, %c2_41, %c0_42] : memref<18x18x8xf32, #tpu.memory_space<vmem>>, vector<16x16x8xf32>
    %30 = vector.shape_cast %29 : vector<16x16x8xf32> to vector<256x8xf32>
    %c0_43 = arith.constant 0 : index
    %c64 = arith.constant 64 : index
    %31 = vector.load %arg17[%c0_43, %c64] : memref<256x72xf32, #tpu.memory_space<vmem>>, vector<256x8xf32>
    tpu.vector_store %arg17[%c0_43, %c64], %30 {strides = array<i32>} : memref<256x72xf32, #tpu.memory_space<vmem>>, vector<256x8xf32>,
    %c0_44 = arith.constant 0 : index
    %c0_45 = arith.constant 0 : index
    %32 = vector.load %arg17[%c0_44, %c0_45] : memref<256x72xf32, #tpu.memory_space<vmem>>, vector<256x72xf32>
    %c0_46 = arith.constant 0 : index
    %c0_47 = arith.constant 0 : index
    %33 = vector.load %arg2[%c0_46, %c0_47] : memref<72x8xf32, #tpu.memory_space<vmem>>, vector<72x8xf32>
    %cst_48 = arith.constant dense<0.000000e+00> : vector<256x8xf32>
    %34 = tpu.matmul %32, %33, %cst_48 {dimension_numbers = #tpu.dot_dimension_numbers<[1], [0], [0], [1], [0, 0, 1, 1], [], []>} : vector<256x72xf32>, vector<72x8xf32>, vector<256x8xf32> -> vector<256x8xf32>
    %c0_49 = arith.constant 0 : index
    %c0_50 = arith.constant 0 : index
    %35 = vector.load %arg3[%c0_49, %c0_50] : memref<1x8xf32, #tpu.memory_space<vmem>>, vector<1x8xf32>
    %36 = vector.broadcast %35 : vector<1x8xf32> to vector<256x8xf32>
    %37 = arith.addf %34, %36 : vector<256x8xf32>
    %c0_51 = arith.constant 0 : index
    %38 = memref.load %arg14[%c0_51] : memref<3xf32, #tpu.memory_space<smem>>
    %cst_52 = arith.constant 0.000000e+00 : f32
    %39 = vector.broadcast %cst_52 : f32 to vector<256x8xf32>
    %40 = arith.cmpf oge, %37, %39 : vector<256x8xf32>
    %41 = vector.broadcast %38 : f32 to vector<256x8xf32>
    %42 = arith.mulf %41, %37 : vector<256x8xf32>
    %43 = arith.select %40, %37, %42 : vector<256x8xi1>, vector<256x8xf32>
    %44 = vector.shape_cast %43 : vector<256x8xf32> to vector<16x16x8xf32>
    %c1_53 = arith.constant 1 : index
    %c1_54 = arith.constant 1 : index
    %c0_55 = arith.constant 0 : index
    %45 = vector.load %arg16[%c1_53, %c1_54, %c0_55] : memref<18x18x8xf32, #tpu.memory_space<vmem>>, vector<16x16x8xf32>
    tpu.vector_store %arg16[%c1_53, %c1_54, %c0_55], %44 {strides = array<i32>} : memref<18x18x8xf32, #tpu.memory_space<vmem>>, vector<16x16x8xf32>,
    %c0_56 = arith.constant 0 : index
    %c0_57 = arith.constant 0 : index
    %c0_58 = arith.constant 0 : index
    %46 = vector.load %arg16[%c0_56, %c0_57, %c0_58] : memref<18x18x8xf32, #tpu.memory_space<vmem>>, vector<16x16x8xf32>
    %47 = vector.shape_cast %46 : vector<16x16x8xf32> to vector<256x8xf32>
    %c0_59 = arith.constant 0 : index
    %c0_60 = arith.constant 0 : index
    %48 = vector.load %arg17[%c0_59, %c0_60] : memref<256x72xf32, #tpu.memory_space<vmem>>, vector<256x8xf32>
    tpu.vector_store %arg17[%c0_59, %c0_60], %47 {strides = array<i32>} : memref<256x72xf32, #tpu.memory_space<vmem>>, vector<256x8xf32>,
    %c0_61 = arith.constant 0 : index
    %c1_62 = arith.constant 1 : index
    %c0_63 = arith.constant 0 : index
    %49 = vector.load %arg16[%c0_61, %c1_62, %c0_63] : memref<18x18x8xf32, #tpu.memory_space<vmem>>, vector<16x16x8xf32>
    %50 = vector.shape_cast %49 : vector<16x16x8xf32> to vector<256x8xf32>
    %c0_64 = arith.constant 0 : index
    %c8_65 = arith.constant 8 : index
    %51 = vector.load %arg17[%c0_64, %c8_65] : memref<256x72xf32, #tpu.memory_space<vmem>>, vector<256x8xf32>
    tpu.vector_store %arg17[%c0_64, %c8_65], %50 {strides = array<i32>} : memref<256x72xf32, #tpu.memory_space<vmem>>, vector<256x8xf32>,
    %c0_66 = arith.constant 0 : index
    %c2_67 = arith.constant 2 : index
    %c0_68 = arith.constant 0 : index
    %52 = vector.load %arg16[%c0_66, %c2_67, %c0_68] : memref<18x18x8xf32, #tpu.memory_space<vmem>>, vector<16x16x8xf32>
    %53 = vector.shape_cast %52 : vector<16x16x8xf32> to vector<256x8xf32>
    %c0_69 = arith.constant 0 : index
    %c16_70 = arith.constant 16 : index
    %54 = vector.load %arg17[%c0_69, %c16_70] : memref<256x72xf32, #tpu.memory_space<vmem>>, vector<256x8xf32>
    tpu.vector_store %arg17[%c0_69, %c16_70], %53 {strides = array<i32>} : memref<256x72xf32, #tpu.memory_space<vmem>>, vector<256x8xf32>,
    %c1_71 = arith.constant 1 : index
    %c0_72 = arith.constant 0 : index
    %c0_73 = arith.constant 0 : index
    %55 = vector.load %arg16[%c1_71, %c0_72, %c0_73] : memref<18x18x8xf32, #tpu.memory_space<vmem>>, vector<16x16x8xf32>
    %56 = vector.shape_cast %55 : vector<16x16x8xf32> to vector<256x8xf32>
    %c0_74 = arith.constant 0 : index
    %c24_75 = arith.constant 24 : index
    %57 = vector.load %arg17[%c0_74, %c24_75] : memref<256x72xf32, #tpu.memory_space<vmem>>, vector<256x8xf32>
    tpu.vector_store %arg17[%c0_74, %c24_75], %56 {strides = array<i32>} : memref<256x72xf32, #tpu.memory_space<vmem>>, vector<256x8xf32>,
    %c1_76 = arith.constant 1 : index
    %c1_77 = arith.constant 1 : index
    %c0_78 = arith.constant 0 : index
    %58 = vector.load %arg16[%c1_76, %c1_77, %c0_78] : memref<18x18x8xf32, #tpu.memory_space<vmem>>, vector<16x16x8xf32>
    %59 = vector.shape_cast %58 : vector<16x16x8xf32> to vector<256x8xf32>
    %c0_79 = arith.constant 0 : index
    %c32_80 = arith.constant 32 : index
    %60 = vector.load %arg17[%c0_79, %c32_80] : memref<256x72xf32, #tpu.memory_space<vmem>>, vector<256x8xf32>
    tpu.vector_store %arg17[%c0_79, %c32_80], %59 {strides = array<i32>} : memref<256x72xf32, #tpu.memory_space<vmem>>, vector<256x8xf32>,
    %c1_81 = arith.constant 1 : index
    %c2_82 = arith.constant 2 : index
    %c0_83 = arith.constant 0 : index
    %61 = vector.load %arg16[%c1_81, %c2_82, %c0_83] : memref<18x18x8xf32, #tpu.memory_space<vmem>>, vector<16x16x8xf32>
    %62 = vector.shape_cast %61 : vector<16x16x8xf32> to vector<256x8xf32>
    %c0_84 = arith.constant 0 : index
    %c40_85 = arith.constant 40 : index
    %63 = vector.load %arg17[%c0_84, %c40_85] : memref<256x72xf32, #tpu.memory_space<vmem>>, vector<256x8xf32>
    tpu.vector_store %arg17[%c0_84, %c40_85], %62 {strides = array<i32>} : memref<256x72xf32, #tpu.memory_space<vmem>>, vector<256x8xf32>,
    %c2_86 = arith.constant 2 : index
    %c0_87 = arith.constant 0 : index
    %c0_88 = arith.constant 0 : index
    %64 = vector.load %arg16[%c2_86, %c0_87, %c0_88] : memref<18x18x8xf32, #tpu.memory_space<vmem>>, vector<16x16x8xf32>
    %65 = vector.shape_cast %64 : vector<16x16x8xf32> to vector<256x8xf32>
    %c0_89 = arith.constant 0 : index
    %c48_90 = arith.constant 48 : index
    %66 = vector.load %arg17[%c0_89, %c48_90] : memref<256x72xf32, #tpu.memory_space<vmem>>, vector<256x8xf32>
    tpu.vector_store %arg17[%c0_89, %c48_90], %65 {strides = array<i32>} : memref<256x72xf32, #tpu.memory_space<vmem>>, vector<256x8xf32>,
    %c2_91 = arith.constant 2 : index
    %c1_92 = arith.constant 1 : index
    %c0_93 = arith.constant 0 : index
    %67 = vector.load %arg16[%c2_91, %c1_92, %c0_93] : memref<18x18x8xf32, #tpu.memory_space<vmem>>, vector<16x16x8xf32>
    %68 = vector.shape_cast %67 : vector<16x16x8xf32> to vector<256x8xf32>
    %c0_94 = arith.constant 0 : index
    %c56_95 = arith.constant 56 : index
    %69 = vector.load %arg17[%c0_94, %c56_95] : memref<256x72xf32, #tpu.memory_space<vmem>>, vector<256x8xf32>
    tpu.vector_store %arg17[%c0_94, %c56_95], %68 {strides = array<i32>} : memref<256x72xf32, #tpu.memory_space<vmem>>, vector<256x8xf32>,
    %c2_96 = arith.constant 2 : index
    %c2_97 = arith.constant 2 : index
    %c0_98 = arith.constant 0 : index
    %70 = vector.load %arg16[%c2_96, %c2_97, %c0_98] : memref<18x18x8xf32, #tpu.memory_space<vmem>>, vector<16x16x8xf32>
    %71 = vector.shape_cast %70 : vector<16x16x8xf32> to vector<256x8xf32>
    %c0_99 = arith.constant 0 : index
    %c64_100 = arith.constant 64 : index
    %72 = vector.load %arg17[%c0_99, %c64_100] : memref<256x72xf32, #tpu.memory_space<vmem>>, vector<256x8xf32>
    tpu.vector_store %arg17[%c0_99, %c64_100], %71 {strides = array<i32>} : memref<256x72xf32, #tpu.memory_space<vmem>>, vector<256x8xf32>,
    %c0_101 = arith.constant 0 : index
    %c0_102 = arith.constant 0 : index
    %73 = vector.load %arg17[%c0_101, %c0_102] : memref<256x72xf32, #tpu.memory_space<vmem>>, vector<256x72xf32>
    %c0_103 = arith.constant 0 : index
    %c0_104 = arith.constant 0 : index
    %74 = vector.load %arg4[%c0_103, %c0_104] : memref<72x8xf32, #tpu.memory_space<vmem>>, vector<72x8xf32>
    %cst_105 = arith.constant dense<0.000000e+00> : vector<256x8xf32>
    %75 = tpu.matmul %73, %74, %cst_105 {dimension_numbers = #tpu.dot_dimension_numbers<[1], [0], [0], [1], [0, 0, 1, 1], [], []>} : vector<256x72xf32>, vector<72x8xf32>, vector<256x8xf32> -> vector<256x8xf32>
    %c0_106 = arith.constant 0 : index
    %c0_107 = arith.constant 0 : index
    %76 = vector.load %arg5[%c0_106, %c0_107] : memref<1x8xf32, #tpu.memory_space<vmem>>, vector<1x8xf32>
    %77 = vector.broadcast %76 : vector<1x8xf32> to vector<256x8xf32>
    %78 = arith.addf %75, %77 : vector<256x8xf32>
    %cst_108 = arith.constant dense<0xFF800000> : vector<8xf32>
    %79 = vector.multi_reduction <maximumf>, %78, %cst_108 [0] : vector<256x8xf32> to vector<8xf32>
    %80 = vector.shape_cast %79 : vector<8xf32> to vector<1x8xf32>
    %cst_109 = arith.constant dense<0.000000e+00> : vector<8xf32>
    %81 = vector.multi_reduction <add>, %78, %cst_109 [0] : vector<256x8xf32> to vector<8xf32>
    %82 = vector.shape_cast %81 : vector<8xf32> to vector<1x8xf32>
    %cst_110 = arith.constant 2.560000e+02 : f32
    %83 = vector.broadcast %cst_110 : f32 to vector<1x8xf32>
    %84 = arith.divf %82, %83 : vector<1x8xf32>
    %c1_111 = arith.constant 1 : index
    %85 = memref.load %arg14[%c1_111] : memref<3xf32, #tpu.memory_space<smem>>
    %c0_112 = arith.constant 0 : index
    %c0_113 = arith.constant 0 : index
    %86 = vector.load %arg6[%c0_112, %c0_113] : memref<8x2xf32, #tpu.memory_space<vmem>>, vector<8x2xf32>
    %cst_114 = arith.constant dense<0.000000e+00> : vector<1x2xf32>
    %87 = tpu.matmul %80, %86, %cst_114 {dimension_numbers = #tpu.dot_dimension_numbers<[1], [0], [0], [1], [0, 0, 1, 1], [], []>} : vector<1x8xf32>, vector<8x2xf32>, vector<1x2xf32> -> vector<1x2xf32>
    %c0_115 = arith.constant 0 : index
    %c0_116 = arith.constant 0 : index
    %88 = vector.load %arg7[%c0_115, %c0_116] : memref<1x2xf32, #tpu.memory_space<vmem>>, vector<1x2xf32>
    %89 = arith.addf %87, %88 : vector<1x2xf32>
    %cst_117 = arith.constant 0.000000e+00 : f32
    %90 = vector.broadcast %cst_117 : f32 to vector<1x2xf32>
    %91 = arith.cmpf oge, %89, %90 : vector<1x2xf32>
    %92 = vector.broadcast %85 : f32 to vector<1x2xf32>
    %93 = arith.mulf %92, %89 : vector<1x2xf32>
    %94 = arith.select %91, %89, %93 : vector<1x2xi1>, vector<1x2xf32>
    %c0_118 = arith.constant 0 : index
    %c0_119 = arith.constant 0 : index
    %95 = vector.load %arg8[%c0_118, %c0_119] : memref<2x8xf32, #tpu.memory_space<vmem>>, vector<2x8xf32>
    %cst_120 = arith.constant dense<0.000000e+00> : vector<1x8xf32>
    %96 = tpu.matmul %94, %95, %cst_120 {dimension_numbers = #tpu.dot_dimension_numbers<[1], [0], [0], [1], [0, 0, 1, 1], [], []>} : vector<1x2xf32>, vector<2x8xf32>, vector<1x8xf32> -> vector<1x8xf32>
    %c0_121 = arith.constant 0 : index
    %c0_122 = arith.constant 0 : index
    %97 = vector.load %arg9[%c0_121, %c0_122] : memref<1x8xf32, #tpu.memory_space<vmem>>, vector<1x8xf32>
    %98 = arith.addf %96, %97 : vector<1x8xf32>
    %c2_123 = arith.constant 2 : index
    %99 = memref.load %arg14[%c2_123] : memref<3xf32, #tpu.memory_space<smem>>
    %c0_124 = arith.constant 0 : index
    %c0_125 = arith.constant 0 : index
    %100 = vector.load %arg10[%c0_124, %c0_125] : memref<8x2xf32, #tpu.memory_space<vmem>>, vector<8x2xf32>
    %cst_126 = arith.constant dense<0.000000e+00> : vector<1x2xf32>
    %101 = tpu.matmul %84, %100, %cst_126 {dimension_numbers = #tpu.dot_dimension_numbers<[1], [0], [0], [1], [0, 0, 1, 1], [], []>} : vector<1x8xf32>, vector<8x2xf32>, vector<1x2xf32> -> vector<1x2xf32>
    %c0_127 = arith.constant 0 : index
    %c0_128 = arith.constant 0 : index
    %102 = vector.load %arg11[%c0_127, %c0_128] : memref<1x2xf32, #tpu.memory_space<vmem>>, vector<1x2xf32>
    %103 = arith.addf %101, %102 : vector<1x2xf32>
    %cst_129 = arith.constant 0.000000e+00 : f32
    %104 = vector.broadcast %cst_129 : f32 to vector<1x2xf32>
    %105 = arith.cmpf oge, %103, %104 : vector<1x2xf32>
    %106 = vector.broadcast %99 : f32 to vector<1x2xf32>
    %107 = arith.mulf %106, %103 : vector<1x2xf32>
    %108 = arith.select %105, %103, %107 : vector<1x2xi1>, vector<1x2xf32>
    %c0_130 = arith.constant 0 : index
    %c0_131 = arith.constant 0 : index
    %109 = vector.load %arg12[%c0_130, %c0_131] : memref<2x8xf32, #tpu.memory_space<vmem>>, vector<2x8xf32>
    %cst_132 = arith.constant dense<0.000000e+00> : vector<1x8xf32>
    %110 = tpu.matmul %108, %109, %cst_132 {dimension_numbers = #tpu.dot_dimension_numbers<[1], [0], [0], [1], [0, 0, 1, 1], [], []>} : vector<1x2xf32>, vector<2x8xf32>, vector<1x8xf32> -> vector<1x8xf32>
    %c0_133 = arith.constant 0 : index
    %c0_134 = arith.constant 0 : index
    %111 = vector.load %arg13[%c0_133, %c0_134] : memref<1x8xf32, #tpu.memory_space<vmem>>, vector<1x8xf32>
    %112 = arith.addf %110, %111 : vector<1x8xf32>
    %113 = arith.addf %98, %112 : vector<1x8xf32>
    %114 = arith.negf %113 : vector<1x8xf32>
    %115 = math.exp %114 : vector<1x8xf32>
    %cst_135 = arith.constant 1.000000e+00 : f32
    %116 = vector.broadcast %cst_135 : f32 to vector<1x8xf32>
    %117 = arith.addf %116, %115 : vector<1x8xf32>
    %118 = arith.divf %116, %117 : vector<1x8xf32>
    %119 = vector.shape_cast %3 : vector<16x16x8xf32> to vector<256x8xf32>
    %120 = vector.broadcast %118 : vector<1x8xf32> to vector<256x8xf32>
    %121 = arith.mulf %120, %78 : vector<256x8xf32>
    %122 = arith.addf %119, %121 : vector<256x8xf32>
    %123 = vector.shape_cast %122 : vector<256x8xf32> to vector<1x16x16x8xf32>
    %c0_136 = arith.constant 0 : index
    %c0_137 = arith.constant 0 : index
    %c0_138 = arith.constant 0 : index
    %c0_139 = arith.constant 0 : index
    %124 = vector.load %arg15[%c0_136, %c0_137, %c0_138, %c0_139] : memref<1x16x16x8xf32, #tpu.memory_space<vmem>>, vector<1x16x16x8xf32>
    tpu.vector_store %arg15[%c0_136, %c0_137, %c0_138, %c0_139], %123 {strides = array<i32>} : memref<1x16x16x8xf32, #tpu.memory_space<vmem>>, vector<1x16x16x8xf32>,
    return
  }
  func.func @transform_0(%arg0: i32) -> (i32, i32, i32, i32) {
    %c0_i32 = arith.constant 0 : i32
    %c0_i32_0 = arith.constant 0 : i32
    %c0_i32_1 = arith.constant 0 : i32
    %c0_i32_2 = arith.constant 0 : i32
    return %arg0, %c0_i32, %c0_i32_0, %c0_i32_1 : i32, i32, i32, i32
  }
  func.func @transform_1(%arg0: i32) -> (i32, i32) {
    %c0_i32 = arith.constant 0 : i32
    %c0_i32_0 = arith.constant 0 : i32
    %c0_i32_1 = arith.constant 0 : i32
    return %c0_i32, %c0_i32_0 : i32, i32
  }
  func.func @transform_2(%arg0: i32) -> (i32, i32) {
    %c0_i32 = arith.constant 0 : i32
    %c0_i32_0 = arith.constant 0 : i32
    %c0_i32_1 = arith.constant 0 : i32
    return %c0_i32, %c0_i32_0 : i32, i32
  }
  func.func @transform_3(%arg0: i32) -> (i32, i32) {
    %c0_i32 = arith.constant 0 : i32
    %c0_i32_0 = arith.constant 0 : i32
    %c0_i32_1 = arith.constant 0 : i32
    return %c0_i32, %c0_i32_0 : i32, i32
  }
  func.func @transform_4(%arg0: i32) -> (i32, i32) {
    %c0_i32 = arith.constant 0 : i32
    %c0_i32_0 = arith.constant 0 : i32
    %c0_i32_1 = arith.constant 0 : i32
    return %c0_i32, %c0_i32_0 : i32, i32
  }
  func.func @transform_5(%arg0: i32) -> (i32, i32) {
    %c0_i32 = arith.constant 0 : i32
    %c0_i32_0 = arith.constant 0 : i32
    %c0_i32_1 = arith.constant 0 : i32
    return %c0_i32, %c0_i32_0 : i32, i32
  }
  func.func @transform_6(%arg0: i32) -> (i32, i32) {
    %c0_i32 = arith.constant 0 : i32
    %c0_i32_0 = arith.constant 0 : i32
    %c0_i32_1 = arith.constant 0 : i32
    return %c0_i32, %c0_i32_0 : i32, i32
  }
  func.func @transform_7(%arg0: i32) -> (i32, i32) {
    %c0_i32 = arith.constant 0 : i32
    %c0_i32_0 = arith.constant 0 : i32
    %c0_i32_1 = arith.constant 0 : i32
    return %c0_i32, %c0_i32_0 : i32, i32
  }
  func.func @transform_8(%arg0: i32) -> (i32, i32) {
    %c0_i32 = arith.constant 0 : i32
    %c0_i32_0 = arith.constant 0 : i32
    %c0_i32_1 = arith.constant 0 : i32
    return %c0_i32, %c0_i32_0 : i32, i32
  }
  func.func @transform_9(%arg0: i32) -> (i32, i32) {
    %c0_i32 = arith.constant 0 : i32
    %c0_i32_0 = arith.constant 0 : i32
    %c0_i32_1 = arith.constant 0 : i32
    return %c0_i32, %c0_i32_0 : i32, i32
  }
  func.func @transform_10(%arg0: i32) -> (i32, i32) {
    %c0_i32 = arith.constant 0 : i32
    %c0_i32_0 = arith.constant 0 : i32
    %c0_i32_1 = arith.constant 0 : i32
    return %c0_i32, %c0_i32_0 : i32, i32
  }
  func.func @transform_11(%arg0: i32) -> (i32, i32) {
    %c0_i32 = arith.constant 0 : i32
    %c0_i32_0 = arith.constant 0 : i32
    %c0_i32_1 = arith.constant 0 : i32
    return %c0_i32, %c0_i32_0 : i32, i32
  }
  func.func @transform_12(%arg0: i32) -> (i32, i32) {
    %c0_i32 = arith.constant 0 : i32
    %c0_i32_0 = arith.constant 0 : i32
    %c0_i32_1 = arith.constant 0 : i32
    return %c0_i32, %c0_i32_0 : i32, i32
  }
  func.func @transform_13(%arg0: i32) -> i32 {
    %c0_i32 = arith.constant 0 : i32
    %c0_i32_0 = arith.constant 0 : i32
    return %c0_i32 : i32
  }
  func.func @transform_14(%arg0: i32) -> (i32, i32, i32, i32) {
    %c0_i32 = arith.constant 0 : i32
    %c0_i32_0 = arith.constant 0 : i32
    %c0_i32_1 = arith.constant 0 : i32
    %c0_i32_2 = arith.constant 0 : i32
    return %arg0, %c0_i32, %c0_i32_0, %c0_i32_1 : i32, i32, i32, i32
  }
}

</mosaic_0001>

<llo_original>
// kernel: rescab_forward.1
$region0: #{rescab_forward.1}
  #allocation0 [shape = 'u32[]', space=smem, size = 0x4, offset = 0x4, fixed_abs, tag = 'smem constant byte address 0x4 - core index']
  #allocation1 [shape = 'u32[144,128]{1,0:T(1,128)}', space=vmem, size = 0x12000, scoped, tag = 'internal scratch']
  #allocation2 [shape = 'f32[18,18,8]{2,1,0:T(8,128)}', space=vmem, size = 0x36000, scoped, tag = 'scratch operand']
  #allocation3 [shape = 'f32[256,72]{1,0:T(8,128)}', space=vmem, size = 0x20000, scoped, tag = 'scratch operand']
  %s0 = inlined_call_operand.vmem [shape: f32[2,16,16,8], index: 0, kind: input, shape index: {}, may-alias: {0,14}]
  %s1 = inlined_call_operand.vmem [shape: f32[72,8], index: 1, kind: input, shape index: {}]
  %s2 = inlined_call_operand.vmem [shape: f32[1,8], index: 2, kind: input, shape index: {}]
  %s3 = inlined_call_operand.vmem [shape: f32[72,8], index: 3, kind: input, shape index: {}]
  %s4 = inlined_call_operand.vmem [shape: f32[1,8], index: 4, kind: input, shape index: {}]
  %s5 = inlined_call_operand.vmem [shape: f32[8,2], index: 5, kind: input, shape index: {}]
  %s6 = inlined_call_operand.vmem [shape: f32[1,2], index: 6, kind: input, shape index: {}]
  %s7 = inlined_call_operand.vmem [shape: f32[2,8], index: 7, kind: input, shape index: {}]
  %s8 = inlined_call_operand.vmem [shape: f32[1,8], index: 8, kind: input, shape index: {}]
  %s9 = inlined_call_operand.vmem [shape: f32[8,2], index: 9, kind: input, shape index: {}]
  %s10 = inlined_call_operand.vmem [shape: f32[1,2], index: 10, kind: input, shape index: {}]
  %s11 = inlined_call_operand.vmem [shape: f32[2,8], index: 11, kind: input, shape index: {}]
  %s12 = inlined_call_operand.vmem [shape: f32[1,8], index: 12, kind: input, shape index: {}]
  %s13 = inlined_call_operand.vmem [shape: f32[3], index: 13, kind: input, shape index: {}]
  %s14 = inlined_call_operand.vmem [shape: f32[2,16,16,8], index: 14, kind: output, shape index: {}, may-alias: {0,14}]
  %s15 = sld [smem:[#allocation0]]
  $region93: #{rescab_forward.1} parent=0
    _
  %s17 = ssub.s32 1, %s15
  %s18 = scalar_select 0, %s17, %s15
  $region1: #{rescab_forward.1} parent=0
    #allocation4 [shape = 'u8[512]{0}', space=smem, size = 0x200, scoped, tag = 'input window, operand 13, single buffered']
    #allocation5 [shape = 's32[2]{0}', space=sflag, size = 0x8, scoped, tag = 'scoped memory for rescab_forward.1']
    %19 = vsyncpa [#allocation5], 0
    loop: start=0, step=1, limit=4
    $region2: #{rescab_forward.1} parent=1 // loop_pre_header
      _
    $region3: #{rescab_forward.1} parent=1 // loop_header
      %s21 = sphi 0, %s25
      %p22 = scmp.ge.s32.totalorder %s21, 4
      %s31 = sphi 0, %s33
      %s34 = sphi 0, %s31
      %s35 = sphi 0, %s34
      %s51 = sphi 0, %s35
      %s55 = sphi 0, %s55
      %s57 = sphi 0, %s55
      %s58 = sphi 0, %s57
      %s72 = sphi 0, %s58
      %s76 = sphi 0, %s76
      %s78 = sphi 0, %s76
      %s79 = sphi 0, %s78
      %s93 = sphi 0, %s79
      %s97 = sphi 0, %s97
      %s99 = sphi 0, %s97
      %s100 = sphi 0, %s99
      %s114 = sphi 0, %s100
      %s118 = sphi 0, %s118
      %s120 = sphi 0, %s118
      %s121 = sphi 0, %s120
      %s135 = sphi 0, %s121
      %s139 = sphi 0, %s139
      %s141 = sphi 0, %s139
      %s142 = sphi 0, %s141
      %s156 = sphi 0, %s142
      %s160 = sphi 0, %s160
      %s162 = sphi 0, %s160
      %s163 = sphi 0, %s162
      %s177 = sphi 0, %s163
      %s181 = sphi 0, %s181
      %s183 = sphi 0, %s181
      %s184 = sphi 0, %s183
      %s198 = sphi 0, %s184
      %s202 = sphi 0, %s202
      %s204 = sphi 0, %s202
      %s205 = sphi 0, %s204
      %s219 = sphi 0, %s205
      %s223 = sphi 0, %s223
      %s225 = sphi 0, %s223
      %s226 = sphi 0, %s225
      %s240 = sphi 0, %s226
      %s244 = sphi 0, %s244
      %s246 = sphi 0, %s244
      %s247 = sphi 0, %s246
      %s261 = sphi 0, %s247
      %s265 = sphi 0, %s265
      %s267 = sphi 0, %s265
      %s268 = sphi 0, %s267
      %s282 = sphi 0, %s268
      %s286 = sphi 0, %s286
      %s288 = sphi 0, %s286
      %s289 = sphi 0, %s288
      %s303 = sphi 0, %s289
      %s307 = sphi 0, %s307
      %s309 = sphi 0, %s307
      %s310 = sphi 0, %s309
      %s324 = sphi 0, %s310
      %s330 = sphi 0, %s332
      %s333 = sphi 0, %s330
      %s334 = sphi 0, %s333
      %s350 = sphi 0, %s334
    $region4: #{rescab_forward.1} parent=1 // loop_header_branch
      %24 = sbr.rel (%p22) target = $region8
    $region5: #{rescab_forward.1} parent=1 // loop_body
      %s26 = ssub.s32 %s21, 1
      %s27 = ssub.s32 %s21, 2
      %s28 = sadd.s32 %s21, 1
      %s29 = ssub.s32 %s21, %s28
      %p30 = scmp.eq.s32.totalorder %s29, 0
      %s32 = sadd.s32 %s31, 1
      %s33 = scalar_select %p30, %s31, %s32
      %p36 = pneg %p30
      %p37 = scmp.eq.s32.totalorder %s21, 1
      %p38 = por %p36, %p37
      %p39 = scmp.ne.s32.totalorder %s31, %s34
      %p40 = scmp.eq.s32.totalorder %s21, 0
      %p41 = por %p39, %p40
      %p42 = scmp.ne.s32.totalorder %s31, %s34
      %p43 = scmp.eq.s32.totalorder %s26, 1
      %p44 = por %p42, %p43
      %p45 = scmp.ne.s32.totalorder %s34, %s35
      %p46 = scmp.eq.s32.totalorder %s26, 0
      %p47 = por %p45, %p46
      %p48 = scmp.ne.s32.totalorder %s34, %s35
      %p49 = scmp.eq.s32.totalorder %s27, 1
      %p50 = por %p48, %p49
      %p52 = scmp.ne.s32.totalorder %s35, %s51
      %p53 = scmp.eq.s32.totalorder %s27, 0
      %p54 = por %p52, %p53
      %s56 = sadd.s32 %s55, 1
      %p59 = scmp.eq.s32.totalorder %s21, 1
      %p60 = scmp.ne.s32.totalorder %s55, %s57
      %p61 = scmp.eq.s32.totalorder %s21, 0
      %p62 = por %p60, %p61
      %p63 = scmp.ne.s32.totalorder %s55, %s57
      %p64 = scmp.eq.s32.totalorder %s26, 1
      %p65 = por %p63, %p64
      %p66 = scmp.ne.s32.totalorder %s57, %s58
      %p67 = scmp.eq.s32.totalorder %s26, 0
      %p68 = por %p66, %p67
      %p69 = scmp.ne.s32.totalorder %s57, %s58
      %p70 = scmp.eq.s32.totalorder %s27, 1
      %p71 = por %p69, %p70
      %p73 = scmp.ne.s32.totalorder %s58, %s72
      %p74 = scmp.eq.s32.totalorder %s27, 0
      %p75 = por %p73, %p74
      %s77 = sadd.s32 %s76, 1
      %p80 = scmp.eq.s32.totalorder %s21, 1
      %p81 = scmp.ne.s32.totalorder %s76, %s78
      %p82 = scmp.eq.s32.totalorder %s21, 0
      %p83 = por %p81, %p82
      %p84 = scmp.ne.s32.totalorder %s76, %s78
      %p85 = scmp.eq.s32.totalorder %s26, 1
      %p86 = por %p84, %p85
      %p87 = scmp.ne.s32.totalorder %s78, %s79
      %p88 = scmp.eq.s32.totalorder %s26, 0
      %p89 = por %p87, %p88
      %p90 = scmp.ne.s32.totalorder %s78, %s79
      %p91 = scmp.eq.s32.totalorder %s27, 1
      %p92 = por %p90, %p91
      %p94 = scmp.ne.s32.totalorder %s79, %s93
      %p95 = scmp.eq.s32.totalorder %s27, 0
      %p96 = por %p94, %p95
      %s98 = sadd.s32 %s97, 1
      %p101 = scmp.eq.s32.totalorder %s21, 1
      %p102 = scmp.ne.s32.totalorder %s97, %s99
      %p103 = scmp.eq.s32.totalorder %s21, 0
      %p104 = por %p102, %p103
      %p105 = scmp.ne.s32.totalorder %s97, %s99
      %p106 = scmp.eq.s32.totalorder %s26, 1
      %p107 = por %p105, %p106
      %p108 = scmp.ne.s32.totalorder %s99, %s100
      %p109 = scmp.eq.s32.totalorder %s26, 0
      %p110 = por %p108, %p109
      %p111 = scmp.ne.s32.totalorder %s99, %s100
      %p112 = scmp.eq.s32.totalorder %s27, 1
      %p113 = por %p111, %p112
      %p115 = scmp.ne.s32.totalorder %s100, %s114
      %p116 = scmp.eq.s32.totalorder %s27, 0
      %p117 = por %p115, %p116
      %s119 = sadd.s32 %s118, 1
      %p122 = scmp.eq.s32.totalorder %s21, 1
      %p123 = scmp.ne.s32.totalorder %s118, %s120
      %p124 = scmp.eq.s32.totalorder %s21, 0
      %p125 = por %p123, %p124
      %p126 = scmp.ne.s32.totalorder %s118, %s120
      %p127 = scmp.eq.s32.totalorder %s26, 1
      %p128 = por %p126, %p127
      %p129 = scmp.ne.s32.totalorder %s120, %s121
      %p130 = scmp.eq.s32.totalorder %s26, 0
      %p131 = por %p129, %p130
      %p132 = scmp.ne.s32.totalorder %s120, %s121
      %p133 = scmp.eq.s32.totalorder %s27, 1
      %p134 = por %p132, %p133
      %p136 = scmp.ne.s32.totalorder %s121, %s135
      %p137 = scmp.eq.s32.totalorder %s27, 0
      %p138 = por %p136, %p137
      %s140 = sadd.s32 %s139, 1
      %p143 = scmp.eq.s32.totalorder %s21, 1
      %p144 = scmp.ne.s32.totalorder %s139, %s141
      %p145 = scmp.eq.s32.totalorder %s21, 0
      %p146 = por %p144, %p145
      %p147 = scmp.ne.s32.totalorder %s139, %s141
      %p148 = scmp.eq.s32.totalorder %s26, 1
      %p149 = por %p147, %p148
      %p150 = scmp.ne.s32.totalorder %s141, %s142
      %p151 = scmp.eq.s32.totalorder %s26, 0
      %p152 = por %p150, %p151
      %p153 = scmp.ne.s32.totalorder %s141, %s142
      %p154 = scmp.eq.s32.totalorder %s27, 1
      %p155 = por %p153, %p154
      %p157 = scmp.ne.s32.totalorder %s142, %s156
      %p158 = scmp.eq.s32.totalorder %s27, 0
      %p159 = por %p157, %p158
      %s161 = sadd.s32 %s160, 1
      %p164 = scmp.eq.s32.totalorder %s21, 1
      %p165 = scmp.ne.s32.totalorder %s160, %s162
      %p166 = scmp.eq.s32.totalorder %s21, 0
      %p167 = por %p165, %p166
      %p168 = scmp.ne.s32.totalorder %s160, %s162
      %p169 = scmp.eq.s32.totalorder %s26, 1
      %p170 = por %p168, %p169
      %p171 = scmp.ne.s32.totalorder %s162, %s163
      %p172 = scmp.eq.s32.totalorder %s26, 0
      %p173 = por %p171, %p172
      %p174 = scmp.ne.s32.totalorder %s162, %s163
      %p175 = scmp.eq.s32.totalorder %s27, 1
      %p176 = por %p174, %p175
      %p178 = scmp.ne.s32.totalorder %s163, %s177
      %p179 = scmp.eq.s32.totalorder %s27, 0
      %p180 = por %p178, %p179
      %s182 = sadd.s32 %s181, 1
      %p185 = scmp.eq.s32.totalorder %s21, 1
      %p186 = scmp.ne.s32.totalorder %s181, %s183
      %p187 = scmp.eq.s32.totalorder %s21, 0
      %p188 = por %p186, %p187
      %p189 = scmp.ne.s32.totalorder %s181, %s183
      %p190 = scmp.eq.s32.totalorder %s26, 1
      %p191 = por %p189, %p190
      %p192 = scmp.ne.s32.totalorder %s183, %s184
      %p193 = scmp.eq.s32.totalorder %s26, 0
      %p194 = por %p192, %p193
      %p195 = scmp.ne.s32.totalorder %s183, %s184
      %p196 = scmp.eq.s32.totalorder %s27, 1
      %p197 = por %p195, %p196
      %p199 = scmp.ne.s32.totalorder %s184, %s198
      %p200 = scmp.eq.s32.totalorder %s27, 0
      %p201 = por %p199, %p200
      %s203 = sadd.s32 %s202, 1
      %p206 = scmp.eq.s32.totalorder %s21, 1
      %p207 = scmp.ne.s32.totalorder %s202, %s204
      %p208 = scmp.eq.s32.totalorder %s21, 0
      %p209 = por %p207, %p208
      %p210 = scmp.ne.s32.totalorder %s202, %s204
      %p211 = scmp.eq.s32.totalorder %s26, 1
      %p212 = por %p210, %p211
      %p213 = scmp.ne.s32.totalorder %s204, %s205
      %p214 = scmp.eq.s32.totalorder %s26, 0
      %p215 = por %p213, %p214
      %p216 = scmp.ne.s32.totalorder %s204, %s205
      %p217 = scmp.eq.s32.totalorder %s27, 1
      %p218 = por %p216, %p217
      %p220 = scmp.ne.s32.totalorder %s205, %s219
      %p221 = scmp.eq.s32.totalorder %s27, 0
      %p222 = por %p220, %p221
      %s224 = sadd.s32 %s223, 1
      %p227 = scmp.eq.s32.totalorder %s21, 1
      %p228 = scmp.ne.s32.totalorder %s223, %s225
      %p229 = scmp.eq.s32.totalorder %s21, 0
      %p230 = por %p228, %p229
      %p231 = scmp.ne.s32.totalorder %s223, %s225
      %p232 = scmp.eq.s32.totalorder %s26, 1
      %p233 = por %p231, %p232
      %p234 = scmp.ne.s32.totalorder %s225, %s226
      %p235 = scmp.eq.s32.totalorder %s26, 0
      %p236 = por %p234, %p235
      %p237 = scmp.ne.s32.totalorder %s225, %s226
      %p238 = scmp.eq.s32.totalorder %s27, 1
      %p239 = por %p237, %p238
      %p241 = scmp.ne.s32.totalorder %s226, %s240
      %p242 = scmp.eq.s32.totalorder %s27, 0
      %p243 = por %p241, %p242
      %s245 = sadd.s32 %s244, 1
      %p248 = scmp.eq.s32.totalorder %s21, 1
      %p249 = scmp.ne.s32.totalorder %s244, %s246
      %p250 = scmp.eq.s32.totalorder %s21, 0
      %p251 = por %p249, %p250
      %p252 = scmp.ne.s32.totalorder %s244, %s246
      %p253 = scmp.eq.s32.totalorder %s26, 1
      %p254 = por %p252, %p253
      %p255 = scmp.ne.s32.totalorder %s246, %s247
      %p256 = scmp.eq.s32.totalorder %s26, 0
      %p257 = por %p255, %p256
      %p258 = scmp.ne.s32.totalorder %s246, %s247
      %p259 = scmp.eq.s32.totalorder %s27, 1
      %p260 = por %p258, %p259
      %p262 = scmp.ne.s32.totalorder %s247, %s261
      %p263 = scmp.eq.s32.totalorder %s27, 0
      %p264 = por %p262, %p263
      %s266 = sadd.s32 %s265, 1
      %p269 = scmp.eq.s32.totalorder %s21, 1
      %p270 = scmp.ne.s32.totalorder %s265, %s267
      %p271 = scmp.eq.s32.totalorder %s21, 0
      %p272 = por %p270, %p271
      %p273 = scmp.ne.s32.totalorder %s265, %s267
      %p274 = scmp.eq.s32.totalorder %s26, 1
      %p275 = por %p273, %p274
      %p276 = scmp.ne.s32.totalorder %s267, %s268
      %p277 = scmp.eq.s32.totalorder %s26, 0
      %p278 = por %p276, %p277
      %p279 = scmp.ne.s32.totalorder %s267, %s268
      %p280 = scmp.eq.s32.totalorder %s27, 1
      %p281 = por %p279, %p280
      %p283 = scmp.ne.s32.totalorder %s268, %s282
      %p284 = scmp.eq.s32.totalorder %s27, 0
      %p285 = por %p283, %p284
      %s287 = sadd.s32 %s286, 1
      %p290 = scmp.eq.s32.totalorder %s21, 1
      %p291 = scmp.ne.s32.totalorder %s286, %s288
      %p292 = scmp.eq.s32.totalorder %s21, 0
      %p293 = por %p291, %p292
      %p294 = scmp.ne.s32.totalorder %s286, %s288
      %p295 = scmp.eq.s32.totalorder %s26, 1
      %p296 = por %p294, %p295
      %p297 = scmp.ne.s32.totalorder %s288, %s289
      %p298 = scmp.eq.s32.totalorder %s26, 0
      %p299 = por %p297, %p298
      %p300 = scmp.ne.s32.totalorder %s288, %s289
      %p301 = scmp.eq.s32.totalorder %s27, 1
      %p302 = por %p300, %p301
      %p304 = scmp.ne.s32.totalorder %s289, %s303
      %p305 = scmp.eq.s32.totalorder %s27, 0
      %p306 = por %p304, %p305
      %s308 = sadd.s32 %s307, 1
      %p311 = scmp.eq.s32.totalorder %s21, 1
      %p312 = scmp.ne.s32.totalorder %s307, %s309
      %p313 = scmp.eq.s32.totalorder %s21, 0
      %p314 = por %p312, %p313
      %p315 = scmp.ne.s32.totalorder %s307, %s309
      %p316 = scmp.eq.s32.totalorder %s26, 1
      %p317 = por %p315, %p316
      %p318 = scmp.ne.s32.totalorder %s309, %s310
      %p319 = scmp.eq.s32.totalorder %s26, 0
      %p320 = por %p318, %p319
      %p321 = scmp.ne.s32.totalorder %s309, %s310
      %p322 = scmp.eq.s32.totalorder %s27, 1
      %p323 = por %p321, %p322
      %p325 = scmp.ne.s32.totalorder %s310, %s324
      %p326 = scmp.eq.s32.totalorder %s27, 0
      %p327 = por %p325, %p326
      %s328 = ssub.s32 %s21, %s28
      %p329 = scmp.eq.s32.totalorder %s328, 0
      %s331 = sadd.s32 %s330, 1
      %s332 = scalar_select %p329, %s330, %s331
      %p335 = pneg %p329
      %p336 = scmp.eq.s32.totalorder %s21, 1
      %p337 = por %p335, %p336
      %p338 = scmp.ne.s32.totalorder %s330, %s333
      %p339 = scmp.eq.s32.totalorder %s21, 0
      %p340 = por %p338, %p339
      %p341 = scmp.ne.s32.totalorder %s330, %s333
      %p342 = scmp.eq.s32.totalorder %s26, 1
      %p343 = por %p341, %p342
      %p344 = scmp.ne.s32.totalorder %s333, %s334
      %p345 = scmp.eq.s32.totalorder %s26, 0
      %p346 = por %p344, %p345
      %p347 = scmp.ne.s32.totalorder %s333, %s334
      %p348 = scmp.eq.s32.totalorder %s27, 1
      %p349 = por %p347, %p348
      %p351 = scmp.ne.s32.totalorder %s334, %s350
      %p352 = scmp.eq.s32.totalorder %s27, 0
      %p353 = por %p351, %p352
      %p354 = scmp.le.s32.totalorder 1, %s21
      %p355 = scmp.lt.s32.totalorder %s21, 3
      %p356 = pnand %p354, %p355
      %p357 = pneg %p356
      // Predicated region
      $region9: #{rescab_forward.1} parent=5 // pred_check
        _
      $region10: #{rescab_forward.1} parent=5 // pred_check_branch
        %359 = sbr.rel (%p356) target = $region12
      $region11: #{rescab_forward.1} parent=5 // pred_region
        %s360 = ssub.s32 %s21, 1
        // Predicated region
        $region13: #{rescab_forward.1} parent=11 // pred_check
          %p361 = pneg %p68
        $region14: #{rescab_forward.1} parent=11 // pred_check_branch
          %363 = sbr.rel (%p361) target = $region16
        $region15: #{rescab_forward.1} parent=11 // pred_region
          _
        $region16: #{rescab_forward.1} parent=11 // pred_fallthru
          _
        // Predicated region
        $region17: #{rescab_forward.1} parent=11 // pred_check
          %p364 = pneg %p89
        $region18: #{rescab_forward.1} parent=11 // pred_check_branch
          %366 = sbr.rel (%p364) target = $region20
        $region19: #{rescab_forward.1} parent=11 // pred_region
          _
        $region20: #{rescab_forward.1} parent=11 // pred_fallthru
          _
        // Predicated region
        $region21: #{rescab_forward.1} parent=11 // pred_check
          %p367 = pneg %p110
        $region22: #{rescab_forward.1} parent=11 // pred_check_branch
          %369 = sbr.rel (%p367) target = $region24
        $region23: #{rescab_forward.1} parent=11 // pred_region
          _
        $region24: #{rescab_forward.1} parent=11 // pred_fallthru
          _
        // Predicated region
        $region25: #{rescab_forward.1} parent=11 // pred_check
          %p370 = pneg %p131
        $region26: #{rescab_forward.1} parent=11 // pred_check_branch
          %372 = sbr.rel (%p370) target = $region28
        $region27: #{rescab_forward.1} parent=11 // pred_region
          _
        $region28: #{rescab_forward.1} parent=11 // pred_fallthru
          _
        // Predicated region
        $region29: #{rescab_forward.1} parent=11 // pred_check
          %p373 = pneg %p152
        $region30: #{rescab_forward.1} parent=11 // pred_check_branch
          %375 = sbr.rel (%p373) target = $region32
        $region31: #{rescab_forward.1} parent=11 // pred_region
          _
        $region32: #{rescab_forward.1} parent=11 // pred_fallthru
          _
        // Predicated region
        $region33: #{rescab_forward.1} parent=11 // pred_check
          %p376 = pneg %p173
        $region34: #{rescab_forward.1} parent=11 // pred_check_branch
          %378 = sbr.rel (%p376) target = $region36
        $region35: #{rescab_forward.1} parent=11 // pred_region
          _
        $region36: #{rescab_forward.1} parent=11 // pred_fallthru
          _
        // Predicated region
        $region37: #{rescab_forward.1} parent=11 // pred_check
          %p379 = pneg %p194
        $region38: #{rescab_forward.1} parent=11 // pred_check_branch
          %381 = sbr.rel (%p379) target = $region40
        $region39: #{rescab_forward.1} parent=11 // pred_region
          _
        $region40: #{rescab_forward.1} parent=11 // pred_fallthru
          _
        // Predicated region
        $region41: #{rescab_forward.1} parent=11 // pred_check
          %p382 = pneg %p215
        $region42: #{rescab_forward.1} parent=11 // pred_check_branch
          %384 = sbr.rel (%p382) target = $region44
        $region43: #{rescab_forward.1} parent=11 // pred_region
          _
        $region44: #{rescab_forward.1} parent=11 // pred_fallthru
          _
        // Predicated region
        $region45: #{rescab_forward.1} parent=11 // pred_check
          %p385 = pneg %p236
        $region46: #{rescab_forward.1} parent=11 // pred_check_branch
          %387 = sbr.rel (%p385) target = $region48
        $region47: #{rescab_forward.1} parent=11 // pred_region
          _
        $region48: #{rescab_forward.1} parent=11 // pred_fallthru
          _
        // Predicated region
        $region49: #{rescab_forward.1} parent=11 // pred_check
          %p388 = pneg %p257
        $region50: #{rescab_forward.1} parent=11 // pred_check_branch
          %390 = sbr.rel (%p388) target = $region52
        $region51: #{rescab_forward.1} parent=11 // pred_region
          _
        $region52: #{rescab_forward.1} parent=11 // pred_fallthru
          _
        // Predicated region
        $region53: #{rescab_forward.1} parent=11 // pred_check
          %p391 = pneg %p278
        $region54: #{rescab_forward.1} parent=11 // pred_check_branch
          %393 = sbr.rel (%p391) target = $region56
        $region55: #{rescab_forward.1} parent=11 // pred_region
          _
        $region56: #{rescab_forward.1} parent=11 // pred_fallthru
          _
        // Predicated region
        $region57: #{rescab_forward.1} parent=11 // pred_check
          %p394 = pneg %p299
        $region58: #{rescab_forward.1} parent=11 // pred_check_branch
          %396 = sbr.rel (%p394) target = $region60
        $region59: #{rescab_forward.1} parent=11 // pred_region
          _
        $region60: #{rescab_forward.1} parent=11 // pred_fallthru
          _
        // Predicated region
        $region61: #{rescab_forward.1} parent=11 // pred_check
          %p397 = pneg %p320
        $region62: #{rescab_forward.1} parent=11 // pred_check_branch
          %399 = sbr.rel (%p397) target = $region64
        $region63: #{rescab_forward.1} parent=11 // pred_region
          %s401 = ssub.s32 16, 16
          %402 = vsyncadd [#allocation5], %s401
          %s404 = sshll.u32 %s13, 4
          %s405 = int_to_ptr.vmem [resolvable:$true] %s404
          %407 = dma.vmem_to_smem %s405, 16, [#allocation4], [#allocation5]
        $region64: #{rescab_forward.1} parent=11 // pred_fallthru
          _
      $region12: #{rescab_forward.1} parent=5 // pred_fallthru
        _
      %p408 = scmp.lt.s32.totalorder %s21, 2
      // Predicated region
      $region65: #{rescab_forward.1} parent=5 // pred_check
        %p409 = pneg %p408
      $region66: #{rescab_forward.1} parent=5 // pred_check_branch
        %411 = sbr.rel (%p409) target = $region68
      $region67: #{rescab_forward.1} parent=5 // pred_region
        // Predicated region
        $region69: #{rescab_forward.1} parent=67 // pred_check
          %p412 = pneg %p41
        $region70: #{rescab_forward.1} parent=67 // pred_check_branch
          %414 = sbr.rel (%p412) target = $region72
        $region71: #{rescab_forward.1} parent=67 // pred_region
          %p415 = scmp.lt.s32.totalorder %s21, 1
          %s416 = scalar_select %p415, %s21, 1
          %s417 = smul.addr %s416, 32
          %s418 = smul.addr %s417, 8
          %s419 = scalar_lea.vmem %s0, %s418
        $region72: #{rescab_forward.1} parent=67 // pred_fallthru
          _
      $region68: #{rescab_forward.1} parent=5 // pred_fallthru
        _
      %p420 = scmp.le.s32.totalorder 1, %s21
      %p421 = scmp.lt.s32.totalorder %s21, 3
      %p422 = pnand %p420, %p421
      %p423 = pneg %p422
      // Predicated region
      $region73: #{rescab_forward.1} parent=5 // pred_check
        _
      $region74: #{rescab_forward.1} parent=5 // pred_check_branch
        %425 = sbr.rel (%p422) target = $region76
      $region75: #{rescab_forward.1} parent=5 // pred_region
        %s426 = ssub.s32 %s21, 1
        // Predicated region
        $region77: #{rescab_forward.1} parent=75 // pred_check
          %p427 = pneg %p320
        $region78: #{rescab_forward.1} parent=75 // pred_check_branch
          %429 = sbr.rel (%p427) target = $region80
        $region79: #{rescab_forward.1} parent=75 // pred_region
          %430 = dma.done [#allocation5], 16
        $region80: #{rescab_forward.1} parent=75 // pred_fallthru
          _
        %431 = sfence
        %p432 = scmp.lt.s32.totalorder %s26, 1
        %s433 = scalar_select %p432, %s26, 1
        %s434 = smul.addr %s433, 32
        %s435 = smul.addr %s434, 8
        %s436 = scalar_lea.vmem %s0, %s435
        %p437 = pneg %p47
        %p438 = pneg %p44
        %p439 = pneg %p68
        %p440 = pneg %p65
        %p441 = pneg %p89
        %p442 = pneg %p86
        %p443 = pneg %p110
        %p444 = pneg %p107
        %p445 = pneg %p131
        %p446 = pneg %p128
        %p447 = pneg %p152
        %p448 = pneg %p149
        %p449 = pneg %p173
        %p450 = pneg %p170
        %p451 = pneg %p194
        %p452 = pneg %p191
        %p453 = pneg %p215
        %p454 = pneg %p212
        %p455 = pneg %p236
        %p456 = pneg %p233
        %p457 = pneg %p257
        %p458 = pneg %p254
        %p459 = pneg %p278
        %p460 = pneg %p275
        %p461 = pneg %p299
        %p462 = pneg %p296
        %p463 = pneg %p320
        %p464 = pneg %p317
        %p465 = pneg %p346
        %p466 = pneg %p343
        %p467 = scmp.lt.s32.totalorder %s26, 1
        %s468 = scalar_select %p467, %s26, 1
        %s469 = smul.addr %s468, 32
        %s470 = smul.addr %s469, 8
        %s471 = scalar_lea.vmem %s14, %s470
        %p472 = scmp.lt.s32.totalorder %s26, 1
        %s473 = scalar_select %p472, %s26, 1
        %s474 = smul.addr %s473, 32
        %s475 = smul.addr %s474, 8
        %s476 = scalar_lea.vmem %s0, %s475
        %p477 = scmp.lt.s32.totalorder %s26, 1
        %s478 = scalar_select %p477, %s26, 1
        %s479 = smul.addr %s478, 32
        %s480 = smul.addr %s479, 8
        %s481 = scalar_lea.vmem %s14, %s480
        %vm482 = vcmask 64512
        %483 = vst.msk [vmem:[#allocation2] sm:$0xff] %vm482, 0.0
        %484 = vst.msk [vmem:[#allocation2 + $0x8] sm:$0xff] %vm482, 0.0
        %vm485 = vcmask 58368
        %486 = vst.msk [vmem:[#allocation2 + $0x10] sm:$0x3] %vm485, 0.0
        %487 = vst.msk [vmem:[#allocation2 + $0x18] sm:$0xff] %vm482, 0.0
        %488 = vst.msk [vmem:[#allocation2 + $0x20] sm:$0xff] %vm482, 0.0
        %489 = vst.msk [vmem:[#allocation2 + $0x28] sm:$0x3] %vm485, 0.0
        %490 = vst.msk [vmem:[#allocation2 + $0x30] sm:$0xff] %vm482, 0.0
        %491 = vst.msk [vmem:[#allocation2 + $0x38] sm:$0xff] %vm482, 0.0
        %492 = vst.msk [vmem:[#allocation2 + $0x40] sm:$0x3] %vm485, 0.0
        %493 = vst.msk [vmem:[#allocation2 + $0x48] sm:$0xff] %vm482, 0.0
        %494 = vst.msk [vmem:[#allocation2 + $0x50] sm:$0xff] %vm482, 0.0
        %495 = vst.msk [vmem:[#allocation2 + $0x58] sm:$0x3] %vm485, 0.0
        %496 = vst.msk [vmem:[#allocation2 + $0x60] sm:$0xff] %vm482, 0.0
        %497 = vst.msk [vmem:[#allocation2 + $0x68] sm:$0xff] %vm482, 0.0
        %498 = vst.msk [vmem:[#allocation2 + $0x70] sm:$0x3] %vm485, 0.0
        %499 = vst.msk [vmem:[#allocation2 + $0x78] sm:$0xff] %vm482, 0.0
        %500 = vst.msk [vmem:[#allocation2 + $0x80] sm:$0xff] %vm482, 0.0
        %501 = vst.msk [vmem:[#allocation2 + $0x88] sm:$0x3] %vm485, 0.0
        %502 = vst.msk [vmem:[#allocation2 + $0x90] sm:$0xff] %vm482, 0.0
        %503 = vst.msk [vmem:[#allocation2 + $0x98] sm:$0xff] %vm482, 0.0
        %504 = vst.msk [vmem:[#allocation2 + $0xa0] sm:$0x3] %vm485, 0.0
        %505 = vst.msk [vmem:[#allocation2 + $0xa8] sm:$0xff] %vm482, 0.0
        %506 = vst.msk [vmem:[#allocation2 + $0xb0] sm:$0xff] %vm482, 0.0
        %507 = vst.msk [vmem:[#allocation2 + $0xb8] sm:$0x3] %vm485, 0.0
        %508 = vst.msk [vmem:[#allocation2 + $0xc0] sm:$0xff] %vm482, 0.0
        %509 = vst.msk [vmem:[#allocation2 + $0xc8] sm:$0xff] %vm482, 0.0
        %510 = vst.msk [vmem:[#allocation2 + $0xd0] sm:$0x3] %vm485, 0.0
        %511 = vst.msk [vmem:[#allocation2 + $0xd8] sm:$0xff] %vm482, 0.0
        %512 = vst.msk [vmem:[#allocation2 + $0xe0] sm:$0xff] %vm482, 0.0
        %513 = vst.msk [vmem:[#allocation2 + $0xe8] sm:$0x3] %vm485, 0.0
        %514 = vst.msk [vmem:[#allocation2 + $0xf0] sm:$0xff] %vm482, 0.0
        %515 = vst.msk [vmem:[#allocation2 + $0xf8] sm:$0xff] %vm482, 0.0
        %516 = vst.msk [vmem:[#allocation2 + $0x100] sm:$0x3] %vm485, 0.0
        %517 = vst.msk [vmem:[#allocation2 + $0x108] sm:$0xff] %vm482, 0.0
        %518 = vst.msk [vmem:[#allocation2 + $0x110] sm:$0xff] %vm482, 0.0
        %519 = vst.msk [vmem:[#allocation2 + $0x118] sm:$0x3] %vm485, 0.0
        %520 = vst.msk [vmem:[#allocation2 + $0x120] sm:$0xff] %vm482, 0.0
        %521 = vst.msk [vmem:[#allocation2 + $0x128] sm:$0xff] %vm482, 0.0
        %522 = vst.msk [vmem:[#allocation2 + $0x130] sm:$0x3] %vm485, 0.0
        %523 = vst.msk [vmem:[#allocation2 + $0x138] sm:$0xff] %vm482, 0.0
        %524 = vst.msk [vmem:[#allocation2 + $0x140] sm:$0xff] %vm482, 0.0
        %525 = vst.msk [vmem:[#allocation2 + $0x148] sm:$0x3] %vm485, 0.0
        %526 = vst.msk [vmem:[#allocation2 + $0x150] sm:$0xff] %vm482, 0.0
        %527 = vst.msk [vmem:[#allocation2 + $0x158] sm:$0xff] %vm482, 0.0
        %528 = vst.msk [vmem:[#allocation2 + $0x160] sm:$0x3] %vm485, 0.0
        %529 = vst.msk [vmem:[#allocation2 + $0x168] sm:$0xff] %vm482, 0.0
        %530 = vst.msk [vmem:[#allocation2 + $0x170] sm:$0xff] %vm482, 0.0
        %531 = vst.msk [vmem:[#allocation2 + $0x178] sm:$0x3] %vm485, 0.0
        %532 = vst.msk [vmem:[#allocation2 + $0x180] sm:$0xff] %vm482, 0.0
        %533 = vst.msk [vmem:[#allocation2 + $0x188] sm:$0xff] %vm482, 0.0
        %534 = vst.msk [vmem:[#allocation2 + $0x190] sm:$0x3] %vm485, 0.0
        %535 = vst.msk [vmem:[#allocation2 + $0x198] sm:$0xff] %vm482, 0.0
        %536 = vst.msk [vmem:[#allocation2 + $0x1a0] sm:$0xff] %vm482, 0.0
        %537 = vst.msk [vmem:[#allocation2 + $0x1a8] sm:$0x3] %vm485, 0.0
        %v538 = vld [vmem:[%s476] sm:$0xff]
        %v539 = vld [vmem:[%s476 + $0x8] sm:$0xff]
        %v540 = vld [vmem:[%s476 + $0x10] sm:$0xff]
        %v541 = vld [vmem:[%s476 + $0x18] sm:$0xff]
        %v542 = vld [vmem:[%s476 + $0x20] sm:$0xff]
        %v543 = vld [vmem:[%s476 + $0x28] sm:$0xff]
        %v544 = vld [vmem:[%s476 + $0x30] sm:$0xff]
        %v545 = vld [vmem:[%s476 + $0x38] sm:$0xff]
        %v546 = vld [vmem:[%s476 + $0x40] sm:$0xff]
        %v547 = vld [vmem:[%s476 + $0x48] sm:$0xff]
        %v548 = vld [vmem:[%s476 + $0x50] sm:$0xff]
        %v549 = vld [vmem:[%s476 + $0x58] sm:$0xff]
        %v550 = vld [vmem:[%s476 + $0x60] sm:$0xff]
        %v551 = vld [vmem:[%s476 + $0x68] sm:$0xff]
        %v552 = vld [vmem:[%s476 + $0x70] sm:$0xff]
        %v553 = vld [vmem:[%s476 + $0x78] sm:$0xff]
        %v554 = vld [vmem:[%s476 + $0x80] sm:$0xff]
        %v555 = vld [vmem:[%s476 + $0x88] sm:$0xff]
        %v556 = vld [vmem:[%s476 + $0x90] sm:$0xff]
        %v557 = vld [vmem:[%s476 + $0x98] sm:$0xff]
        %v558 = vld [vmem:[%s476 + $0xa0] sm:$0xff]
        %v559 = vld [vmem:[%s476 + $0xa8] sm:$0xff]
        %v560 = vld [vmem:[%s476 + $0xb0] sm:$0xff]
        %v561 = vld [vmem:[%s476 + $0xb8] sm:$0xff]
        %v562 = vld [vmem:[%s476 + $0xc0] sm:$0xff]
        %v563 = vld [vmem:[%s476 + $0xc8] sm:$0xff]
        %v564 = vld [vmem:[%s476 + $0xd0] sm:$0xff]
        %v565 = vld [vmem:[%s476 + $0xd8] sm:$0xff]
        %v566 = vld [vmem:[%s476 + $0xe0] sm:$0xff]
        %v567 = vld [vmem:[%s476 + $0xe8] sm:$0xff]
        %v568 = vld [vmem:[%s476 + $0xf0] sm:$0xff]
        %v569 = vld [vmem:[%s476 + $0xf8] sm:$0xff]
        %s570 = scalar_lea.vmem [#allocation2], 24
        %571 = vst.msk [vmem:[%s570 + $0x1] sm:$0xff] %vm482, %v538
        %572 = vst.msk [vmem:[%s570 + $0x9] sm:$0xff] %vm482, %v539
        %573 = vst.msk [vmem:[%s570 + $0x19] sm:$0xff] %vm482, %v540
        %574 = vst.msk [vmem:[%s570 + $0x21] sm:$0xff] %vm482, %v541
        %575 = vst.msk [vmem:[%s570 + $0x31] sm:$0xff] %vm482, %v542
        %576 = vst.msk [vmem:[%s570 + $0x39] sm:$0xff] %vm482, %v543
        %577 = vst.msk [vmem:[%s570 + $0x49] sm:$0xff] %vm482, %v544
        %578 = vst.msk [vmem:[%s570 + $0x51] sm:$0xff] %vm482, %v545
        %579 = vst.msk [vmem:[%s570 + $0x61] sm:$0xff] %vm482, %v546
        %580 = vst.msk [vmem:[%s570 + $0x69] sm:$0xff] %vm482, %v547
        %581 = vst.msk [vmem:[%s570 + $0x79] sm:$0xff] %vm482, %v548
        %582 = vst.msk [vmem:[%s570 + $0x81] sm:$0xff] %vm482, %v549
        %583 = vst.msk [vmem:[%s570 + $0x91] sm:$0xff] %vm482, %v550
        %584 = vst.msk [vmem:[%s570 + $0x99] sm:$0xff] %vm482, %v551
        %585 = vst.msk [vmem:[%s570 + $0xa9] sm:$0xff] %vm482, %v552
        %586 = vst.msk [vmem:[%s570 + $0xb1] sm:$0xff] %vm482, %v553
        %587 = vst.msk [vmem:[%s570 + $0xc1] sm:$0xff] %vm482, %v554
        %588 = vst.msk [vmem:[%s570 + $0xc9] sm:$0xff] %vm482, %v555
        %589 = vst.msk [vmem:[%s570 + $0xd9] sm:$0xff] %vm482, %v556
        %590 = vst.msk [vmem:[%s570 + $0xe1] sm:$0xff] %vm482, %v557
        %591 = vst.msk [vmem:[%s570 + $0xf1] sm:$0xff] %vm482, %v558
        %592 = vst.msk [vmem:[%s570 + $0xf9] sm:$0xff] %vm482, %v559
        %593 = vst.msk [vmem:[%s570 + $0x109] sm:$0xff] %vm482, %v560
        %594 = vst.msk [vmem:[%s570 + $0x111] sm:$0xff] %vm482, %v561
        %595 = vst.msk [vmem:[%s570 + $0x121] sm:$0xff] %vm482, %v562
        %596 = vst.msk [vmem:[%s570 + $0x129] sm:$0xff] %vm482, %v563
        %597 = vst.msk [vmem:[%s570 + $0x139] sm:$0xff] %vm482, %v564
        %598 = vst.msk [vmem:[%s570 + $0x141] sm:$0xff] %vm482, %v565
        %599 = vst.msk [vmem:[%s570 + $0x151] sm:$0xff] %vm482, %v566
        %600 = vst.msk [vmem:[%s570 + $0x159] sm:$0xff] %vm482, %v567
        %601 = vst.msk [vmem:[%s570 + $0x169] sm:$0xff] %vm482, %v568
        %602 = vst.msk [vmem:[%s570 + $0x171] sm:$0xff] %vm482, %v569
        %v603 = vld [vmem:[#allocation2] sm:$0xff]
        %v604 = vld [vmem:[#allocation2 + $0x8] sm:$0xff]
        %v605 = vld [vmem:[#allocation2 + $0x18] sm:$0xff]
        %v606 = vld [vmem:[#allocation2 + $0x20] sm:$0xff]
        %v607 = vld [vmem:[#allocation2 + $0x30] sm:$0xff]
        %v608 = vld [vmem:[#allocation2 + $0x38] sm:$0xff]
        %v609 = vld [vmem:[#allocation2 + $0x48] sm:$0xff]
        %v610 = vld [vmem:[#allocation2 + $0x50] sm:$0xff]
        %v611 = vld [vmem:[#allocation2 + $0x60] sm:$0xff]
        %v612 = vld [vmem:[#allocation2 + $0x68] sm:$0xff]
        %v613 = vld [vmem:[#allocation2 + $0x78] sm:$0xff]
        %v614 = vld [vmem:[#allocation2 + $0x80] sm:$0xff]
        %v615 = vld [vmem:[#allocation2 + $0x90] sm:$0xff]
        %v616 = vld [vmem:[#allocation2 + $0x98] sm:$0xff]
        %v617 = vld [vmem:[#allocation2 + $0xa8] sm:$0xff]
        %v618 = vld [vmem:[#allocation2 + $0xb0] sm:$0xff]
        %v619 = vld [vmem:[#allocation2 + $0xc0] sm:$0xff]
        %v620 = vld [vmem:[#allocation2 + $0xc8] sm:$0xff]
        %v621 = vld [vmem:[#allocation2 + $0xd8] sm:$0xff]
        %v622 = vld [vmem:[#allocation2 + $0xe0] sm:$0xff]
        %v623 = vld [vmem:[#allocation2 + $0xf0] sm:$0xff]
        %v624 = vld [vmem:[#allocation2 + $0xf8] sm:$0xff]
        %v625 = vld [vmem:[#allocation2 + $0x108] sm:$0xff]
        %v626 = vld [vmem:[#allocation2 + $0x110] sm:$0xff]
        %v627 = vld [vmem:[#allocation2 + $0x120] sm:$0xff]
        %v628 = vld [vmem:[#allocation2 + $0x128] sm:$0xff]
        %v629 = vld [vmem:[#allocation2 + $0x138] sm:$0xff]
        %v630 = vld [vmem:[#allocation2 + $0x140] sm:$0xff]
        %v631 = vld [vmem:[#allocation2 + $0x150] sm:$0xff]
        %v632 = vld [vmem:[#allocation2 + $0x158] sm:$0xff]
        %v633 = vld [vmem:[#allocation2 + $0x168] sm:$0xff]
        %v634 = vld [vmem:[#allocation2 + $0x170] sm:$0xff]
        %635 = vst.msk [vmem:[#allocation3] sm:$0xff] %vm482, %v603
        %636 = vst.msk [vmem:[#allocation3 + $0x8] sm:$0xff] %vm482, %v604
        %637 = vst.msk [vmem:[#allocation3 + $0x10] sm:$0xff] %vm482, %v605
        %638 = vst.msk [vmem:[#allocation3 + $0x18] sm:$0xff] %vm482, %v606
        %639 = vst.msk [vmem:[#allocation3 + $0x20] sm:$0xff] %vm482, %v607
        %640 = vst.msk [vmem:[#allocation3 + $0x28] sm:$0xff] %vm482, %v608
        %641 = vst.msk [vmem:[#allocation3 + $0x30] sm:$0xff] %vm482, %v609
        %642 = vst.msk [vmem:[#allocation3 + $0x38] sm:$0xff] %vm482, %v610
        %643 = vst.msk [vmem:[#allocation3 + $0x40] sm:$0xff] %vm482, %v611
        %644 = vst.msk [vmem:[#allocation3 + $0x48] sm:$0xff] %vm482, %v612
        %645 = vst.msk [vmem:[#allocation3 + $0x50] sm:$0xff] %vm482, %v613
        %646 = vst.msk [vmem:[#allocation3 + $0x58] sm:$0xff] %vm482, %v614
        %647 = vst.msk [vmem:[#allocation3 + $0x60] sm:$0xff] %vm482, %v615
        %648 = vst.msk [vmem:[#allocation3 + $0x68] sm:$0xff] %vm482, %v616
        %649 = vst.msk [vmem:[#allocation3 + $0x70] sm:$0xff] %vm482, %v617
        %650 = vst.msk [vmem:[#allocation3 + $0x78] sm:$0xff] %vm482, %v618
        %651 = vst.msk [vmem:[#allocation3 + $0x80] sm:$0xff] %vm482, %v619
        %652 = vst.msk [vmem:[#allocation3 + $0x88] sm:$0xff] %vm482, %v620
        %653 = vst.msk [vmem:[#allocation3 + $0x90] sm:$0xff] %vm482, %v621
        %654 = vst.msk [vmem:[#allocation3 + $0x98] sm:$0xff] %vm482, %v622
        %655 = vst.msk [vmem:[#allocation3 + $0xa0] sm:$0xff] %vm482, %v623
        %656 = vst.msk [vmem:[#allocation3 + $0xa8] sm:$0xff] %vm482, %v624
        %657 = vst.msk [vmem:[#allocation3 + $0xb0] sm:$0xff] %vm482, %v625
        %658 = vst.msk [vmem:[#allocation3 + $0xb8] sm:$0xff] %vm482, %v626
        %659 = vst.msk [vmem:[#allocation3 + $0xc0] sm:$0xff] %vm482, %v627
        %660 = vst.msk [vmem:[#allocation3 + $0xc8] sm:$0xff] %vm482, %v628
        %661 = vst.msk [vmem:[#allocation3 + $0xd0] sm:$0xff] %vm482, %v629
        %662 = vst.msk [vmem:[#allocation3 + $0xd8] sm:$0xff] %vm482, %v630
        %663 = vst.msk [vmem:[#allocation3 + $0xe0] sm:$0xff] %vm482, %v631
        %664 = vst.msk [vmem:[#allocation3 + $0xe8] sm:$0xff] %vm482, %v632
        %665 = vst.msk [vmem:[#allocation3 + $0xf0] sm:$0xff] %vm482, %v633
        %666 = vst.msk [vmem:[#allocation3 + $0xf8] sm:$0xff] %vm482, %v634
        %v667 = vld [vmem:[#allocation2 + $0x1] sm:$0xff]
        %v668 = vld [vmem:[#allocation2 + $0x9] sm:$0xff]
        %v669 = vld [vmem:[#allocation2 + $0x19] sm:$0xff]
        %v670 = vld [vmem:[#allocation2 + $0x21] sm:$0xff]
        %v671 = vld [vmem:[#allocation2 + $0x31] sm:$0xff]
        %v672 = vld [vmem:[#allocation2 + $0x39] sm:$0xff]
        %v673 = vld [vmem:[#allocation2 + $0x49] sm:$0xff]
        %v674 = vld [vmem:[#allocation2 + $0x51] sm:$0xff]
        %v675 = vld [vmem:[#allocation2 + $0x61] sm:$0xff]
        %v676 = vld [vmem:[#allocation2 + $0x69] sm:$0xff]
        %v677 = vld [vmem:[#allocation2 + $0x79] sm:$0xff]
        %v678 = vld [vmem:[#allocation2 + $0x81] sm:$0xff]
        %v679 = vld [vmem:[#allocation2 + $0x91] sm:$0xff]
        %v680 = vld [vmem:[#allocation2 + $0x99] sm:$0xff]
        %v681 = vld [vmem:[#allocation2 + $0xa9] sm:$0xff]
        %v682 = vld [vmem:[#allocation2 + $0xb1] sm:$0xff]
        %v683 = vld [vmem:[#allocation2 + $0xc1] sm:$0xff]
        %v684 = vld [vmem:[#allocation2 + $0xc9] sm:$0xff]
        %v685 = vld [vmem:[#allocation2 + $0xd9] sm:$0xff]
        %v686 = vld [vmem:[#allocation2 + $0xe1] sm:$0xff]
        %v687 = vld [vmem:[#allocation2 + $0xf1] sm:$0xff]
        %v688 = vld [vmem:[#allocation2 + $0xf9] sm:$0xff]
        %v689 = vld [vmem:[#allocation2 + $0x109] sm:$0xff]
        %v690 = vld [vmem:[#allocation2 + $0x111] sm:$0xff]
        %v691 = vld [vmem:[#allocation2 + $0x121] sm:$0xff]
        %v692 = vld [vmem:[#allocation2 + $0x129] sm:$0xff]
        %v693 = vld [vmem:[#allocation2 + $0x139] sm:$0xff]
        %v694 = vld [vmem:[#allocation2 + $0x141] sm:$0xff]
        %v695 = vld [vmem:[#allocation2 + $0x151] sm:$0xff]
        %v696 = vld [vmem:[#allocation2 + $0x159] sm:$0xff]
        %v697 = vld [vmem:[#allocation2 + $0x169] sm:$0xff]
        %v698 = vld [vmem:[#allocation2 + $0x171] sm:$0xff]
        %731 = vrot.lane.b32.xlu0 %v667, 8
        %v732 = vpop.permute.xlu0 %731
        %733 = vrot.lane.b32.xlu0 %v668, 8
        %v734 = vpop.permute.xlu0 %733
        %735 = vrot.lane.b32.xlu0 %v669, 8
        %v736 = vpop.permute.xlu0 %735
        %737 = vrot.lane.b32.xlu0 %v670, 8
        %v738 = vpop.permute.xlu0 %737
        %739 = vrot.lane.b32.xlu0 %v671, 8
        %v740 = vpop.permute.xlu0 %739
        %741 = vrot.lane.b32.xlu0 %v672, 8
        %v742 = vpop.permute.xlu0 %741
        %743 = vrot.lane.b32.xlu0 %v673, 8
        %v744 = vpop.permute.xlu0 %743
        %745 = vrot.lane.b32.xlu0 %v674, 8
        %v746 = vpop.permute.xlu0 %745
        %747 = vrot.lane.b32.xlu0 %v675, 8
        %v748 = vpop.permute.xlu0 %747
        %749 = vrot.lane.b32.xlu0 %v676, 8
        %v750 = vpop.permute.xlu0 %749
        %751 = vrot.lane.b32.xlu0 %v677, 8
        %v752 = vpop.permute.xlu0 %751
        %753 = vrot.lane.b32.xlu0 %v678, 8
        %v754 = vpop.permute.xlu0 %753
        %755 = vrot.lane.b32.xlu0 %v679, 8
        %v756 = vpop.permute.xlu0 %755
        %757 = vrot.lane.b32.xlu0 %v680, 8
        %v758 = vpop.permute.xlu0 %757
        %759 = vrot.lane.b32.xlu0 %v681, 8
        %v760 = vpop.permute.xlu0 %759
        %761 = vrot.lane.b32.xlu0 %v682, 8
        %v762 = vpop.permute.xlu0 %761
        %763 = vrot.lane.b32.xlu0 %v683, 8
        %v764 = vpop.permute.xlu0 %763
        %765 = vrot.lane.b32.xlu0 %v684, 8
        %v766 = vpop.permute.xlu0 %765
        %767 = vrot.lane.b32.xlu0 %v685, 8
        %v768 = vpop.permute.xlu0 %767
        %769 = vrot.lane.b32.xlu0 %v686, 8
        %v770 = vpop.permute.xlu0 %769
        %771 = vrot.lane.b32.xlu0 %v687, 8
        %v772 = vpop.permute.xlu0 %771
        %773 = vrot.lane.b32.xlu0 %v688, 8
        %v774 = vpop.permute.xlu0 %773
        %775 = vrot.lane.b32.xlu0 %v689, 8
        %v776 = vpop.permute.xlu0 %775
        %777 = vrot.lane.b32.xlu0 %v690, 8
        %v778 = vpop.permute.xlu0 %777
        %779 = vrot.lane.b32.xlu0 %v691, 8
        %v780 = vpop.permute.xlu0 %779
        %781 = vrot.lane.b32.xlu0 %v692, 8
        %v782 = vpop.permute.xlu0 %781
        %783 = vrot.lane.b32.xlu0 %v693, 8
        %v784 = vpop.permute.xlu0 %783
        %785 = vrot.lane.b32.xlu0 %v694, 8
        %v786 = vpop.permute.xlu0 %785
        %787 = vrot.lane.b32.xlu0 %v695, 8
        %v788 = vpop.permute.xlu0 %787
        %789 = vrot.lane.b32.xlu0 %v696, 8
        %v790 = vpop.permute.xlu0 %789
        %791 = vrot.lane.b32.xlu0 %v697, 8
        %v792 = vpop.permute.xlu0 %791
        %793 = vrot.lane.b32.xlu0 %v698, 8
        %v794 = vpop.permute.xlu0 %793
        %vm827 = vcmask 130112
        %828 = vst.msk [vmem:[#allocation3] sm:$0xff] %vm827, %v732
        %829 = vst.msk [vmem:[#allocation3 + $0x8] sm:$0xff] %vm827, %v734
        %830 = vst.msk [vmem:[#allocation3 + $0x10] sm:$0xff] %vm827, %v736
        %831 = vst.msk [vmem:[#allocation3 + $0x18] sm:$0xff] %vm827, %v738
        %832 = vst.msk [vmem:[#allocation3 + $0x20] sm:$0xff] %vm827, %v740
        %833 = vst.msk [vmem:[#allocation3 + $0x28] sm:$0xff] %vm827, %v742
        %834 = vst.msk [vmem:[#allocation3 + $0x30] sm:$0xff] %vm827, %v744
        %835 = vst.msk [vmem:[#allocation3 + $0x38] sm:$0xff] %vm827, %v746
        %836 = vst.msk [vmem:[#allocation3 + $0x40] sm:$0xff] %vm827, %v748
        %837 = vst.msk [vmem:[#allocation3 + $0x48] sm:$0xff] %vm827, %v750
        %838 = vst.msk [vmem:[#allocation3 + $0x50] sm:$0xff] %vm827, %v752
        %839 = vst.msk [vmem:[#allocation3 + $0x58] sm:$0xff] %vm827, %v754
        %840 = vst.msk [vmem:[#allocation3 + $0x60] sm:$0xff] %vm827, %v756
        %841 = vst.msk [vmem:[#allocation3 + $0x68] sm:$0xff] %vm827, %v758
        %842 = vst.msk [vmem:[#allocation3 + $0x70] sm:$0xff] %vm827, %v760
        %843 = vst.msk [vmem:[#allocation3 + $0x78] sm:$0xff] %vm827, %v762
        %844 = vst.msk [vmem:[#allocation3 + $0x80] sm:$0xff] %vm827, %v764
        %845 = vst.msk [vmem:[#allocation3 + $0x88] sm:$0xff] %vm827, %v766
        %846 = vst.msk [vmem:[#allocation3 + $0x90] sm:$0xff] %vm827, %v768
        %847 = vst.msk [vmem:[#allocation3 + $0x98] sm:$0xff] %vm827, %v770
        %848 = vst.msk [vmem:[#allocation3 + $0xa0] sm:$0xff] %vm827, %v772
        %849 = vst.msk [vmem:[#allocation3 + $0xa8] sm:$0xff] %vm827, %v774
        %850 = vst.msk [vmem:[#allocation3 + $0xb0] sm:$0xff] %vm827, %v776
        %851 = vst.msk [vmem:[#allocation3 + $0xb8] sm:$0xff] %vm827, %v778
        %852 = vst.msk [vmem:[#allocation3 + $0xc0] sm:$0xff] %vm827, %v780
        %853 = vst.msk [vmem:[#allocation3 + $0xc8] sm:$0xff] %vm827, %v782
        %854 = vst.msk [vmem:[#allocation3 + $0xd0] sm:$0xff] %vm827, %v784
        %855 = vst.msk [vmem:[#allocation3 + $0xd8] sm:$0xff] %vm827, %v786
        %856 = vst.msk [vmem:[#allocation3 + $0xe0] sm:$0xff] %vm827, %v788
        %857 = vst.msk [vmem:[#allocation3 + $0xe8] sm:$0xff] %vm827, %v790
        %858 = vst.msk [vmem:[#allocation3 + $0xf0] sm:$0xff] %vm827, %v792
        %859 = vst.msk [vmem:[#allocation3 + $0xf8] sm:$0xff] %vm827, %v794
        %v860 = vld [vmem:[#allocation2 + $0x2] sm:$0xff]
        %v861 = vld [vmem:[#allocation2 + $0xa] sm:$0xff]
        %v862 = vld [vmem:[#allocation2 + $0x1a] sm:$0xff]
        %v863 = vld [vmem:[#allocation2 + $0x22] sm:$0xff]
        %v864 = vld [vmem:[#allocation2 + $0x32] sm:$0xff]
        %v865 = vld [vmem:[#allocation2 + $0x3a] sm:$0xff]
        %v866 = vld [vmem:[#allocation2 + $0x4a] sm:$0xff]
        %v867 = vld [vmem:[#allocation2 + $0x52] sm:$0xff]
        %v868 = vld [vmem:[#allocation2 + $0x62] sm:$0xff]
        %v869 = vld [vmem:[#allocation2 + $0x6a] sm:$0xff]
        %v870 = vld [vmem:[#allocation2 + $0x7a] sm:$0xff]
        %v871 = vld [vmem:[#allocation2 + $0x82] sm:$0xff]
        %v872 = vld [vmem:[#allocation2 + $0x92] sm:$0xff]
        %v873 = vld [vmem:[#allocation2 + $0x9a] sm:$0xff]
        %v874 = vld [vmem:[#allocation2 + $0xaa] sm:$0xff]
        %v875 = vld [vmem:[#allocation2 + $0xb2] sm:$0xff]
        %v876 = vld [vmem:[#allocation2 + $0xc2] sm:$0xff]
        %v877 = vld [vmem:[#allocation2 + $0xca] sm:$0xff]
        %v878 = vld [vmem:[#allocation2 + $0xda] sm:$0xff]
        %v879 = vld [vmem:[#allocation2 + $0xe2] sm:$0xff]
        %v880 = vld [vmem:[#allocation2 + $0xf2] sm:$0xff]
        %v881 = vld [vmem:[#allocation2 + $0xfa] sm:$0xff]
        %v882 = vld [vmem:[#allocation2 + $0x10a] sm:$0xff]
        %v883 = vld [vmem:[#allocation2 + $0x112] sm:$0xff]
        %v884 = vld [vmem:[#allocation2 + $0x122] sm:$0xff]
        %v885 = vld [vmem:[#allocation2 + $0x12a] sm:$0xff]
        %v886 = vld [vmem:[#allocation2 + $0x13a] sm:$0xff]
        %v887 = vld [vmem:[#allocation2 + $0x142] sm:$0xff]
        %v888 = vld [vmem:[#allocation2 + $0x152] sm:$0xff]
        %v889 = vld [vmem:[#allocation2 + $0x15a] sm:$0xff]
        %v890 = vld [vmem:[#allocation2 + $0x16a] sm:$0xff]
        %v891 = vld [vmem:[#allocation2 + $0x172] sm:$0xff]
        %924 = vrot.lane.b32.xlu0 %v860, 16
        %v925 = vpop.permute.xlu0 %924
        %926 = vrot.lane.b32.xlu0 %v861, 16
        %v927 = vpop.permute.xlu0 %926
        %928 = vrot.lane.b32.xlu0 %v862, 16
        %v929 = vpop.permute.xlu0 %928
        %930 = vrot.lane.b32.xlu0 %v863, 16
        %v931 = vpop.permute.xlu0 %930
        %932 = vrot.lane.b32.xlu0 %v864, 16
        %v933 = vpop.permute.xlu0 %932
        %934 = vrot.lane.b32.xlu0 %v865, 16
        %v935 = vpop.permute.xlu0 %934
        %936 = vrot.lane.b32.xlu0 %v866, 16
        %v937 = vpop.permute.xlu0 %936
        %938 = vrot.lane.b32.xlu0 %v867, 16
        %v939 = vpop.permute.xlu0 %938
        %940 = vrot.lane.b32.xlu0 %v868, 16
        %v941 = vpop.permute.xlu0 %940
        %942 = vrot.lane.b32.xlu0 %v869, 16
        %v943 = vpop.permute.xlu0 %942
        %944 = vrot.lane.b32.xlu0 %v870, 16
        %v945 = vpop.permute.xlu0 %944
        %946 = vrot.lane.b32.xlu0 %v871, 16
        %v947 = vpop.permute.xlu0 %946
        %948 = vrot.lane.b32.xlu0 %v872, 16
        %v949 = vpop.permute.xlu0 %948
        %950 = vrot.lane.b32.xlu0 %v873, 16
        %v951 = vpop.permute.xlu0 %950
        %952 = vrot.lane.b32.xlu0 %v874, 16
        %v953 = vpop.permute.xlu0 %952
        %954 = vrot.lane.b32.xlu0 %v875, 16
        %v955 = vpop.permute.xlu0 %954
        %956 = vrot.lane.b32.xlu0 %v876, 16
        %v957 = vpop.permute.xlu0 %956
        %958 = vrot.lane.b32.xlu0 %v877, 16
        %v959 = vpop.permute.xlu0 %958
        %960 = vrot.lane.b32.xlu0 %v878, 16
        %v961 = vpop.permute.xlu0 %960
        %962 = vrot.lane.b32.xlu0 %v879, 16
        %v963 = vpop.permute.xlu0 %962
        %964 = vrot.lane.b32.xlu0 %v880, 16
        %v965 = vpop.permute.xlu0 %964
        %966 = vrot.lane.b32.xlu0 %v881, 16
        %v967 = vpop.permute.xlu0 %966
        %968 = vrot.lane.b32.xlu0 %v882, 16
        %v969 = vpop.permute.xlu0 %968
        %970 = vrot.lane.b32.xlu0 %v883, 16
        %v971 = vpop.permute.xlu0 %970
        %972 = vrot.lane.b32.xlu0 %v884, 16
        %v973 = vpop.permute.xlu0 %972
        %974 = vrot.lane.b32.xlu0 %v885, 16
        %v975 = vpop.permute.xlu0 %974
        %976 = vrot.lane.b32.xlu0 %v886, 16
        %v977 = vpop.permute.xlu0 %976
        %978 = vrot.lane.b32.xlu0 %v887, 16
        %v979 = vpop.permute.xlu0 %978
        %980 = vrot.lane.b32.xlu0 %v888, 16
        %v981 = vpop.permute.xlu0 %980
        %982 = vrot.lane.b32.xlu0 %v889, 16
        %v983 = vpop.permute.xlu0 %982
        %984 = vrot.lane.b32.xlu0 %v890, 16
        %v985 = vpop.permute.xlu0 %984
        %986 = vrot.lane.b32.xlu0 %v891, 16
        %v987 = vpop.permute.xlu0 %986
        %vm1020 = vcmask 195712
        %1021 = vst.msk [vmem:[#allocation3] sm:$0xff] %vm1020, %v925
        %1022 = vst.msk [vmem:[#allocation3 + $0x8] sm:$0xff] %vm1020, %v927
        %1023 = vst.msk [vmem:[#allocation3 + $0x10] sm:$0xff] %vm1020, %v929
        %1024 = vst.msk [vmem:[#allocation3 + $0x18] sm:$0xff] %vm1020, %v931
        %1025 = vst.msk [vmem:[#allocation3 + $0x20] sm:$0xff] %vm1020, %v933
        %1026 = vst.msk [vmem:[#allocation3 + $0x28] sm:$0xff] %vm1020, %v935
        %1027 = vst.msk [vmem:[#allocation3 + $0x30] sm:$0xff] %vm1020, %v937
        %1028 = vst.msk [vmem:[#allocation3 + $0x38] sm:$0xff] %vm1020, %v939
        %1029 = vst.msk [vmem:[#allocation3 + $0x40] sm:$0xff] %vm1020, %v941
        %1030 = vst.msk [vmem:[#allocation3 + $0x48] sm:$0xff] %vm1020, %v943
        %1031 = vst.msk [vmem:[#allocation3 + $0x50] sm:$0xff] %vm1020, %v945
        %1032 = vst.msk [vmem:[#allocation3 + $0x58] sm:$0xff] %vm1020, %v947
        %1033 = vst.msk [vmem:[#allocation3 + $0x60] sm:$0xff] %vm1020, %v949
        %1034 = vst.msk [vmem:[#allocation3 + $0x68] sm:$0xff] %vm1020, %v951
        %1035 = vst.msk [vmem:[#allocation3 + $0x70] sm:$0xff] %vm1020, %v953
        %1036 = vst.msk [vmem:[#allocation3 + $0x78] sm:$0xff] %vm1020, %v955
        %1037 = vst.msk [vmem:[#allocation3 + $0x80] sm:$0xff] %vm1020, %v957
        %1038 = vst.msk [vmem:[#allocation3 + $0x88] sm:$0xff] %vm1020, %v959
        %1039 = vst.msk [vmem:[#allocation3 + $0x90] sm:$0xff] %vm1020, %v961
        %1040 = vst.msk [vmem:[#allocation3 + $0x98] sm:$0xff] %vm1020, %v963
        %1041 = vst.msk [vmem:[#allocation3 + $0xa0] sm:$0xff] %vm1020, %v965
        %1042 = vst.msk [vmem:[#allocation3 + $0xa8] sm:$0xff] %vm1020, %v967
        %1043 = vst.msk [vmem:[#allocation3 + $0xb0] sm:$0xff] %vm1020, %v969
        %1044 = vst.msk [vmem:[#allocation3 + $0xb8] sm:$0xff] %vm1020, %v971
        %1045 = vst.msk [vmem:[#allocation3 + $0xc0] sm:$0xff] %vm1020, %v973
        %1046 = vst.msk [vmem:[#allocation3 + $0xc8] sm:$0xff] %vm1020, %v975
        %1047 = vst.msk [vmem:[#allocation3 + $0xd0] sm:$0xff] %vm1020, %v977
        %1048 = vst.msk [vmem:[#allocation3 + $0xd8] sm:$0xff] %vm1020, %v979
        %1049 = vst.msk [vmem:[#allocation3 + $0xe0] sm:$0xff] %vm1020, %v981
        %1050 = vst.msk [vmem:[#allocation3 + $0xe8] sm:$0xff] %vm1020, %v983
        %1051 = vst.msk [vmem:[#allocation3 + $0xf0] sm:$0xff] %vm1020, %v985
        %1052 = vst.msk [vmem:[#allocation3 + $0xf8] sm:$0xff] %vm1020, %v987
        %v1053 = vld [vmem:[%s570] sm:$0xff]
        %v1054 = vld [vmem:[%s570 + $0x8] sm:$0xff]
        %v1055 = vld [vmem:[%s570 + $0x18] sm:$0xff]
        %v1056 = vld [vmem:[%s570 + $0x20] sm:$0xff]
        %v1057 = vld [vmem:[%s570 + $0x30] sm:$0xff]
        %v1058 = vld [vmem:[%s570 + $0x38] sm:$0xff]
        %v1059 = vld [vmem:[%s570 + $0x48] sm:$0xff]
        %v1060 = vld [vmem:[%s570 + $0x50] sm:$0xff]
        %v1061 = vld [vmem:[%s570 + $0x60] sm:$0xff]
        %v1062 = vld [vmem:[%s570 + $0x68] sm:$0xff]
        %v1063 = vld [vmem:[%s570 + $0x78] sm:$0xff]
        %v1064 = vld [vmem:[%s570 + $0x80] sm:$0xff]
        %v1065 = vld [vmem:[%s570 + $0x90] sm:$0xff]
        %v1066 = vld [vmem:[%s570 + $0x98] sm:$0xff]
        %v1067 = vld [vmem:[%s570 + $0xa8] sm:$0xff]
        %v1068 = vld [vmem:[%s570 + $0xb0] sm:$0xff]
        %v1069 = vld [vmem:[%s570 + $0xc0] sm:$0xff]
        %v1070 = vld [vmem:[%s570 + $0xc8] sm:$0xff]
        %v1071 = vld [vmem:[%s570 + $0xd8] sm:$0xff]
        %v1072 = vld [vmem:[%s570 + $0xe0] sm:$0xff]
        %v1073 = vld [vmem:[%s570 + $0xf0] sm:$0xff]
        %v1074 = vld [vmem:[%s570 + $0xf8] sm:$0xff]
        %v1075 = vld [vmem:[%s570 + $0x108] sm:$0xff]
        %v1076 = vld [vmem:[%s570 + $0x110] sm:$0xff]
        %v1077 = vld [vmem:[%s570 + $0x120] sm:$0xff]
        %v1078 = vld [vmem:[%s570 + $0x128] sm:$0xff]
        %v1079 = vld [vmem:[%s570 + $0x138] sm:$0xff]
        %v1080 = vld [vmem:[%s570 + $0x140] sm:$0xff]
        %v1081 = vld [vmem:[%s570 + $0x150] sm:$0xff]
        %v1082 = vld [vmem:[%s570 + $0x158] sm:$0xff]
        %v1083 = vld [vmem:[%s570 + $0x168] sm:$0xff]
        %v1084 = vld [vmem:[%s570 + $0x170] sm:$0xff]
        %1117 = vrot.lane.b32.xlu0 %v1053, 24
        %v1118 = vpop.permute.xlu0 %1117
        %1119 = vrot.lane.b32.xlu0 %v1054, 24
        %v1120 = vpop.permute.xlu0 %1119
        %1121 = vrot.lane.b32.xlu0 %v1055, 24
        %v1122 = vpop.permute.xlu0 %1121
        %1123 = vrot.lane.b32.xlu0 %v1056, 24
        %v1124 = vpop.permute.xlu0 %1123
        %1125 = vrot.lane.b32.xlu0 %v1057, 24
        %v1126 = vpop.permute.xlu0 %1125
        %1127 = vrot.lane.b32.xlu0 %v1058, 24
        %v1128 = vpop.permute.xlu0 %1127
        %1129 = vrot.lane.b32.xlu0 %v1059, 24
        %v1130 = vpop.permute.xlu0 %1129
        %1131 = vrot.lane.b32.xlu0 %v1060, 24
        %v1132 = vpop.permute.xlu0 %1131
        %1133 = vrot.lane.b32.xlu0 %v1061, 24
        %v1134 = vpop.permute.xlu0 %1133
        %1135 = vrot.lane.b32.xlu0 %v1062, 24
        %v1136 = vpop.permute.xlu0 %1135
        %1137 = vrot.lane.b32.xlu0 %v1063, 24
        %v1138 = vpop.permute.xlu0 %1137
        %1139 = vrot.lane.b32.xlu0 %v1064, 24
        %v1140 = vpop.permute.xlu0 %1139
        %1141 = vrot.lane.b32.xlu0 %v1065, 24
        %v1142 = vpop.permute.xlu0 %1141
        %1143 = vrot.lane.b32.xlu0 %v1066, 24
        %v1144 = vpop.permute.xlu0 %1143
        %1145 = vrot.lane.b32.xlu0 %v1067, 24
        %v1146 = vpop.permute.xlu0 %1145
        %1147 = vrot.lane.b32.xlu0 %v1068, 24
        %v1148 = vpop.permute.xlu0 %1147
        %1149 = vrot.lane.b32.xlu0 %v1069, 24
        %v1150 = vpop.permute.xlu0 %1149
        %1151 = vrot.lane.b32.xlu0 %v1070, 24
        %v1152 = vpop.permute.xlu0 %1151
        %1153 = vrot.lane.b32.xlu0 %v1071, 24
        %v1154 = vpop.permute.xlu0 %1153
        %1155 = vrot.lane.b32.xlu0 %v1072, 24
        %v1156 = vpop.permute.xlu0 %1155
        %1157 = vrot.lane.b32.xlu0 %v1073, 24
        %v1158 = vpop.permute.xlu0 %1157
        %1159 = vrot.lane.b32.xlu0 %v1074, 24
        %v1160 = vpop.permute.xlu0 %1159
        %1161 = vrot.lane.b32.xlu0 %v1075, 24
        %v1162 = vpop.permute.xlu0 %1161
        %1163 = vrot.lane.b32.xlu0 %v1076, 24
        %v1164 = vpop.permute.xlu0 %1163
        %1165 = vrot.lane.b32.xlu0 %v1077, 24
        %v1166 = vpop.permute.xlu0 %1165
        %1167 = vrot.lane.b32.xlu0 %v1078, 24
        %v1168 = vpop.permute.xlu0 %1167
        %1169 = vrot.lane.b32.xlu0 %v1079, 24
        %v1170 = vpop.permute.xlu0 %1169
        %1171 = vrot.lane.b32.xlu0 %v1080, 24
        %v1172 = vpop.permute.xlu0 %1171
        %1173 = vrot.lane.b32.xlu0 %v1081, 24
        %v1174 = vpop.permute.xlu0 %1173
        %1175 = vrot.lane.b32.xlu0 %v1082, 24
        %v1176 = vpop.permute.xlu0 %1175
        %1177 = vrot.lane.b32.xlu0 %v1083, 24
        %v1178 = vpop.permute.xlu0 %1177
        %1179 = vrot.lane.b32.xlu0 %v1084, 24
        %v1180 = vpop.permute.xlu0 %1179
        %vm1213 = vcmask 261312
        %1214 = vst.msk [vmem:[#allocation3] sm:$0xff] %vm1213, %v1118
        %1215 = vst.msk [vmem:[#allocation3 + $0x8] sm:$0xff] %vm1213, %v1120
        %1216 = vst.msk [vmem:[#allocation3 + $0x10] sm:$0xff] %vm1213, %v1122
        %1217 = vst.msk [vmem:[#allocation3 + $0x18] sm:$0xff] %vm1213, %v1124
        %1218 = vst.msk [vmem:[#allocation3 + $0x20] sm:$0xff] %vm1213, %v1126
        %1219 = vst.msk [vmem:[#allocation3 + $0x28] sm:$0xff] %vm1213, %v1128
        %1220 = vst.msk [vmem:[#allocation3 + $0x30] sm:$0xff] %vm1213, %v1130
        %1221 = vst.msk [vmem:[#allocation3 + $0x38] sm:$0xff] %vm1213, %v1132
        %1222 = vst.msk [vmem:[#allocation3 + $0x40] sm:$0xff] %vm1213, %v1134
        %1223 = vst.msk [vmem:[#allocation3 + $0x48] sm:$0xff] %vm1213, %v1136
        %1224 = vst.msk [vmem:[#allocation3 + $0x50] sm:$0xff] %vm1213, %v1138
        %1225 = vst.msk [vmem:[#allocation3 + $0x58] sm:$0xff] %vm1213, %v1140
        %1226 = vst.msk [vmem:[#allocation3 + $0x60] sm:$0xff] %vm1213, %v1142
        %1227 = vst.msk [vmem:[#allocation3 + $0x68] sm:$0xff] %vm1213, %v1144
        %1228 = vst.msk [vmem:[#allocation3 + $0x70] sm:$0xff] %vm1213, %v1146
        %1229 = vst.msk [vmem:[#allocation3 + $0x78] sm:$0xff] %vm1213, %v1148
        %1230 = vst.msk [vmem:[#allocation3 + $0x80] sm:$0xff] %vm1213, %v1150
        %1231 = vst.msk [vmem:[#allocation3 + $0x88] sm:$0xff] %vm1213, %v1152
        %1232 = vst.msk [vmem:[#allocation3 + $0x90] sm:$0xff] %vm1213, %v1154
        %1233 = vst.msk [vmem:[#allocation3 + $0x98] sm:$0xff] %vm1213, %v1156
        %1234 = vst.msk [vmem:[#allocation3 + $0xa0] sm:$0xff] %vm1213, %v1158
        %1235 = vst.msk [vmem:[#allocation3 + $0xa8] sm:$0xff] %vm1213, %v1160
        %1236 = vst.msk [vmem:[#allocation3 + $0xb0] sm:$0xff] %vm1213, %v1162
        %1237 = vst.msk [vmem:[#allocation3 + $0xb8] sm:$0xff] %vm1213, %v1164
        %1238 = vst.msk [vmem:[#allocation3 + $0xc0] sm:$0xff] %vm1213, %v1166
        %1239 = vst.msk [vmem:[#allocation3 + $0xc8] sm:$0xff] %vm1213, %v1168
        %1240 = vst.msk [vmem:[#allocation3 + $0xd0] sm:$0xff] %vm1213, %v1170
        %1241 = vst.msk [vmem:[#allocation3 + $0xd8] sm:$0xff] %vm1213, %v1172
        %1242 = vst.msk [vmem:[#allocation3 + $0xe0] sm:$0xff] %vm1213, %v1174
        %1243 = vst.msk [vmem:[#allocation3 + $0xe8] sm:$0xff] %vm1213, %v1176
        %1244 = vst.msk [vmem:[#allocation3 + $0xf0] sm:$0xff] %vm1213, %v1178
        %1245 = vst.msk [vmem:[#allocation3 + $0xf8] sm:$0xff] %vm1213, %v1180
        %v1246 = vld [vmem:[%s570 + $0x1] sm:$0xff]
        %v1247 = vld [vmem:[%s570 + $0x9] sm:$0xff]
        %v1248 = vld [vmem:[%s570 + $0x19] sm:$0xff]
        %v1249 = vld [vmem:[%s570 + $0x21] sm:$0xff]
        %v1250 = vld [vmem:[%s570 + $0x31] sm:$0xff]
        %v1251 = vld [vmem:[%s570 + $0x39] sm:$0xff]
        %v1252 = vld [vmem:[%s570 + $0x49] sm:$0xff]
        %v1253 = vld [vmem:[%s570 + $0x51] sm:$0xff]
        %v1254 = vld [vmem:[%s570 + $0x61] sm:$0xff]
        %v1255 = vld [vmem:[%s570 + $0x69] sm:$0xff]
        %v1256 = vld [vmem:[%s570 + $0x79] sm:$0xff]
        %v1257 = vld [vmem:[%s570 + $0x81] sm:$0xff]
        %v1258 = vld [vmem:[%s570 + $0x91] sm:$0xff]
        %v1259 = vld [vmem:[%s570 + $0x99] sm:$0xff]
        %v1260 = vld [vmem:[%s570 + $0xa9] sm:$0xff]
        %v1261 = vld [vmem:[%s570 + $0xb1] sm:$0xff]
        %v1262 = vld [vmem:[%s570 + $0xc1] sm:$0xff]
        %v1263 = vld [vmem:[%s570 + $0xc9] sm:$0xff]
        %v1264 = vld [vmem:[%s570 + $0xd9] sm:$0xff]
        %v1265 = vld [vmem:[%s570 + $0xe1] sm:$0xff]
        %v1266 = vld [vmem:[%s570 + $0xf1] sm:$0xff]
        %v1267 = vld [vmem:[%s570 + $0xf9] sm:$0xff]
        %v1268 = vld [vmem:[%s570 + $0x109] sm:$0xff]
        %v1269 = vld [vmem:[%s570 + $0x111] sm:$0xff]
        %v1270 = vld [vmem:[%s570 + $0x121] sm:$0xff]
        %v1271 = vld [vmem:[%s570 + $0x129] sm:$0xff]
        %v1272 = vld [vmem:[%s570 + $0x139] sm:$0xff]
        %v1273 = vld [vmem:[%s570 + $0x141] sm:$0xff]
        %v1274 = vld [vmem:[%s570 + $0x151] sm:$0xff]
        %v1275 = vld [vmem:[%s570 + $0x159] sm:$0xff]
        %v1276 = vld [vmem:[%s570 + $0x169] sm:$0xff]
        %v1277 = vld [vmem:[%s570 + $0x171] sm:$0xff]
        %1310 = vrot.lane.b32.xlu0 %v1246, 32
        %v1311 = vpop.permute.xlu0 %1310
        %1312 = vrot.lane.b32.xlu0 %v1247, 32
        %v1313 = vpop.permute.xlu0 %1312
        %1314 = vrot.lane.b32.xlu0 %v1248, 32
        %v1315 = vpop.permute.xlu0 %1314
        %1316 = vrot.lane.b32.xlu0 %v1249, 32
        %v1317 = vpop.permute.xlu0 %1316
        %1318 = vrot.lane.b32.xlu0 %v1250, 32
        %v1319 = vpop.permute.xlu0 %1318
        %1320 = vrot.lane.b32.xlu0 %v1251, 32
        %v1321 = vpop.permute.xlu0 %1320
        %1322 = vrot.lane.b32.xlu0 %v1252, 32
        %v1323 = vpop.permute.xlu0 %1322
        %1324 = vrot.lane.b32.xlu0 %v1253, 32
        %v1325 = vpop.permute.xlu0 %1324
        %1326 = vrot.lane.b32.xlu0 %v1254, 32
        %v1327 = vpop.permute.xlu0 %1326
        %1328 = vrot.lane.b32.xlu0 %v1255, 32
        %v1329 = vpop.permute.xlu0 %1328
        %1330 = vrot.lane.b32.xlu0 %v1256, 32
        %v1331 = vpop.permute.xlu0 %1330
        %1332 = vrot.lane.b32.xlu0 %v1257, 32
        %v1333 = vpop.permute.xlu0 %1332
        %1334 = vrot.lane.b32.xlu0 %v1258, 32
        %v1335 = vpop.permute.xlu0 %1334
        %1336 = vrot.lane.b32.xlu0 %v1259, 32
        %v1337 = vpop.permute.xlu0 %1336
        %1338 = vrot.lane.b32.xlu0 %v1260, 32
        %v1339 = vpop.permute.xlu0 %1338
        %1340 = vrot.lane.b32.xlu0 %v1261, 32
        %v1341 = vpop.permute.xlu0 %1340
        %1342 = vrot.lane.b32.xlu0 %v1262, 32
        %v1343 = vpop.permute.xlu0 %1342
        %1344 = vrot.lane.b32.xlu0 %v1263, 32
        %v1345 = vpop.permute.xlu0 %1344
        %1346 = vrot.lane.b32.xlu0 %v1264, 32
        %v1347 = vpop.permute.xlu0 %1346
        %1348 = vrot.lane.b32.xlu0 %v1265, 32
        %v1349 = vpop.permute.xlu0 %1348
        %1350 = vrot.lane.b32.xlu0 %v1266, 32
        %v1351 = vpop.permute.xlu0 %1350
        %1352 = vrot.lane.b32.xlu0 %v1267, 32
        %v1353 = vpop.permute.xlu0 %1352
        %1354 = vrot.lane.b32.xlu0 %v1268, 32
        %v1355 = vpop.permute.xlu0 %1354
        %1356 = vrot.lane.b32.xlu0 %v1269, 32
        %v1357 = vpop.permute.xlu0 %1356
        %1358 = vrot.lane.b32.xlu0 %v1270, 32
        %v1359 = vpop.permute.xlu0 %1358
        %1360 = vrot.lane.b32.xlu0 %v1271, 32
        %v1361 = vpop.permute.xlu0 %1360
        %1362 = vrot.lane.b32.xlu0 %v1272, 32
        %v1363 = vpop.permute.xlu0 %1362
        %1364 = vrot.lane.b32.xlu0 %v1273, 32
        %v1365 = vpop.permute.xlu0 %1364
        %1366 = vrot.lane.b32.xlu0 %v1274, 32
        %v1367 = vpop.permute.xlu0 %1366
        %1368 = vrot.lane.b32.xlu0 %v1275, 32
        %v1369 = vpop.permute.xlu0 %1368
        %1370 = vrot.lane.b32.xlu0 %v1276, 32
        %v1371 = vpop.permute.xlu0 %1370
        %1372 = vrot.lane.b32.xlu0 %v1277, 32
        %v1373 = vpop.permute.xlu0 %1372
        %vm1406 = vcmask 326912
        %1407 = vst.msk [vmem:[#allocation3] sm:$0xff] %vm1406, %v1311
        %1408 = vst.msk [vmem:[#allocation3 + $0x8] sm:$0xff] %vm1406, %v1313
        %1409 = vst.msk [vmem:[#allocation3 + $0x10] sm:$0xff] %vm1406, %v1315
        %1410 = vst.msk [vmem:[#allocation3 + $0x18] sm:$0xff] %vm1406, %v1317
        %1411 = vst.msk [vmem:[#allocation3 + $0x20] sm:$0xff] %vm1406, %v1319
        %1412 = vst.msk [vmem:[#allocation3 + $0x28] sm:$0xff] %vm1406, %v1321
        %1413 = vst.msk [vmem:[#allocation3 + $0x30] sm:$0xff] %vm1406, %v1323
        %1414 = vst.msk [vmem:[#allocation3 + $0x38] sm:$0xff] %vm1406, %v1325
        %1415 = vst.msk [vmem:[#allocation3 + $0x40] sm:$0xff] %vm1406, %v1327
        %1416 = vst.msk [vmem:[#allocation3 + $0x48] sm:$0xff] %vm1406, %v1329
        %1417 = vst.msk [vmem:[#allocation3 + $0x50] sm:$0xff] %vm1406, %v1331
        %1418 = vst.msk [vmem:[#allocation3 + $0x58] sm:$0xff] %vm1406, %v1333
        %1419 = vst.msk [vmem:[#allocation3 + $0x60] sm:$0xff] %vm1406, %v1335
        %1420 = vst.msk [vmem:[#allocation3 + $0x68] sm:$0xff] %vm1406, %v1337
        %1421 = vst.msk [vmem:[#allocation3 + $0x70] sm:$0xff] %vm1406, %v1339
        %1422 = vst.msk [vmem:[#allocation3 + $0x78] sm:$0xff] %vm1406, %v1341
        %1423 = vst.msk [vmem:[#allocation3 + $0x80] sm:$0xff] %vm1406, %v1343
        %1424 = vst.msk [vmem:[#allocation3 + $0x88] sm:$0xff] %vm1406, %v1345
        %1425 = vst.msk [vmem:[#allocation3 + $0x90] sm:$0xff] %vm1406, %v1347
        %1426 = vst.msk [vmem:[#allocation3 + $0x98] sm:$0xff] %vm1406, %v1349
        %1427 = vst.msk [vmem:[#allocation3 + $0xa0] sm:$0xff] %vm1406, %v1351
        %1428 = vst.msk [vmem:[#allocation3 + $0xa8] sm:$0xff] %vm1406, %v1353
        %1429 = vst.msk [vmem:[#allocation3 + $0xb0] sm:$0xff] %vm1406, %v1355
        %1430 = vst.msk [vmem:[#allocation3 + $0xb8] sm:$0xff] %vm1406, %v1357
        %1431 = vst.msk [vmem:[#allocation3 + $0xc0] sm:$0xff] %vm1406, %v1359
        %1432 = vst.msk [vmem:[#allocation3 + $0xc8] sm:$0xff] %vm1406, %v1361
        %1433 = vst.msk [vmem:[#allocation3 + $0xd0] sm:$0xff] %vm1406, %v1363
        %1434 = vst.msk [vmem:[#allocation3 + $0xd8] sm:$0xff] %vm1406, %v1365
        %1435 = vst.msk [vmem:[#allocation3 + $0xe0] sm:$0xff] %vm1406, %v1367
        %1436 = vst.msk [vmem:[#allocation3 + $0xe8] sm:$0xff] %vm1406, %v1369
        %1437 = vst.msk [vmem:[#allocation3 + $0xf0] sm:$0xff] %vm1406, %v1371
        %1438 = vst.msk [vmem:[#allocation3 + $0xf8] sm:$0xff] %vm1406, %v1373
        %v1439 = vld [vmem:[%s570 + $0x2] sm:$0xff]
        %v1440 = vld [vmem:[%s570 + $0xa] sm:$0xff]
        %v1441 = vld [vmem:[%s570 + $0x1a] sm:$0xff]
        %v1442 = vld [vmem:[%s570 + $0x22] sm:$0xff]
        %v1443 = vld [vmem:[%s570 + $0x32] sm:$0xff]
        %v1444 = vld [vmem:[%s570 + $0x3a] sm:$0xff]
        %v1445 = vld [vmem:[%s570 + $0x4a] sm:$0xff]
        %v1446 = vld [vmem:[%s570 + $0x52] sm:$0xff]
        %v1447 = vld [vmem:[%s570 + $0x62] sm:$0xff]
        %v1448 = vld [vmem:[%s570 + $0x6a] sm:$0xff]
        %v1449 = vld [vmem:[%s570 + $0x7a] sm:$0xff]
        %v1450 = vld [vmem:[%s570 + $0x82] sm:$0xff]
        %v1451 = vld [vmem:[%s570 + $0x92] sm:$0xff]
        %v1452 = vld [vmem:[%s570 + $0x9a] sm:$0xff]
        %v1453 = vld [vmem:[%s570 + $0xaa] sm:$0xff]
        %v1454 = vld [vmem:[%s570 + $0xb2] sm:$0xff]
        %v1455 = vld [vmem:[%s570 + $0xc2] sm:$0xff]
        %v1456 = vld [vmem:[%s570 + $0xca] sm:$0xff]
        %v1457 = vld [vmem:[%s570 + $0xda] sm:$0xff]
        %v1458 = vld [vmem:[%s570 + $0xe2] sm:$0xff]
        %v1459 = vld [vmem:[%s570 + $0xf2] sm:$0xff]
        %v1460 = vld [vmem:[%s570 + $0xfa] sm:$0xff]
        %v1461 = vld [vmem:[%s570 + $0x10a] sm:$0xff]
        %v1462 = vld [vmem:[%s570 + $0x112] sm:$0xff]
        %v1463 = vld [vmem:[%s570 + $0x122] sm:$0xff]
        %v1464 = vld [vmem:[%s570 + $0x12a] sm:$0xff]
        %v1465 = vld [vmem:[%s570 + $0x13a] sm:$0xff]
        %v1466 = vld [vmem:[%s570 + $0x142] sm:$0xff]
        %v1467 = vld [vmem:[%s570 + $0x152] sm:$0xff]
        %v1468 = vld [vmem:[%s570 + $0x15a] sm:$0xff]
        %v1469 = vld [vmem:[%s570 + $0x16a] sm:$0xff]
        %v1470 = vld [vmem:[%s570 + $0x172] sm:$0xff]
        %1503 = vrot.lane.b32.xlu0 %v1439, 40
        %v1504 = vpop.permute.xlu0 %1503
        %1505 = vrot.lane.b32.xlu0 %v1440, 40
        %v1506 = vpop.permute.xlu0 %1505
        %1507 = vrot.lane.b32.xlu0 %v1441, 40
        %v1508 = vpop.permute.xlu0 %1507
        %1509 = vrot.lane.b32.xlu0 %v1442, 40
        %v1510 = vpop.permute.xlu0 %1509
        %1511 = vrot.lane.b32.xlu0 %v1443, 40
        %v1512 = vpop.permute.xlu0 %1511
        %1513 = vrot.lane.b32.xlu0 %v1444, 40
        %v1514 = vpop.permute.xlu0 %1513
        %1515 = vrot.lane.b32.xlu0 %v1445, 40
        %v1516 = vpop.permute.xlu0 %1515
        %1517 = vrot.lane.b32.xlu0 %v1446, 40
        %v1518 = vpop.permute.xlu0 %1517
        %1519 = vrot.lane.b32.xlu0 %v1447, 40
        %v1520 = vpop.permute.xlu0 %1519
        %1521 = vrot.lane.b32.xlu0 %v1448, 40
        %v1522 = vpop.permute.xlu0 %1521
        %1523 = vrot.lane.b32.xlu0 %v1449, 40
        %v1524 = vpop.permute.xlu0 %1523
        %1525 = vrot.lane.b32.xlu0 %v1450, 40
        %v1526 = vpop.permute.xlu0 %1525
        %1527 = vrot.lane.b32.xlu0 %v1451, 40
        %v1528 = vpop.permute.xlu0 %1527
        %1529 = vrot.lane.b32.xlu0 %v1452, 40
        %v1530 = vpop.permute.xlu0 %1529
        %1531 = vrot.lane.b32.xlu0 %v1453, 40
        %v1532 = vpop.permute.xlu0 %1531
        %1533 = vrot.lane.b32.xlu0 %v1454, 40
        %v1534 = vpop.permute.xlu0 %1533
        %1535 = vrot.lane.b32.xlu0 %v1455, 40
        %v1536 = vpop.permute.xlu0 %1535
        %1537 = vrot.lane.b32.xlu0 %v1456, 40
        %v1538 = vpop.permute.xlu0 %1537
        %1539 = vrot.lane.b32.xlu0 %v1457, 40
        %v1540 = vpop.permute.xlu0 %1539
        %1541 = vrot.lane.b32.xlu0 %v1458, 40
        %v1542 = vpop.permute.xlu0 %1541
        %1543 = vrot.lane.b32.xlu0 %v1459, 40
        %v1544 = vpop.permute.xlu0 %1543
        %1545 = vrot.lane.b32.xlu0 %v1460, 40
        %v1546 = vpop.permute.xlu0 %1545
        %1547 = vrot.lane.b32.xlu0 %v1461, 40
        %v1548 = vpop.permute.xlu0 %1547
        %1549 = vrot.lane.b32.xlu0 %v1462, 40
        %v1550 = vpop.permute.xlu0 %1549
        %1551 = vrot.lane.b32.xlu0 %v1463, 40
        %v1552 = vpop.permute.xlu0 %1551
        %1553 = vrot.lane.b32.xlu0 %v1464, 40
        %v1554 = vpop.permute.xlu0 %1553
        %1555 = vrot.lane.b32.xlu0 %v1465, 40
        %v1556 = vpop.permute.xlu0 %1555
        %1557 = vrot.lane.b32.xlu0 %v1466, 40
        %v1558 = vpop.permute.xlu0 %1557
        %1559 = vrot.lane.b32.xlu0 %v1467, 40
        %v1560 = vpop.permute.xlu0 %1559
        %1561 = vrot.lane.b32.xlu0 %v1468, 40
        %v1562 = vpop.permute.xlu0 %1561
        %1563 = vrot.lane.b32.xlu0 %v1469, 40
        %v1564 = vpop.permute.xlu0 %1563
        %1565 = vrot.lane.b32.xlu0 %v1470, 40
        %v1566 = vpop.permute.xlu0 %1565
        %vm1599 = vcmask 392512
        %1600 = vst.msk [vmem:[#allocation3] sm:$0xff] %vm1599, %v1504
        %1601 = vst.msk [vmem:[#allocation3 + $0x8] sm:$0xff] %vm1599, %v1506
        %1602 = vst.msk [vmem:[#allocation3 + $0x10] sm:$0xff] %vm1599, %v1508
        %1603 = vst.msk [vmem:[#allocation3 + $0x18] sm:$0xff] %vm1599, %v1510
        %1604 = vst.msk [vmem:[#allocation3 + $0x20] sm:$0xff] %vm1599, %v1512
        %1605 = vst.msk [vmem:[#allocation3 + $0x28] sm:$0xff] %vm1599, %v1514
        %1606 = vst.msk [vmem:[#allocation3 + $0x30] sm:$0xff] %vm1599, %v1516
        %1607 = vst.msk [vmem:[#allocation3 + $0x38] sm:$0xff] %vm1599, %v1518
        %1608 = vst.msk [vmem:[#allocation3 + $0x40] sm:$0xff] %vm1599, %v1520
        %1609 = vst.msk [vmem:[#allocation3 + $0x48] sm:$0xff] %vm1599, %v1522
        %1610 = vst.msk [vmem:[#allocation3 + $0x50] sm:$0xff] %vm1599, %v1524
        %1611 = vst.msk [vmem:[#allocation3 + $0x58] sm:$0xff] %vm1599, %v1526
        %1612 = vst.msk [vmem:[#allocation3 + $0x60] sm:$0xff] %vm1599, %v1528
        %1613 = vst.msk [vmem:[#allocation3 + $0x68] sm:$0xff] %vm1599, %v1530
        %1614 = vst.msk [vmem:[#allocation3 + $0x70] sm:$0xff] %vm1599, %v1532
        %1615 = vst.msk [vmem:[#allocation3 + $0x78] sm:$0xff] %vm1599, %v1534
        %1616 = vst.msk [vmem:[#allocation3 + $0x80] sm:$0xff] %vm1599, %v1536
        %1617 = vst.msk [vmem:[#allocation3 + $0x88] sm:$0xff] %vm1599, %v1538
        %1618 = vst.msk [vmem:[#allocation3 + $0x90] sm:$0xff] %vm1599, %v1540
        %1619 = vst.msk [vmem:[#allocation3 + $0x98] sm:$0xff] %vm1599, %v1542
        %1620 = vst.msk [vmem:[#allocation3 + $0xa0] sm:$0xff] %vm1599, %v1544
        %1621 = vst.msk [vmem:[#allocation3 + $0xa8] sm:$0xff] %vm1599, %v1546
        %1622 = vst.msk [vmem:[#allocation3 + $0xb0] sm:$0xff] %vm1599, %v1548
        %1623 = vst.msk [vmem:[#allocation3 + $0xb8] sm:$0xff] %vm1599, %v1550
        %1624 = vst.msk [vmem:[#allocation3 + $0xc0] sm:$0xff] %vm1599, %v1552
        %1625 = vst.msk [vmem:[#allocation3 + $0xc8] sm:$0xff] %vm1599, %v1554
        %1626 = vst.msk [vmem:[#allocation3 + $0xd0] sm:$0xff] %vm1599, %v1556
        %1627 = vst.msk [vmem:[#allocation3 + $0xd8] sm:$0xff] %vm1599, %v1558
        %1628 = vst.msk [vmem:[#allocation3 + $0xe0] sm:$0xff] %vm1599, %v1560
        %1629 = vst.msk [vmem:[#allocation3 + $0xe8] sm:$0xff] %vm1599, %v1562
        %1630 = vst.msk [vmem:[#allocation3 + $0xf0] sm:$0xff] %vm1599, %v1564
        %1631 = vst.msk [vmem:[#allocation3 + $0xf8] sm:$0xff] %vm1599, %v1566
        %s1632 = scalar_lea.vmem [#allocation2], 48
        %v1633 = vld [vmem:[%s1632] sm:$0xff]
        %v1634 = vld [vmem:[%s1632 + $0x8] sm:$0xff]
        %v1635 = vld [vmem:[%s1632 + $0x18] sm:$0xff]
        %v1636 = vld [vmem:[%s1632 + $0x20] sm:$0xff]
        %v1637 = vld [vmem:[%s1632 + $0x30] sm:$0xff]
        %v1638 = vld [vmem:[%s1632 + $0x38] sm:$0xff]
        %v1639 = vld [vmem:[%s1632 + $0x48] sm:$0xff]
        %v1640 = vld [vmem:[%s1632 + $0x50] sm:$0xff]
        %v1641 = vld [vmem:[%s1632 + $0x60] sm:$0xff]
        %v1642 = vld [vmem:[%s1632 + $0x68] sm:$0xff]
        %v1643 = vld [vmem:[%s1632 + $0x78] sm:$0xff]
        %v1644 = vld [vmem:[%s1632 + $0x80] sm:$0xff]
        %v1645 = vld [vmem:[%s1632 + $0x90] sm:$0xff]
        %v1646 = vld [vmem:[%s1632 + $0x98] sm:$0xff]
        %v1647 = vld [vmem:[%s1632 + $0xa8] sm:$0xff]
        %v1648 = vld [vmem:[%s1632 + $0xb0] sm:$0xff]
        %v1649 = vld [vmem:[%s1632 + $0xc0] sm:$0xff]
        %v1650 = vld [vmem:[%s1632 + $0xc8] sm:$0xff]
        %v1651 = vld [vmem:[%s1632 + $0xd8] sm:$0xff]
        %v1652 = vld [vmem:[%s1632 + $0xe0] sm:$0xff]
        %v1653 = vld [vmem:[%s1632 + $0xf0] sm:$0xff]
        %v1654 = vld [vmem:[%s1632 + $0xf8] sm:$0xff]
        %v1655 = vld [vmem:[%s1632 + $0x108] sm:$0xff]
        %v1656 = vld [vmem:[%s1632 + $0x110] sm:$0xff]
        %v1657 = vld [vmem:[%s1632 + $0x120] sm:$0xff]
        %v1658 = vld [vmem:[%s1632 + $0x128] sm:$0xff]
        %v1659 = vld [vmem:[%s1632 + $0x138] sm:$0xff]
        %v1660 = vld [vmem:[%s1632 + $0x140] sm:$0xff]
        %v1661 = vld [vmem:[%s1632 + $0x150] sm:$0xff]
        %v1662 = vld [vmem:[%s1632 + $0x158] sm:$0xff]
        %v1663 = vld [vmem:[%s1632 + $0x168] sm:$0xff]
        %v1664 = vld [vmem:[%s1632 + $0x170] sm:$0xff]
        %1697 = vrot.lane.b32.xlu0 %v1633, 48
        %v1698 = vpop.permute.xlu0 %1697
        %1699 = vrot.lane.b32.xlu0 %v1634, 48
        %v1700 = vpop.permute.xlu0 %1699
        %1701 = vrot.lane.b32.xlu0 %v1635, 48
        %v1702 = vpop.permute.xlu0 %1701
        %1703 = vrot.lane.b32.xlu0 %v1636, 48
        %v1704 = vpop.permute.xlu0 %1703
        %1705 = vrot.lane.b32.xlu0 %v1637, 48
        %v1706 = vpop.permute.xlu0 %1705
        %1707 = vrot.lane.b32.xlu0 %v1638, 48
        %v1708 = vpop.permute.xlu0 %1707
        %1709 = vrot.lane.b32.xlu0 %v1639, 48
        %v1710 = vpop.permute.xlu0 %1709
        %1711 = vrot.lane.b32.xlu0 %v1640, 48
        %v1712 = vpop.permute.xlu0 %1711
        %1713 = vrot.lane.b32.xlu0 %v1641, 48
        %v1714 = vpop.permute.xlu0 %1713
        %1715 = vrot.lane.b32.xlu0 %v1642, 48
        %v1716 = vpop.permute.xlu0 %1715
        %1717 = vrot.lane.b32.xlu0 %v1643, 48
        %v1718 = vpop.permute.xlu0 %1717
        %1719 = vrot.lane.b32.xlu0 %v1644, 48
        %v1720 = vpop.permute.xlu0 %1719
        %1721 = vrot.lane.b32.xlu0 %v1645, 48
        %v1722 = vpop.permute.xlu0 %1721
        %1723 = vrot.lane.b32.xlu0 %v1646, 48
        %v1724 = vpop.permute.xlu0 %1723
        %1725 = vrot.lane.b32.xlu0 %v1647, 48
        %v1726 = vpop.permute.xlu0 %1725
        %1727 = vrot.lane.b32.xlu0 %v1648, 48
        %v1728 = vpop.permute.xlu0 %1727
        %1729 = vrot.lane.b32.xlu0 %v1649, 48
        %v1730 = vpop.permute.xlu0 %1729
        %1731 = vrot.lane.b32.xlu0 %v1650, 48
        %v1732 = vpop.permute.xlu0 %1731
        %1733 = vrot.lane.b32.xlu0 %v1651, 48
        %v1734 = vpop.permute.xlu0 %1733
        %1735 = vrot.lane.b32.xlu0 %v1652, 48
        %v1736 = vpop.permute.xlu0 %1735
        %1737 = vrot.lane.b32.xlu0 %v1653, 48
        %v1738 = vpop.permute.xlu0 %1737
        %1739 = vrot.lane.b32.xlu0 %v1654, 48
        %v1740 = vpop.permute.xlu0 %1739
        %1741 = vrot.lane.b32.xlu0 %v1655, 48
        %v1742 = vpop.permute.xlu0 %1741
        %1743 = vrot.lane.b32.xlu0 %v1656, 48
        %v1744 = vpop.permute.xlu0 %1743
        %1745 = vrot.lane.b32.xlu0 %v1657, 48
        %v1746 = vpop.permute.xlu0 %1745
        %1747 = vrot.lane.b32.xlu0 %v1658, 48
        %v1748 = vpop.permute.xlu0 %1747
        %1749 = vrot.lane.b32.xlu0 %v1659, 48
        %v1750 = vpop.permute.xlu0 %1749
        %1751 = vrot.lane.b32.xlu0 %v1660, 48
        %v1752 = vpop.permute.xlu0 %1751
        %1753 = vrot.lane.b32.xlu0 %v1661, 48
        %v1754 = vpop.permute.xlu0 %1753
        %1755 = vrot.lane.b32.xlu0 %v1662, 48
        %v1756 = vpop.permute.xlu0 %1755
        %1757 = vrot.lane.b32.xlu0 %v1663, 48
        %v1758 = vpop.permute.xlu0 %1757
        %1759 = vrot.lane.b32.xlu0 %v1664, 48
        %v1760 = vpop.permute.xlu0 %1759
        %vm1793 = vcmask 458112
        %1794 = vst.msk [vmem:[#allocation3] sm:$0xff] %vm1793, %v1698
        %1795 = vst.msk [vmem:[#allocation3 + $0x8] sm:$0xff] %vm1793, %v1700
        %1796 = vst.msk [vmem:[#allocation3 + $0x10] sm:$0xff] %vm1793, %v1702
        %1797 = vst.msk [vmem:[#allocation3 + $0x18] sm:$0xff] %vm1793, %v1704
        %1798 = vst.msk [vmem:[#allocation3 + $0x20] sm:$0xff] %vm1793, %v1706
        %1799 = vst.msk [vmem:[#allocation3 + $0x28] sm:$0xff] %vm1793, %v1708
        %1800 = vst.msk [vmem:[#allocation3 + $0x30] sm:$0xff] %vm1793, %v1710
        %1801 = vst.msk [vmem:[#allocation3 + $0x38] sm:$0xff] %vm1793, %v1712
        %1802 = vst.msk [vmem:[#allocation3 + $0x40] sm:$0xff] %vm1793, %v1714
        %1803 = vst.msk [vmem:[#allocation3 + $0x48] sm:$0xff] %vm1793, %v1716
        %1804 = vst.msk [vmem:[#allocation3 + $0x50] sm:$0xff] %vm1793, %v1718
        %1805 = vst.msk [vmem:[#allocation3 + $0x58] sm:$0xff] %vm1793, %v1720
        %1806 = vst.msk [vmem:[#allocation3 + $0x60] sm:$0xff] %vm1793, %v1722
        %1807 = vst.msk [vmem:[#allocation3 + $0x68] sm:$0xff] %vm1793, %v1724
        %1808 = vst.msk [vmem:[#allocation3 + $0x70] sm:$0xff] %vm1793, %v1726
        %1809 = vst.msk [vmem:[#allocation3 + $0x78] sm:$0xff] %vm1793, %v1728
        %1810 = vst.msk [vmem:[#allocation3 + $0x80] sm:$0xff] %vm1793, %v1730
        %1811 = vst.msk [vmem:[#allocation3 + $0x88] sm:$0xff] %vm1793, %v1732
        %1812 = vst.msk [vmem:[#allocation3 + $0x90] sm:$0xff] %vm1793, %v1734
        %1813 = vst.msk [vmem:[#allocation3 + $0x98] sm:$0xff] %vm1793, %v1736
        %1814 = vst.msk [vmem:[#allocation3 + $0xa0] sm:$0xff] %vm1793, %v1738
        %1815 = vst.msk [vmem:[#allocation3 + $0xa8] sm:$0xff] %vm1793, %v1740
        %1816 = vst.msk [vmem:[#allocation3 + $0xb0] sm:$0xff] %vm1793, %v1742
        %1817 = vst.msk [vmem:[#allocation3 + $0xb8] sm:$0xff] %vm1793, %v1744
        %1818 = vst.msk [vmem:[#allocation3 + $0xc0] sm:$0xff] %vm1793, %v1746
        %1819 = vst.msk [vmem:[#allocation3 + $0xc8] sm:$0xff] %vm1793, %v1748
        %1820 = vst.msk [vmem:[#allocation3 + $0xd0] sm:$0xff] %vm1793, %v1750
        %1821 = vst.msk [vmem:[#allocation3 + $0xd8] sm:$0xff] %vm1793, %v1752
        %1822 = vst.msk [vmem:[#allocation3 + $0xe0] sm:$0xff] %vm1793, %v1754
        %1823 = vst.msk [vmem:[#allocation3 + $0xe8] sm:$0xff] %vm1793, %v1756
        %1824 = vst.msk [vmem:[#allocation3 + $0xf0] sm:$0xff] %vm1793, %v1758
        %1825 = vst.msk [vmem:[#allocation3 + $0xf8] sm:$0xff] %vm1793, %v1760
        %v1826 = vld [vmem:[%s1632 + $0x1] sm:$0xff]
        %v1827 = vld [vmem:[%s1632 + $0x9] sm:$0xff]
        %v1828 = vld [vmem:[%s1632 + $0x19] sm:$0xff]
        %v1829 = vld [vmem:[%s1632 + $0x21] sm:$0xff]
        %v1830 = vld [vmem:[%s1632 + $0x31] sm:$0xff]
        %v1831 = vld [vmem:[%s1632 + $0x39] sm:$0xff]
        %v1832 = vld [vmem:[%s1632 + $0x49] sm:$0xff]
        %v1833 = vld [vmem:[%s1632 + $0x51] sm:$0xff]
        %v1834 = vld [vmem:[%s1632 + $0x61] sm:$0xff]
        %v1835 = vld [vmem:[%s1632 + $0x69] sm:$0xff]
        %v1836 = vld [vmem:[%s1632 + $0x79] sm:$0xff]
        %v1837 = vld [vmem:[%s1632 + $0x81] sm:$0xff]
        %v1838 = vld [vmem:[%s1632 + $0x91] sm:$0xff]
        %v1839 = vld [vmem:[%s1632 + $0x99] sm:$0xff]
        %v1840 = vld [vmem:[%s1632 + $0xa9] sm:$0xff]
        %v1841 = vld [vmem:[%s1632 + $0xb1] sm:$0xff]
        %v1842 = vld [vmem:[%s1632 + $0xc1] sm:$0xff]
        %v1843 = vld [vmem:[%s1632 + $0xc9] sm:$0xff]
        %v1844 = vld [vmem:[%s1632 + $0xd9] sm:$0xff]
        %v1845 = vld [vmem:[%s1632 + $0xe1] sm:$0xff]
        %v1846 = vld [vmem:[%s1632 + $0xf1] sm:$0xff]
        %v1847 = vld [vmem:[%s1632 + $0xf9] sm:$0xff]
        %v1848 = vld [vmem:[%s1632 + $0x109] sm:$0xff]
        %v1849 = vld [vmem:[%s1632 + $0x111] sm:$0xff]
        %v1850 = vld [vmem:[%s1632 + $0x121] sm:$0xff]
        %v1851 = vld [vmem:[%s1632 + $0x129] sm:$0xff]
        %v1852 = vld [vmem:[%s1632 + $0x139] sm:$0xff]
        %v1853 = vld [vmem:[%s1632 + $0x141] sm:$0xff]
        %v1854 = vld [vmem:[%s1632 + $0x151] sm:$0xff]
        %v1855 = vld [vmem:[%s1632 + $0x159] sm:$0xff]
        %v1856 = vld [vmem:[%s1632 + $0x169] sm:$0xff]
        %v1857 = vld [vmem:[%s1632 + $0x171] sm:$0xff]
        %1890 = vrot.lane.b32.xlu0 %v1826, 56
        %v1891 = vpop.permute.xlu0 %1890
        %1892 = vrot.lane.b32.xlu0 %v1827, 56
        %v1893 = vpop.permute.xlu0 %1892
        %1894 = vrot.lane.b32.xlu0 %v1828, 56
        %v1895 = vpop.permute.xlu0 %1894
        %1896 = vrot.lane.b32.xlu0 %v1829, 56
        %v1897 = vpop.permute.xlu0 %1896
        %1898 = vrot.lane.b32.xlu0 %v1830, 56
        %v1899 = vpop.permute.xlu0 %1898
        %1900 = vrot.lane.b32.xlu0 %v1831, 56
        %v1901 = vpop.permute.xlu0 %1900
        %1902 = vrot.lane.b32.xlu0 %v1832, 56
        %v1903 = vpop.permute.xlu0 %1902
        %1904 = vrot.lane.b32.xlu0 %v1833, 56
        %v1905 = vpop.permute.xlu0 %1904
        %1906 = vrot.lane.b32.xlu0 %v1834, 56
        %v1907 = vpop.permute.xlu0 %1906
        %1908 = vrot.lane.b32.xlu0 %v1835, 56
        %v1909 = vpop.permute.xlu0 %1908
        %1910 = vrot.lane.b32.xlu0 %v1836, 56
        %v1911 = vpop.permute.xlu0 %1910
        %1912 = vrot.lane.b32.xlu0 %v1837, 56
        %v1913 = vpop.permute.xlu0 %1912
        %1914 = vrot.lane.b32.xlu0 %v1838, 56
        %v1915 = vpop.permute.xlu0 %1914
        %1916 = vrot.lane.b32.xlu0 %v1839, 56
        %v1917 = vpop.permute.xlu0 %1916
        %1918 = vrot.lane.b32.xlu0 %v1840, 56
        %v1919 = vpop.permute.xlu0 %1918
        %1920 = vrot.lane.b32.xlu0 %v1841, 56
        %v1921 = vpop.permute.xlu0 %1920
        %1922 = vrot.lane.b32.xlu0 %v1842, 56
        %v1923 = vpop.permute.xlu0 %1922
        %1924 = vrot.lane.b32.xlu0 %v1843, 56
        %v1925 = vpop.permute.xlu0 %1924
        %1926 = vrot.lane.b32.xlu0 %v1844, 56
        %v1927 = vpop.permute.xlu0 %1926
        %1928 = vrot.lane.b32.xlu0 %v1845, 56
        %v1929 = vpop.permute.xlu0 %1928
        %1930 = vrot.lane.b32.xlu0 %v1846, 56
        %v1931 = vpop.permute.xlu0 %1930
        %1932 = vrot.lane.b32.xlu0 %v1847, 56
        %v1933 = vpop.permute.xlu0 %1932
        %1934 = vrot.lane.b32.xlu0 %v1848, 56
        %v1935 = vpop.permute.xlu0 %1934
        %1936 = vrot.lane.b32.xlu0 %v1849, 56
        %v1937 = vpop.permute.xlu0 %1936
        %1938 = vrot.lane.b32.xlu0 %v1850, 56
        %v1939 = vpop.permute.xlu0 %1938
        %1940 = vrot.lane.b32.xlu0 %v1851, 56
        %v1941 = vpop.permute.xlu0 %1940
        %1942 = vrot.lane.b32.xlu0 %v1852, 56
        %v1943 = vpop.permute.xlu0 %1942
        %1944 = vrot.lane.b32.xlu0 %v1853, 56
        %v1945 = vpop.permute.xlu0 %1944
        %1946 = vrot.lane.b32.xlu0 %v1854, 56
        %v1947 = vpop.permute.xlu0 %1946
        %1948 = vrot.lane.b32.xlu0 %v1855, 56
        %v1949 = vpop.permute.xlu0 %1948
        %1950 = vrot.lane.b32.xlu0 %v1856, 56
        %v1951 = vpop.permute.xlu0 %1950
        %1952 = vrot.lane.b32.xlu0 %v1857, 56
        %v1953 = vpop.permute.xlu0 %1952
        %vm1986 = vcmask 523712
        %1987 = vst.msk [vmem:[#allocation3] sm:$0xff] %vm1986, %v1891
        %1988 = vst.msk [vmem:[#allocation3 + $0x8] sm:$0xff] %vm1986, %v1893
        %1989 = vst.msk [vmem:[#allocation3 + $0x10] sm:$0xff] %vm1986, %v1895
        %1990 = vst.msk [vmem:[#allocation3 + $0x18] sm:$0xff] %vm1986, %v1897
        %1991 = vst.msk [vmem:[#allocation3 + $0x20] sm:$0xff] %vm1986, %v1899
        %1992 = vst.msk [vmem:[#allocation3 + $0x28] sm:$0xff] %vm1986, %v1901
        %1993 = vst.msk [vmem:[#allocation3 + $0x30] sm:$0xff] %vm1986, %v1903
        %1994 = vst.msk [vmem:[#allocation3 + $0x38] sm:$0xff] %vm1986, %v1905
        %1995 = vst.msk [vmem:[#allocation3 + $0x40] sm:$0xff] %vm1986, %v1907
        %1996 = vst.msk [vmem:[#allocation3 + $0x48] sm:$0xff] %vm1986, %v1909
        %1997 = vst.msk [vmem:[#allocation3 + $0x50] sm:$0xff] %vm1986, %v1911
        %1998 = vst.msk [vmem:[#allocation3 + $0x58] sm:$0xff] %vm1986, %v1913
        %1999 = vst.msk [vmem:[#allocation3 + $0x60] sm:$0xff] %vm1986, %v1915
        %2000 = vst.msk [vmem:[#allocation3 + $0x68] sm:$0xff] %vm1986, %v1917
        %2001 = vst.msk [vmem:[#allocation3 + $0x70] sm:$0xff] %vm1986, %v1919
        %2002 = vst.msk [vmem:[#allocation3 + $0x78] sm:$0xff] %vm1986, %v1921
        %2003 = vst.msk [vmem:[#allocation3 + $0x80] sm:$0xff] %vm1986, %v1923
        %2004 = vst.msk [vmem:[#allocation3 + $0x88] sm:$0xff] %vm1986, %v1925
        %2005 = vst.msk [vmem:[#allocation3 + $0x90] sm:$0xff] %vm1986, %v1927
        %2006 = vst.msk [vmem:[#allocation3 + $0x98] sm:$0xff] %vm1986, %v1929
        %2007 = vst.msk [vmem:[#allocation3 + $0xa0] sm:$0xff] %vm1986, %v1931
        %2008 = vst.msk [vmem:[#allocation3 + $0xa8] sm:$0xff] %vm1986, %v1933
        %2009 = vst.msk [vmem:[#allocation3 + $0xb0] sm:$0xff] %vm1986, %v1935
        %2010 = vst.msk [vmem:[#allocation3 + $0xb8] sm:$0xff] %vm1986, %v1937
        %2011 = vst.msk [vmem:[#allocation3 + $0xc0] sm:$0xff] %vm1986, %v1939
        %2012 = vst.msk [vmem:[#allocation3 + $0xc8] sm:$0xff] %vm1986, %v1941
        %2013 = vst.msk [vmem:[#allocation3 + $0xd0] sm:$0xff] %vm1986, %v1943
        %2014 = vst.msk [vmem:[#allocation3 + $0xd8] sm:$0xff] %vm1986, %v1945
        %2015 = vst.msk [vmem:[#allocation3 + $0xe0] sm:$0xff] %vm1986, %v1947
        %2016 = vst.msk [vmem:[#allocation3 + $0xe8] sm:$0xff] %vm1986, %v1949
        %2017 = vst.msk [vmem:[#allocation3 + $0xf0] sm:$0xff] %vm1986, %v1951
        %2018 = vst.msk [vmem:[#allocation3 + $0xf8] sm:$0xff] %vm1986, %v1953
        %v2019 = vld [vmem:[%s1632 + $0x2] sm:$0xff]
        %v2020 = vld [vmem:[%s1632 + $0xa] sm:$0xff]
        %v2021 = vld [vmem:[%s1632 + $0x1a] sm:$0xff]
        %v2022 = vld [vmem:[%s1632 + $0x22] sm:$0xff]
        %v2023 = vld [vmem:[%s1632 + $0x32] sm:$0xff]
        %v2024 = vld [vmem:[%s1632 + $0x3a] sm:$0xff]
        %v2025 = vld [vmem:[%s1632 + $0x4a] sm:$0xff]
        %v2026 = vld [vmem:[%s1632 + $0x52] sm:$0xff]
        %v2027 = vld [vmem:[%s1632 + $0x62] sm:$0xff]
        %v2028 = vld [vmem:[%s1632 + $0x6a] sm:$0xff]
        %v2029 = vld [vmem:[%s1632 + $0x7a] sm:$0xff]
        %v2030 = vld [vmem:[%s1632 + $0x82] sm:$0xff]
        %v2031 = vld [vmem:[%s1632 + $0x92] sm:$0xff]
        %v2032 = vld [vmem:[%s1632 + $0x9a] sm:$0xff]
        %v2033 = vld [vmem:[%s1632 + $0xaa] sm:$0xff]
        %v2034 = vld [vmem:[%s1632 + $0xb2] sm:$0xff]
        %v2035 = vld [vmem:[%s1632 + $0xc2] sm:$0xff]
        %v2036 = vld [vmem:[%s1632 + $0xca] sm:$0xff]
        %v2037 = vld [vmem:[%s1632 + $0xda] sm:$0xff]
        %v2038 = vld [vmem:[%s1632 + $0xe2] sm:$0xff]
        %v2039 = vld [vmem:[%s1632 + $0xf2] sm:$0xff]
        %v2040 = vld [vmem:[%s1632 + $0xfa] sm:$0xff]
        %v2041 = vld [vmem:[%s1632 + $0x10a] sm:$0xff]
        %v2042 = vld [vmem:[%s1632 + $0x112] sm:$0xff]
        %v2043 = vld [vmem:[%s1632 + $0x122] sm:$0xff]
        %v2044 = vld [vmem:[%s1632 + $0x12a] sm:$0xff]
        %v2045 = vld [vmem:[%s1632 + $0x13a] sm:$0xff]
        %v2046 = vld [vmem:[%s1632 + $0x142] sm:$0xff]
        %v2047 = vld [vmem:[%s1632 + $0x152] sm:$0xff]
        %v2048 = vld [vmem:[%s1632 + $0x15a] sm:$0xff]
        %v2049 = vld [vmem:[%s1632 + $0x16a] sm:$0xff]
        %v2050 = vld [vmem:[%s1632 + $0x172] sm:$0xff]
        %2083 = vrot.lane.b32.xlu0 %v2019, 64
        %v2084 = vpop.permute.xlu0 %2083
        %2085 = vrot.lane.b32.xlu0 %v2020, 64
        %v2086 = vpop.permute.xlu0 %2085
        %2087 = vrot.lane.b32.xlu0 %v2021, 64
        %v2088 = vpop.permute.xlu0 %2087
        %2089 = vrot.lane.b32.xlu0 %v2022, 64
        %v2090 = vpop.permute.xlu0 %2089
        %2091 = vrot.lane.b32.xlu0 %v2023, 64
        %v2092 = vpop.permute.xlu0 %2091
        %2093 = vrot.lane.b32.xlu0 %v2024, 64
        %v2094 = vpop.permute.xlu0 %2093
        %2095 = vrot.lane.b32.xlu0 %v2025, 64
        %v2096 = vpop.permute.xlu0 %2095
        %2097 = vrot.lane.b32.xlu0 %v2026, 64
        %v2098 = vpop.permute.xlu0 %2097
        %2099 = vrot.lane.b32.xlu0 %v2027, 64
        %v2100 = vpop.permute.xlu0 %2099
        %2101 = vrot.lane.b32.xlu0 %v2028, 64
        %v2102 = vpop.permute.xlu0 %2101
        %2103 = vrot.lane.b32.xlu0 %v2029, 64
        %v2104 = vpop.permute.xlu0 %2103
        %2105 = vrot.lane.b32.xlu0 %v2030, 64
        %v2106 = vpop.permute.xlu0 %2105
        %2107 = vrot.lane.b32.xlu0 %v2031, 64
        %v2108 = vpop.permute.xlu0 %2107
        %2109 = vrot.lane.b32.xlu0 %v2032, 64
        %v2110 = vpop.permute.xlu0 %2109
        %2111 = vrot.lane.b32.xlu0 %v2033, 64
        %v2112 = vpop.permute.xlu0 %2111
        %2113 = vrot.lane.b32.xlu0 %v2034, 64
        %v2114 = vpop.permute.xlu0 %2113
        %2115 = vrot.lane.b32.xlu0 %v2035, 64
        %v2116 = vpop.permute.xlu0 %2115
        %2117 = vrot.lane.b32.xlu0 %v2036, 64
        %v2118 = vpop.permute.xlu0 %2117
        %2119 = vrot.lane.b32.xlu0 %v2037, 64
        %v2120 = vpop.permute.xlu0 %2119
        %2121 = vrot.lane.b32.xlu0 %v2038, 64
        %v2122 = vpop.permute.xlu0 %2121
        %2123 = vrot.lane.b32.xlu0 %v2039, 64
        %v2124 = vpop.permute.xlu0 %2123
        %2125 = vrot.lane.b32.xlu0 %v2040, 64
        %v2126 = vpop.permute.xlu0 %2125
        %2127 = vrot.lane.b32.xlu0 %v2041, 64
        %v2128 = vpop.permute.xlu0 %2127
        %2129 = vrot.lane.b32.xlu0 %v2042, 64
        %v2130 = vpop.permute.xlu0 %2129
        %2131 = vrot.lane.b32.xlu0 %v2043, 64
        %v2132 = vpop.permute.xlu0 %2131
        %2133 = vrot.lane.b32.xlu0 %v2044, 64
        %v2134 = vpop.permute.xlu0 %2133
        %2135 = vrot.lane.b32.xlu0 %v2045, 64
        %v2136 = vpop.permute.xlu0 %2135
        %2137 = vrot.lane.b32.xlu0 %v2046, 64
        %v2138 = vpop.permute.xlu0 %2137
        %2139 = vrot.lane.b32.xlu0 %v2047, 64
        %v2140 = vpop.permute.xlu0 %2139
        %2141 = vrot.lane.b32.xlu0 %v2048, 64
        %v2142 = vpop.permute.xlu0 %2141
        %2143 = vrot.lane.b32.xlu0 %v2049, 64
        %v2144 = vpop.permute.xlu0 %2143
        %2145 = vrot.lane.b32.xlu0 %v2050, 64
        %v2146 = vpop.permute.xlu0 %2145
        %vm2179 = vcmask 589312
        %2180 = vst.msk [vmem:[#allocation3] sm:$0xff] %vm2179, %v2084
        %2181 = vst.msk [vmem:[#allocation3 + $0x8] sm:$0xff] %vm2179, %v2086
        %2182 = vst.msk [vmem:[#allocation3 + $0x10] sm:$0xff] %vm2179, %v2088
        %2183 = vst.msk [vmem:[#allocation3 + $0x18] sm:$0xff] %vm2179, %v2090
        %2184 = vst.msk [vmem:[#allocation3 + $0x20] sm:$0xff] %vm2179, %v2092
        %2185 = vst.msk [vmem:[#allocation3 + $0x28] sm:$0xff] %vm2179, %v2094
        %2186 = vst.msk [vmem:[#allocation3 + $0x30] sm:$0xff] %vm2179, %v2096
        %2187 = vst.msk [vmem:[#allocation3 + $0x38] sm:$0xff] %vm2179, %v2098
        %2188 = vst.msk [vmem:[#allocation3 + $0x40] sm:$0xff] %vm2179, %v2100
        %2189 = vst.msk [vmem:[#allocation3 + $0x48] sm:$0xff] %vm2179, %v2102
        %2190 = vst.msk [vmem:[#allocation3 + $0x50] sm:$0xff] %vm2179, %v2104
        %2191 = vst.msk [vmem:[#allocation3 + $0x58] sm:$0xff] %vm2179, %v2106
        %2192 = vst.msk [vmem:[#allocation3 + $0x60] sm:$0xff] %vm2179, %v2108
        %2193 = vst.msk [vmem:[#allocation3 + $0x68] sm:$0xff] %vm2179, %v2110
        %2194 = vst.msk [vmem:[#allocation3 + $0x70] sm:$0xff] %vm2179, %v2112
        %2195 = vst.msk [vmem:[#allocation3 + $0x78] sm:$0xff] %vm2179, %v2114
        %2196 = vst.msk [vmem:[#allocation3 + $0x80] sm:$0xff] %vm2179, %v2116
        %2197 = vst.msk [vmem:[#allocation3 + $0x88] sm:$0xff] %vm2179, %v2118
        %2198 = vst.msk [vmem:[#allocation3 + $0x90] sm:$0xff] %vm2179, %v2120
        %2199 = vst.msk [vmem:[#allocation3 + $0x98] sm:$0xff] %vm2179, %v2122
        %2200 = vst.msk [vmem:[#allocation3 + $0xa0] sm:$0xff] %vm2179, %v2124
        %2201 = vst.msk [vmem:[#allocation3 + $0xa8] sm:$0xff] %vm2179, %v2126
        %2202 = vst.msk [vmem:[#allocation3 + $0xb0] sm:$0xff] %vm2179, %v2128
        %2203 = vst.msk [vmem:[#allocation3 + $0xb8] sm:$0xff] %vm2179, %v2130
        %2204 = vst.msk [vmem:[#allocation3 + $0xc0] sm:$0xff] %vm2179, %v2132
        %2205 = vst.msk [vmem:[#allocation3 + $0xc8] sm:$0xff] %vm2179, %v2134
        %2206 = vst.msk [vmem:[#allocation3 + $0xd0] sm:$0xff] %vm2179, %v2136
        %2207 = vst.msk [vmem:[#allocation3 + $0xd8] sm:$0xff] %vm2179, %v2138
        %2208 = vst.msk [vmem:[#allocation3 + $0xe0] sm:$0xff] %vm2179, %v2140
        %2209 = vst.msk [vmem:[#allocation3 + $0xe8] sm:$0xff] %vm2179, %v2142
        %2210 = vst.msk [vmem:[#allocation3 + $0xf0] sm:$0xff] %vm2179, %v2144
        %2211 = vst.msk [vmem:[#allocation3 + $0xf8] sm:$0xff] %vm2179, %v2146
        %v2212 = vld [vmem:[#allocation3] sm:$0xff]
        %v2213 = vld [vmem:[#allocation3 + $0x8] sm:$0xff]
        %v2214 = vld [vmem:[#allocation3 + $0x10] sm:$0xff]
        %v2215 = vld [vmem:[#allocation3 + $0x18] sm:$0xff]
        %v2216 = vld [vmem:[#allocation3 + $0x20] sm:$0xff]
        %v2217 = vld [vmem:[#allocation3 + $0x28] sm:$0xff]
        %v2218 = vld [vmem:[#allocation3 + $0x30] sm:$0xff]
        %v2219 = vld [vmem:[#allocation3 + $0x38] sm:$0xff]
        %v2220 = vld [vmem:[#allocation3 + $0x40] sm:$0xff]
        %v2221 = vld [vmem:[#allocation3 + $0x48] sm:$0xff]
        %v2222 = vld [vmem:[#allocation3 + $0x50] sm:$0xff]
        %v2223 = vld [vmem:[#allocation3 + $0x58] sm:$0xff]
        %v2224 = vld [vmem:[#allocation3 + $0x60] sm:$0xff]
        %v2225 = vld [vmem:[#allocation3 + $0x68] sm:$0xff]
        %v2226 = vld [vmem:[#allocation3 + $0x70] sm:$0xff]
        %v2227 = vld [vmem:[#allocation3 + $0x78] sm:$0xff]
        %v2228 = vld [vmem:[#allocation3 + $0x80] sm:$0xff]
        %v2229 = vld [vmem:[#allocation3 + $0x88] sm:$0xff]
        %v2230 = vld [vmem:[#allocation3 + $0x90] sm:$0xff]
        %v2231 = vld [vmem:[#allocation3 + $0x98] sm:$0xff]
        %v2232 = vld [vmem:[#allocation3 + $0xa0] sm:$0xff]
        %v2233 = vld [vmem:[#allocation3 + $0xa8] sm:$0xff]
        %v2234 = vld [vmem:[#allocation3 + $0xb0] sm:$0xff]
        %v2235 = vld [vmem:[#allocation3 + $0xb8] sm:$0xff]
        %v2236 = vld [vmem:[#allocation3 + $0xc0] sm:$0xff]
        %v2237 = vld [vmem:[#allocation3 + $0xc8] sm:$0xff]
        %v2238 = vld [vmem:[#allocation3 + $0xd0] sm:$0xff]
        %v2239 = vld [vmem:[#allocation3 + $0xd8] sm:$0xff]
        %v2240 = vld [vmem:[#allocation3 + $0xe0] sm:$0xff]
        %v2241 = vld [vmem:[#allocation3 + $0xe8] sm:$0xff]
        %v2242 = vld [vmem:[#allocation3 + $0xf0] sm:$0xff]
        %v2243 = vld [vmem:[#allocation3 + $0xf8] sm:$0xff]
        %v2244 = vld [vmem:[%s1] sm:$0xff]
        %v2245 = vld [vmem:[%s1 + $0x8] sm:$0xff]
        %v2246 = vld [vmem:[%s1 + $0x10] sm:$0xff]
        %v2247 = vld [vmem:[%s1 + $0x18] sm:$0xff]
        %v2248 = vld [vmem:[%s1 + $0x20] sm:$0xff]
        %v2249 = vld [vmem:[%s1 + $0x28] sm:$0xff]
        %v2250 = vld [vmem:[%s1 + $0x30] sm:$0xff]
        %v2251 = vld [vmem:[%s1 + $0x38] sm:$0xff]
        %v2252 = vld [vmem:[%s1 + $0x40] sm:$0xff]
        %v2253 = vld [vmem:[%s2] sm:$0x1]
        %v2255 = vlaneseq
        %v2256 = vshrl.u32 %v2255, 7
        %v2257 = vsub.s32 0, %v2256
        %v2258 = vrot.slane %v2253, %v2257
        %vm2260 = vcmask 588800
        %v2262 = vsel %vm2260, %v2212, 0
        %v2265 = vsel %vm2260, %v2213, 0
        %v2268 = vsel %vm2260, %v2214, 0
        %v2271 = vsel %vm2260, %v2215, 0
        %v2274 = vsel %vm2260, %v2216, 0
        %v2277 = vsel %vm2260, %v2217, 0
        %v2280 = vsel %vm2260, %v2218, 0
        %v2283 = vsel %vm2260, %v2219, 0
        %v2286 = vsel %vm2260, %v2220, 0
        %v2289 = vsel %vm2260, %v2221, 0
        %v2292 = vsel %vm2260, %v2222, 0
        %v2295 = vsel %vm2260, %v2223, 0
        %v2298 = vsel %vm2260, %v2224, 0
        %v2301 = vsel %vm2260, %v2225, 0
        %v2304 = vsel %vm2260, %v2226, 0
        %v2307 = vsel %vm2260, %v2227, 0
        %v2310 = vsel %vm2260, %v2228, 0
        %v2313 = vsel %vm2260, %v2229, 0
        %v2316 = vsel %vm2260, %v2230, 0
        %v2319 = vsel %vm2260, %v2231, 0
        %v2322 = vsel %vm2260, %v2232, 0
        %v2325 = vsel %vm2260, %v2233, 0
        %v2328 = vsel %vm2260, %v2234, 0
        %v2331 = vsel %vm2260, %v2235, 0
        %v2334 = vsel %vm2260, %v2236, 0
        %v2337 = vsel %vm2260, %v2237, 0
        %v2340 = vsel %vm2260, %v2238, 0
        %v2343 = vsel %vm2260, %v2239, 0
        %v2346 = vsel %vm2260, %v2240, 0
        %v2349 = vsel %vm2260, %v2241, 0
        %v2352 = vsel %vm2260, %v2242, 0
        %v2355 = vsel %vm2260, %v2243, 0
        %2357 = vmatprep.subr.mxu0 0.0
        %2358 = vmatpush1.msra.mxu0 0.0
        %2359 = vmatprep.subr.mxu0 0.0
        %2360 = vmatpush1.msra.mxu0 0.0
        %2361 = vmatprep.subr.mxu0 0.0
        %2362 = vmatpush1.msra.mxu0 0.0
        %2363 = vmatprep.subr.mxu0 0.0
        %2364 = vmatpush1.msra.mxu0 0.0
        %2365 = vmatprep.subr.mxu0 0.0
        %2366 = vmatpush1.msra.mxu0 0.0
        %2367 = vmatprep.subr.mxu0 0.0
        %2368 = vmatpush1.msra.mxu0 0.0
        %2369 = vmatprep.subr.mxu0 0.0
        %2370 = vmatpush1.msra.mxu0 0.0
        %2371 = vmatprep.subr.mxu0 0.0
        %2372 = vmatpush1.msra.mxu0 %v2252
        %2373 = vmatprep.subr.mxu0 0.0
        %2374 = vmatpush1.msra.mxu0 %v2251
        %2375 = vmatprep.subr.mxu0 0.0
        %2376 = vmatpush1.msra.mxu0 %v2250
        %2377 = vmatprep.subr.mxu0 0.0
        %2378 = vmatpush1.msra.mxu0 %v2249
        %2379 = vmatprep.subr.mxu0 0.0
        %2380 = vmatpush1.msra.mxu0 %v2248
        %2381 = vmatprep.subr.mxu0 0.0
        %2382 = vmatpush1.msra.mxu0 %v2247
        %2383 = vmatprep.subr.mxu0 0.0
        %2384 = vmatpush1.msra.mxu0 %v2246
        %2385 = vmatprep.subr.mxu0 0.0
        %2386 = vmatpush1.msra.mxu0 %v2245
        %2387 = vmatprep.subr.mxu0 0.0
        %2388 = vmatpush1.msra.mxu0 %v2244
        %2389 = vmatprep.subr.mxu0 0.0
        %2390 = vmatpush2.msra.mxu0 0.0
        %2391 = vmatprep.subr.mxu0 0.0
        %2392 = vmatpush2.msra.mxu0 0.0
        %2393 = vmatprep.subr.mxu0 0.0
        %2394 = vmatpush2.msra.mxu0 0.0
        %2395 = vmatprep.subr.mxu0 0.0
        %2396 = vmatpush2.msra.mxu0 0.0
        %2397 = vmatprep.subr.mxu0 0.0
        %2398 = vmatpush2.msra.mxu0 0.0
        %2399 = vmatprep.subr.mxu0 0.0
        %2400 = vmatpush2.msra.mxu0 0.0
        %2401 = vmatprep.subr.mxu0 0.0
        %2402 = vmatpush2.msra.mxu0 0.0
        %2403 = vmatprep.subr.mxu0 0.0
        %2404 = vmatpush2.msra.mxu0 0.0
        %2405 = vmatprep.subr.mxu0 0.0
        %2406 = vmatpush2.msra.mxu0 0.0
        %2407 = vmatprep.subr.mxu0 0.0
        %2408 = vmatpush2.msra.mxu0 0.0
        %2409 = vmatprep.subr.mxu0 0.0
        %2410 = vmatpush2.msra.mxu0 0.0
        %2411 = vmatprep.subr.mxu0 0.0
        %2412 = vmatpush2.msra.mxu0 0.0
        %2413 = vmatprep.subr.mxu0 0.0
        %2414 = vmatpush2.msra.mxu0 0.0
        %2415 = vmatprep.subr.mxu0 0.0
        %2416 = vmatpush2.msra.mxu0 0.0
        %2417 = vmatprep.subr.mxu0 0.0
        %2418 = vmatpush2.msra.mxu0 0.0
        %2419 = vmatprep.subr.mxu0 0.0
        %2420 = vmatpush2.msra.mxu0 0.0
        %2421 = vmatprep.mubr.f32.mxu0 0.0
        %2422 = vmatmul.mubr.f32.gmra.mxu0 %v2262
        %v2423 = vpop.f32.mrf.mxu0
        %v2424 = vadd.f32 %v2258, %v2423
        %v2425 = vpop.f32.mrf.mxu0
        %2426 = vmatprep.mubr.f32.mxu0 0.0
        %2427 = vmatmul.mubr.f32.gmra.mxu0 %v2265
        %v2428 = vpop.f32.mrf.mxu0
        %v2429 = vadd.f32 %v2258, %v2428
        %v2430 = vpop.f32.mrf.mxu0
        %2431 = vmatprep.mubr.f32.mxu0 0.0
        %2432 = vmatmul.mubr.f32.gmra.mxu0 %v2268
        %v2433 = vpop.f32.mrf.mxu0
        %v2434 = vadd.f32 %v2258, %v2433
        %v2435 = vpop.f32.mrf.mxu0
        %2436 = vmatprep.mubr.f32.mxu0 0.0
        %2437 = vmatmul.mubr.f32.gmra.mxu0 %v2271
        %v2438 = vpop.f32.mrf.mxu0
        %v2439 = vadd.f32 %v2258, %v2438
        %v2440 = vpop.f32.mrf.mxu0
        %2441 = vmatprep.mubr.f32.mxu0 0.0
        %2442 = vmatmul.mubr.f32.gmra.mxu0 %v2274
        %v2443 = vpop.f32.mrf.mxu0
        %v2444 = vadd.f32 %v2258, %v2443
        %v2445 = vpop.f32.mrf.mxu0
        %2446 = vmatprep.mubr.f32.mxu0 0.0
        %2447 = vmatmul.mubr.f32.gmra.mxu0 %v2277
        %v2448 = vpop.f32.mrf.mxu0
        %v2449 = vadd.f32 %v2258, %v2448
        %v2450 = vpop.f32.mrf.mxu0
        %2451 = vmatprep.mubr.f32.mxu0 0.0
        %2452 = vmatmul.mubr.f32.gmra.mxu0 %v2280
        %v2453 = vpop.f32.mrf.mxu0
        %v2454 = vadd.f32 %v2258, %v2453
        %v2455 = vpop.f32.mrf.mxu0
        %2456 = vmatprep.mubr.f32.mxu0 0.0
        %2457 = vmatmul.mubr.f32.gmra.mxu0 %v2283
        %v2458 = vpop.f32.mrf.mxu0
        %v2459 = vadd.f32 %v2258, %v2458
        %v2460 = vpop.f32.mrf.mxu0
        %2461 = vmatprep.mubr.f32.mxu0 0.0
        %2462 = vmatmul.mubr.f32.gmra.mxu0 %v2286
        %v2463 = vpop.f32.mrf.mxu0
        %v2464 = vadd.f32 %v2258, %v2463
        %v2465 = vpop.f32.mrf.mxu0
        %2466 = vmatprep.mubr.f32.mxu0 0.0
        %2467 = vmatmul.mubr.f32.gmra.mxu0 %v2289
        %v2468 = vpop.f32.mrf.mxu0
        %v2469 = vadd.f32 %v2258, %v2468
        %v2470 = vpop.f32.mrf.mxu0
        %2471 = vmatprep.mubr.f32.mxu0 0.0
        %2472 = vmatmul.mubr.f32.gmra.mxu0 %v2292
        %v2473 = vpop.f32.mrf.mxu0
        %v2474 = vadd.f32 %v2258, %v2473
        %v2475 = vpop.f32.mrf.mxu0
        %2476 = vmatprep.mubr.f32.mxu0 0.0
        %2477 = vmatmul.mubr.f32.gmra.mxu0 %v2295
        %v2478 = vpop.f32.mrf.mxu0
        %v2479 = vadd.f32 %v2258, %v2478
        %v2480 = vpop.f32.mrf.mxu0
        %2481 = vmatprep.mubr.f32.mxu0 0.0
        %2482 = vmatmul.mubr.f32.gmra.mxu0 %v2298
        %v2483 = vpop.f32.mrf.mxu0
        %v2484 = vadd.f32 %v2258, %v2483
        %v2485 = vpop.f32.mrf.mxu0
        %2486 = vmatprep.mubr.f32.mxu0 0.0
        %2487 = vmatmul.mubr.f32.gmra.mxu0 %v2301
        %v2488 = vpop.f32.mrf.mxu0
        %v2489 = vadd.f32 %v2258, %v2488
        %v2490 = vpop.f32.mrf.mxu0
        %2491 = vmatprep.mubr.f32.mxu0 0.0
        %2492 = vmatmul.mubr.f32.gmra.mxu0 %v2304
        %v2493 = vpop.f32.mrf.mxu0
        %v2494 = vadd.f32 %v2258, %v2493
        %v2495 = vpop.f32.mrf.mxu0
        %2496 = vmatprep.mubr.f32.mxu0 0.0
        %2497 = vmatmul.mubr.f32.gmra.mxu0 %v2307
        %v2498 = vpop.f32.mrf.mxu0
        %v2499 = vadd.f32 %v2258, %v2498
        %v2500 = vpop.f32.mrf.mxu0
        %2501 = vmatprep.mubr.f32.mxu0 0.0
        %2502 = vmatmul.mubr.f32.gmra.mxu0 %v2310
        %v2503 = vpop.f32.mrf.mxu0
        %v2504 = vadd.f32 %v2258, %v2503
        %v2505 = vpop.f32.mrf.mxu0
        %2506 = vmatprep.mubr.f32.mxu0 0.0
        %2507 = vmatmul.mubr.f32.gmra.mxu0 %v2313
        %v2508 = vpop.f32.mrf.mxu0
        %v2509 = vadd.f32 %v2258, %v2508
        %v2510 = vpop.f32.mrf.mxu0
        %2511 = vmatprep.mubr.f32.mxu0 0.0
        %2512 = vmatmul.mubr.f32.gmra.mxu0 %v2316
        %v2513 = vpop.f32.mrf.mxu0
        %v2514 = vadd.f32 %v2258, %v2513
        %v2515 = vpop.f32.mrf.mxu0
        %2516 = vmatprep.mubr.f32.mxu0 0.0
        %2517 = vmatmul.mubr.f32.gmra.mxu0 %v2319
        %v2518 = vpop.f32.mrf.mxu0
        %v2519 = vadd.f32 %v2258, %v2518
        %v2520 = vpop.f32.mrf.mxu0
        %2521 = vmatprep.mubr.f32.mxu0 0.0
        %2522 = vmatmul.mubr.f32.gmra.mxu0 %v2322
        %v2523 = vpop.f32.mrf.mxu0
        %v2524 = vadd.f32 %v2258, %v2523
        %v2525 = vpop.f32.mrf.mxu0
        %2526 = vmatprep.mubr.f32.mxu0 0.0
        %2527 = vmatmul.mubr.f32.gmra.mxu0 %v2325
        %v2528 = vpop.f32.mrf.mxu0
        %v2529 = vadd.f32 %v2258, %v2528
        %v2530 = vpop.f32.mrf.mxu0
        %2531 = vmatprep.mubr.f32.mxu0 0.0
        %2532 = vmatmul.mubr.f32.gmra.mxu0 %v2328
        %v2533 = vpop.f32.mrf.mxu0
        %v2534 = vadd.f32 %v2258, %v2533
        %v2535 = vpop.f32.mrf.mxu0
        %2536 = vmatprep.mubr.f32.mxu0 0.0
        %2537 = vmatmul.mubr.f32.gmra.mxu0 %v2331
        %v2538 = vpop.f32.mrf.mxu0
        %v2539 = vadd.f32 %v2258, %v2538
        %v2540 = vpop.f32.mrf.mxu0
        %2541 = vmatprep.mubr.f32.mxu0 0.0
        %2542 = vmatmul.mubr.f32.gmra.mxu0 %v2334
        %v2543 = vpop.f32.mrf.mxu0
        %v2544 = vadd.f32 %v2258, %v2543
        %v2545 = vpop.f32.mrf.mxu0
        %2546 = vmatprep.mubr.f32.mxu0 0.0
        %2547 = vmatmul.mubr.f32.gmra.mxu0 %v2337
        %v2548 = vpop.f32.mrf.mxu0
        %v2549 = vadd.f32 %v2258, %v2548
        %v2550 = vpop.f32.mrf.mxu0
        %2551 = vmatprep.mubr.f32.mxu0 0.0
        %2552 = vmatmul.mubr.f32.gmra.mxu0 %v2340
        %v2553 = vpop.f32.mrf.mxu0
        %v2554 = vadd.f32 %v2258, %v2553
        %v2555 = vpop.f32.mrf.mxu0
        %2556 = vmatprep.mubr.f32.mxu0 0.0
        %2557 = vmatmul.mubr.f32.gmra.mxu0 %v2343
        %v2558 = vpop.f32.mrf.mxu0
        %v2559 = vadd.f32 %v2258, %v2558
        %v2560 = vpop.f32.mrf.mxu0
        %2561 = vmatprep.mubr.f32.mxu0 0.0
        %2562 = vmatmul.mubr.f32.gmra.mxu0 %v2346
        %v2563 = vpop.f32.mrf.mxu0
        %v2564 = vadd.f32 %v2258, %v2563
        %v2565 = vpop.f32.mrf.mxu0
        %2566 = vmatprep.mubr.f32.mxu0 0.0
        %2567 = vmatmul.mubr.f32.gmra.mxu0 %v2349
        %v2568 = vpop.f32.mrf.mxu0
        %v2569 = vadd.f32 %v2258, %v2568
        %v2570 = vpop.f32.mrf.mxu0
        %2571 = vmatprep.mubr.f32.mxu0 0.0
        %2572 = vmatmul.mubr.f32.gmra.mxu0 %v2352
        %v2573 = vpop.f32.mrf.mxu0
        %v2574 = vadd.f32 %v2258, %v2573
        %v2575 = vpop.f32.mrf.mxu0
        %2576 = vmatprep.mubr.f32.mxu0 0.0
        %2577 = vmatmul.mubr.f32.gmra.mxu0 %v2355
        %v2578 = vpop.f32.mrf.mxu0
        %v2579 = vadd.f32 %v2258, %v2578
        %v2580 = vpop.f32.mrf.mxu0
        %2581 = vdwg.mxu0
        %s2582 = sld [smem:[#allocation4]]
        %vm2583 = vcmp.ge.f32.partialorder %v2424, 0.0
        %vm2584 = vcmp.ge.f32.partialorder %v2429, 0.0
        %vm2585 = vcmp.ge.f32.partialorder %v2434, 0.0
        %vm2586 = vcmp.ge.f32.partialorder %v2439, 0.0
        %vm2587 = vcmp.ge.f32.partialorder %v2444, 0.0
        %vm2588 = vcmp.ge.f32.partialorder %v2449, 0.0
        %vm2589 = vcmp.ge.f32.partialorder %v2454, 0.0
        %vm2590 = vcmp.ge.f32.partialorder %v2459, 0.0
        %vm2591 = vcmp.ge.f32.partialorder %v2464, 0.0
        %vm2592 = vcmp.ge.f32.partialorder %v2469, 0.0
        %vm2593 = vcmp.ge.f32.partialorder %v2474, 0.0
        %vm2594 = vcmp.ge.f32.partialorder %v2479, 0.0
        %vm2595 = vcmp.ge.f32.partialorder %v2484, 0.0
        %vm2596 = vcmp.ge.f32.partialorder %v2489, 0.0
        %vm2597 = vcmp.ge.f32.partialorder %v2494, 0.0
        %vm2598 = vcmp.ge.f32.partialorder %v2499, 0.0
        %vm2599 = vcmp.ge.f32.partialorder %v2504, 0.0
        %vm2600 = vcmp.ge.f32.partialorder %v2509, 0.0
        %vm2601 = vcmp.ge.f32.partialorder %v2514, 0.0
        %vm2602 = vcmp.ge.f32.partialorder %v2519, 0.0
        %vm2603 = vcmp.ge.f32.partialorder %v2524, 0.0
        %vm2604 = vcmp.ge.f32.partialorder %v2529, 0.0
        %vm2605 = vcmp.ge.f32.partialorder %v2534, 0.0
        %vm2606 = vcmp.ge.f32.partialorder %v2539, 0.0
        %vm2607 = vcmp.ge.f32.partialorder %v2544, 0.0
        %vm2608 = vcmp.ge.f32.partialorder %v2549, 0.0
        %vm2609 = vcmp.ge.f32.partialorder %v2554, 0.0
        %vm2610 = vcmp.ge.f32.partialorder %v2559, 0.0
        %vm2611 = vcmp.ge.f32.partialorder %v2564, 0.0
        %vm2612 = vcmp.ge.f32.partialorder %v2569, 0.0
        %vm2613 = vcmp.ge.f32.partialorder %v2574, 0.0
        %vm2614 = vcmp.ge.f32.partialorder %v2579, 0.0
        %v2615 = vstv %s2582
        %v2616 = vmul.f32 %v2615, %v2424
        %v2617 = vmul.f32 %v2615, %v2429
        %v2618 = vmul.f32 %v2615, %v2434
        %v2619 = vmul.f32 %v2615, %v2439
        %v2620 = vmul.f32 %v2615, %v2444
        %v2621 = vmul.f32 %v2615, %v2449
        %v2622 = vmul.f32 %v2615, %v2454
        %v2623 = vmul.f32 %v2615, %v2459
        %v2624 = vmul.f32 %v2615, %v2464
        %v2625 = vmul.f32 %v2615, %v2469
        %v2626 = vmul.f32 %v2615, %v2474
        %v2627 = vmul.f32 %v2615, %v2479
        %v2628 = vmul.f32 %v2615, %v2484
        %v2629 = vmul.f32 %v2615, %v2489
        %v2630 = vmul.f32 %v2615, %v2494
        %v2631 = vmul.f32 %v2615, %v2499
        %v2632 = vmul.f32 %v2615, %v2504
        %v2633 = vmul.f32 %v2615, %v2509
        %v2634 = vmul.f32 %v2615, %v2514
        %v2635 = vmul.f32 %v2615, %v2519
        %v2636 = vmul.f32 %v2615, %v2524
        %v2637 = vmul.f32 %v2615, %v2529
        %v2638 = vmul.f32 %v2615, %v2534
        %v2639 = vmul.f32 %v2615, %v2539
        %v2640 = vmul.f32 %v2615, %v2544
        %v2641 = vmul.f32 %v2615, %v2549
        %v2642 = vmul.f32 %v2615, %v2554
        %v2643 = vmul.f32 %v2615, %v2559
        %v2644 = vmul.f32 %v2615, %v2564
        %v2645 = vmul.f32 %v2615, %v2569
        %v2646 = vmul.f32 %v2615, %v2574
        %v2647 = vmul.f32 %v2615, %v2579
        %v2648 = vsel %vm2583, %v2424, %v2616
        %v2649 = vsel %vm2584, %v2429, %v2617
        %v2650 = vsel %vm2585, %v2434, %v2618
        %v2651 = vsel %vm2586, %v2439, %v2619
        %v2652 = vsel %vm2587, %v2444, %v2620
        %v2653 = vsel %vm2588, %v2449, %v2621
        %v2654 = vsel %vm2589, %v2454, %v2622
        %v2655 = vsel %vm2590, %v2459, %v2623
        %v2656 = vsel %vm2591, %v2464, %v2624
        %v2657 = vsel %vm2592, %v2469, %v2625
        %v2658 = vsel %vm2593, %v2474, %v2626
        %v2659 = vsel %vm2594, %v2479, %v2627
        %v2660 = vsel %vm2595, %v2484, %v2628
        %v2661 = vsel %vm2596, %v2489, %v2629
        %v2662 = vsel %vm2597, %v2494, %v2630
        %v2663 = vsel %vm2598, %v2499, %v2631
        %v2664 = vsel %vm2599, %v2504, %v2632
        %v2665 = vsel %vm2600, %v2509, %v2633
        %v2666 = vsel %vm2601, %v2514, %v2634
        %v2667 = vsel %vm2602, %v2519, %v2635
        %v2668 = vsel %vm2603, %v2524, %v2636
        %v2669 = vsel %vm2604, %v2529, %v2637
        %v2670 = vsel %vm2605, %v2534, %v2638
        %v2671 = vsel %vm2606, %v2539, %v2639
        %v2672 = vsel %vm2607, %v2544, %v2640
        %v2673 = vsel %vm2608, %v2549, %v2641
        %v2674 = vsel %vm2609, %v2554, %v2642
        %v2675 = vsel %vm2610, %v2559, %v2643
        %v2676 = vsel %vm2611, %v2564, %v2644
        %v2677 = vsel %vm2612, %v2569, %v2645
        %v2678 = vsel %vm2613, %v2574, %v2646
        %v2679 = vsel %vm2614, %v2579, %v2647
        %2680 = vst.msk [vmem:[%s570 + $0x1] sm:$0xff] %vm482, %v2648
        %2681 = vst.msk [vmem:[%s570 + $0x9] sm:$0xff] %vm482, %v2649
        %2682 = vst.msk [vmem:[%s570 + $0x19] sm:$0xff] %vm482, %v2650
        %2683 = vst.msk [vmem:[%s570 + $0x21] sm:$0xff] %vm482, %v2651
        %2684 = vst.msk [vmem:[%s570 + $0x31] sm:$0xff] %vm482, %v2652
        %2685 = vst.msk [vmem:[%s570 + $0x39] sm:$0xff] %vm482, %v2653
        %2686 = vst.msk [vmem:[%s570 + $0x49] sm:$0xff] %vm482, %v2654
        %2687 = vst.msk [vmem:[%s570 + $0x51] sm:$0xff] %vm482, %v2655
        %2688 = vst.msk [vmem:[%s570 + $0x61] sm:$0xff] %vm482, %v2656
        %2689 = vst.msk [vmem:[%s570 + $0x69] sm:$0xff] %vm482, %v2657
        %2690 = vst.msk [vmem:[%s570 + $0x79] sm:$0xff] %vm482, %v2658
        %2691 = vst.msk [vmem:[%s570 + $0x81] sm:$0xff] %vm482, %v2659
        %2692 = vst.msk [vmem:[%s570 + $0x91] sm:$0xff] %vm482, %v2660
        %2693 = vst.msk [vmem:[%s570 + $0x99] sm:$0xff] %vm482, %v2661
        %2694 = vst.msk [vmem:[%s570 + $0xa9] sm:$0xff] %vm482, %v2662
        %2695 = vst.msk [vmem:[%s570 + $0xb1] sm:$0xff] %vm482, %v2663
        %2696 = vst.msk [vmem:[%s570 + $0xc1] sm:$0xff] %vm482, %v2664
        %2697 = vst.msk [vmem:[%s570 + $0xc9] sm:$0xff] %vm482, %v2665
        %2698 = vst.msk [vmem:[%s570 + $0xd9] sm:$0xff] %vm482, %v2666
        %2699 = vst.msk [vmem:[%s570 + $0xe1] sm:$0xff] %vm482, %v2667
        %2700 = vst.msk [vmem:[%s570 + $0xf1] sm:$0xff] %vm482, %v2668
        %2701 = vst.msk [vmem:[%s570 + $0xf9] sm:$0xff] %vm482, %v2669
        %2702 = vst.msk [vmem:[%s570 + $0x109] sm:$0xff] %vm482, %v2670
        %2703 = vst.msk [vmem:[%s570 + $0x111] sm:$0xff] %vm482, %v2671
        %2704 = vst.msk [vmem:[%s570 + $0x121] sm:$0xff] %vm482, %v2672
        %2705 = vst.msk [vmem:[%s570 + $0x129] sm:$0xff] %vm482, %v2673
        %2706 = vst.msk [vmem:[%s570 + $0x139] sm:$0xff] %vm482, %v2674
        %2707 = vst.msk [vmem:[%s570 + $0x141] sm:$0xff] %vm482, %v2675
        %2708 = vst.msk [vmem:[%s570 + $0x151] sm:$0xff] %vm482, %v2676
        %2709 = vst.msk [vmem:[%s570 + $0x159] sm:$0xff] %vm482, %v2677
        %2710 = vst.msk [vmem:[%s570 + $0x169] sm:$0xff] %vm482, %v2678
        %2711 = vst.msk [vmem:[%s570 + $0x171] sm:$0xff] %vm482, %v2679
        %v2712 = vld [vmem:[#allocation2] sm:$0xff]
        %v2713 = vld [vmem:[#allocation2 + $0x8] sm:$0xff]
        %v2714 = vld [vmem:[#allocation2 + $0x18] sm:$0xff]
        %v2715 = vld [vmem:[#allocation2 + $0x20] sm:$0xff]
        %v2716 = vld [vmem:[#allocation2 + $0x30] sm:$0xff]
        %v2717 = vld [vmem:[#allocation2 + $0x38] sm:$0xff]
        %v2718 = vld [vmem:[#allocation2 + $0x48] sm:$0xff]
        %v2719 = vld [vmem:[#allocation2 + $0x50] sm:$0xff]
        %v2720 = vld [vmem:[#allocation2 + $0x60] sm:$0xff]
        %v2721 = vld [vmem:[#allocation2 + $0x68] sm:$0xff]
        %v2722 = vld [vmem:[#allocation2 + $0x78] sm:$0xff]
        %v2723 = vld [vmem:[#allocation2 + $0x80] sm:$0xff]
        %v2724 = vld [vmem:[#allocation2 + $0x90] sm:$0xff]
        %v2725 = vld [vmem:[#allocation2 + $0x98] sm:$0xff]
        %v2726 = vld [vmem:[#allocation2 + $0xa8] sm:$0xff]
        %v2727 = vld [vmem:[#allocation2 + $0xb0] sm:$0xff]
        %v2728 = vld [vmem:[#allocation2 + $0xc0] sm:$0xff]
        %v2729 = vld [vmem:[#allocation2 + $0xc8] sm:$0xff]
        %v2730 = vld [vmem:[#allocation2 + $0xd8] sm:$0xff]
        %v2731 = vld [vmem:[#allocation2 + $0xe0] sm:$0xff]
        %v2732 = vld [vmem:[#allocation2 + $0xf0] sm:$0xff]
        %v2733 = vld [vmem:[#allocation2 + $0xf8] sm:$0xff]
        %v2734 = vld [vmem:[#allocation2 + $0x108] sm:$0xff]
        %v2735 = vld [vmem:[#allocation2 + $0x110] sm:$0xff]
        %v2736 = vld [vmem:[#allocation2 + $0x120] sm:$0xff]
        %v2737 = vld [vmem:[#allocation2 + $0x128] sm:$0xff]
        %v2738 = vld [vmem:[#allocation2 + $0x138] sm:$0xff]
        %v2739 = vld [vmem:[#allocation2 + $0x140] sm:$0xff]
        %v2740 = vld [vmem:[#allocation2 + $0x150] sm:$0xff]
        %v2741 = vld [vmem:[#allocation2 + $0x158] sm:$0xff]
        %v2742 = vld [vmem:[#allocation2 + $0x168] sm:$0xff]
        %v2743 = vld [vmem:[#allocation2 + $0x170] sm:$0xff]
        %2744 = vst.msk [vmem:[#allocation3] sm:$0xff] %vm482, %v2712
        %2745 = vst.msk [vmem:[#allocation3 + $0x8] sm:$0xff] %vm482, %v2713
        %2746 = vst.msk [vmem:[#allocation3 + $0x10] sm:$0xff] %vm482, %v2714
        %2747 = vst.msk [vmem:[#allocation3 + $0x18] sm:$0xff] %vm482, %v2715
        %2748 = vst.msk [vmem:[#allocation3 + $0x20] sm:$0xff] %vm482, %v2716
        %2749 = vst.msk [vmem:[#allocation3 + $0x28] sm:$0xff] %vm482, %v2717
        %2750 = vst.msk [vmem:[#allocation3 + $0x30] sm:$0xff] %vm482, %v2718
        %2751 = vst.msk [vmem:[#allocation3 + $0x38] sm:$0xff] %vm482, %v2719
        %2752 = vst.msk [vmem:[#allocation3 + $0x40] sm:$0xff] %vm482, %v2720
        %2753 = vst.msk [vmem:[#allocation3 + $0x48] sm:$0xff] %vm482, %v2721
        %2754 = vst.msk [vmem:[#allocation3 + $0x50] sm:$0xff] %vm482, %v2722
        %2755 = vst.msk [vmem:[#allocation3 + $0x58] sm:$0xff] %vm482, %v2723
        %2756 = vst.msk [vmem:[#allocation3 + $0x60] sm:$0xff] %vm482, %v2724
        %2757 = vst.msk [vmem:[#allocation3 + $0x68] sm:$0xff] %vm482, %v2725
        %2758 = vst.msk [vmem:[#allocation3 + $0x70] sm:$0xff] %vm482, %v2726
        %2759 = vst.msk [vmem:[#allocation3 + $0x78] sm:$0xff] %vm482, %v2727
        %2760 = vst.msk [vmem:[#allocation3 + $0x80] sm:$0xff] %vm482, %v2728
        %2761 = vst.msk [vmem:[#allocation3 + $0x88] sm:$0xff] %vm482, %v2729
        %2762 = vst.msk [vmem:[#allocation3 + $0x90] sm:$0xff] %vm482, %v2730
        %2763 = vst.msk [vmem:[#allocation3 + $0x98] sm:$0xff] %vm482, %v2731
        %2764 = vst.msk [vmem:[#allocation3 + $0xa0] sm:$0xff] %vm482, %v2732
        %2765 = vst.msk [vmem:[#allocation3 + $0xa8] sm:$0xff] %vm482, %v2733
        %2766 = vst.msk [vmem:[#allocation3 + $0xb0] sm:$0xff] %vm482, %v2734
        %2767 = vst.msk [vmem:[#allocation3 + $0xb8] sm:$0xff] %vm482, %v2735
        %2768 = vst.msk [vmem:[#allocation3 + $0xc0] sm:$0xff] %vm482, %v2736
        %2769 = vst.msk [vmem:[#allocation3 + $0xc8] sm:$0xff] %vm482, %v2737
        %2770 = vst.msk [vmem:[#allocation3 + $0xd0] sm:$0xff] %vm482, %v2738
        %2771 = vst.msk [vmem:[#allocation3 + $0xd8] sm:$0xff] %vm482, %v2739
        %2772 = vst.msk [vmem:[#allocation3 + $0xe0] sm:$0xff] %vm482, %v2740
        %2773 = vst.msk [vmem:[#allocation3 + $0xe8] sm:$0xff] %vm482, %v2741
        %2774 = vst.msk [vmem:[#allocation3 + $0xf0] sm:$0xff] %vm482, %v2742
        %2775 = vst.msk [vmem:[#allocation3 + $0xf8] sm:$0xff] %vm482, %v2743
        %v2776 = vld [vmem:[#allocation2 + $0x1] sm:$0xff]
        %v2777 = vld [vmem:[#allocation2 + $0x9] sm:$0xff]
        %v2778 = vld [vmem:[#allocation2 + $0x19] sm:$0xff]
        %v2779 = vld [vmem:[#allocation2 + $0x21] sm:$0xff]
        %v2780 = vld [vmem:[#allocation2 + $0x31] sm:$0xff]
        %v2781 = vld [vmem:[#allocation2 + $0x39] sm:$0xff]
        %v2782 = vld [vmem:[#allocation2 + $0x49] sm:$0xff]
        %v2783 = vld [vmem:[#allocation2 + $0x51] sm:$0xff]
        %v2784 = vld [vmem:[#allocation2 + $0x61] sm:$0xff]
        %v2785 = vld [vmem:[#allocation2 + $0x69] sm:$0xff]
        %v2786 = vld [vmem:[#allocation2 + $0x79] sm:$0xff]
        %v2787 = vld [vmem:[#allocation2 + $0x81] sm:$0xff]
        %v2788 = vld [vmem:[#allocation2 + $0x91] sm:$0xff]
        %v2789 = vld [vmem:[#allocation2 + $0x99] sm:$0xff]
        %v2790 = vld [vmem:[#allocation2 + $0xa9] sm:$0xff]
        %v2791 = vld [vmem:[#allocation2 + $0xb1] sm:$0xff]
        %v2792 = vld [vmem:[#allocation2 + $0xc1] sm:$0xff]
        %v2793 = vld [vmem:[#allocation2 + $0xc9] sm:$0xff]
        %v2794 = vld [vmem:[#allocation2 + $0xd9] sm:$0xff]
        %v2795 = vld [vmem:[#allocation2 + $0xe1] sm:$0xff]
        %v2796 = vld [vmem:[#allocation2 + $0xf1] sm:$0xff]
        %v2797 = vld [vmem:[#allocation2 + $0xf9] sm:$0xff]
        %v2798 = vld [vmem:[#allocation2 + $0x109] sm:$0xff]
        %v2799 = vld [vmem:[#allocation2 + $0x111] sm:$0xff]
        %v2800 = vld [vmem:[#allocation2 + $0x121] sm:$0xff]
        %v2801 = vld [vmem:[#allocation2 + $0x129] sm:$0xff]
        %v2802 = vld [vmem:[#allocation2 + $0x139] sm:$0xff]
        %v2803 = vld [vmem:[#allocation2 + $0x141] sm:$0xff]
        %v2804 = vld [vmem:[#allocation2 + $0x151] sm:$0xff]
        %v2805 = vld [vmem:[#allocation2 + $0x159] sm:$0xff]
        %v2806 = vld [vmem:[#allocation2 + $0x169] sm:$0xff]
        %v2807 = vld [vmem:[#allocation2 + $0x171] sm:$0xff]
        %2840 = vrot.lane.b32.xlu0 %v2776, 8
        %v2841 = vpop.permute.xlu0 %2840
        %2842 = vrot.lane.b32.xlu0 %v2777, 8
        %v2843 = vpop.permute.xlu0 %2842
        %2844 = vrot.lane.b32.xlu0 %v2778, 8
        %v2845 = vpop.permute.xlu0 %2844
        %2846 = vrot.lane.b32.xlu0 %v2779, 8
        %v2847 = vpop.permute.xlu0 %2846
        %2848 = vrot.lane.b32.xlu0 %v2780, 8
        %v2849 = vpop.permute.xlu0 %2848
        %2850 = vrot.lane.b32.xlu0 %v2781, 8
        %v2851 = vpop.permute.xlu0 %2850
        %2852 = vrot.lane.b32.xlu0 %v2782, 8
        %v2853 = vpop.permute.xlu0 %2852
        %2854 = vrot.lane.b32.xlu0 %v2783, 8
        %v2855 = vpop.permute.xlu0 %2854
        %2856 = vrot.lane.b32.xlu0 %v2784, 8
        %v2857 = vpop.permute.xlu0 %2856
        %2858 = vrot.lane.b32.xlu0 %v2785, 8
        %v2859 = vpop.permute.xlu0 %2858
        %2860 = vrot.lane.b32.xlu0 %v2786, 8
        %v2861 = vpop.permute.xlu0 %2860
        %2862 = vrot.lane.b32.xlu0 %v2787, 8
        %v2863 = vpop.permute.xlu0 %2862
        %2864 = vrot.lane.b32.xlu0 %v2788, 8
        %v2865 = vpop.permute.xlu0 %2864
        %2866 = vrot.lane.b32.xlu0 %v2789, 8
        %v2867 = vpop.permute.xlu0 %2866
        %2868 = vrot.lane.b32.xlu0 %v2790, 8
        %v2869 = vpop.permute.xlu0 %2868
        %2870 = vrot.lane.b32.xlu0 %v2791, 8
        %v2871 = vpop.permute.xlu0 %2870
        %2872 = vrot.lane.b32.xlu0 %v2792, 8
        %v2873 = vpop.permute.xlu0 %2872
        %2874 = vrot.lane.b32.xlu0 %v2793, 8
        %v2875 = vpop.permute.xlu0 %2874
        %2876 = vrot.lane.b32.xlu0 %v2794, 8
        %v2877 = vpop.permute.xlu0 %2876
        %2878 = vrot.lane.b32.xlu0 %v2795, 8
        %v2879 = vpop.permute.xlu0 %2878
        %2880 = vrot.lane.b32.xlu0 %v2796, 8
        %v2881 = vpop.permute.xlu0 %2880
        %2882 = vrot.lane.b32.xlu0 %v2797, 8
        %v2883 = vpop.permute.xlu0 %2882
        %2884 = vrot.lane.b32.xlu0 %v2798, 8
        %v2885 = vpop.permute.xlu0 %2884
        %2886 = vrot.lane.b32.xlu0 %v2799, 8
        %v2887 = vpop.permute.xlu0 %2886
        %2888 = vrot.lane.b32.xlu0 %v2800, 8
        %v2889 = vpop.permute.xlu0 %2888
        %2890 = vrot.lane.b32.xlu0 %v2801, 8
        %v2891 = vpop.permute.xlu0 %2890
        %2892 = vrot.lane.b32.xlu0 %v2802, 8
        %v2893 = vpop.permute.xlu0 %2892
        %2894 = vrot.lane.b32.xlu0 %v2803, 8
        %v2895 = vpop.permute.xlu0 %2894
        %2896 = vrot.lane.b32.xlu0 %v2804, 8
        %v2897 = vpop.permute.xlu0 %2896
        %2898 = vrot.lane.b32.xlu0 %v2805, 8
        %v2899 = vpop.permute.xlu0 %2898
        %2900 = vrot.lane.b32.xlu0 %v2806, 8
        %v2901 = vpop.permute.xlu0 %2900
        %2902 = vrot.lane.b32.xlu0 %v2807, 8
        %v2903 = vpop.permute.xlu0 %2902
        %2936 = vst.msk [vmem:[#allocation3] sm:$0xff] %vm827, %v2841
        %2937 = vst.msk [vmem:[#allocation3 + $0x8] sm:$0xff] %vm827, %v2843
        %2938 = vst.msk [vmem:[#allocation3 + $0x10] sm:$0xff] %vm827, %v2845
        %2939 = vst.msk [vmem:[#allocation3 + $0x18] sm:$0xff] %vm827, %v2847
        %2940 = vst.msk [vmem:[#allocation3 + $0x20] sm:$0xff] %vm827, %v2849
        %2941 = vst.msk [vmem:[#allocation3 + $0x28] sm:$0xff] %vm827, %v2851
        %2942 = vst.msk [vmem:[#allocation3 + $0x30] sm:$0xff] %vm827, %v2853
        %2943 = vst.msk [vmem:[#allocation3 + $0x38] sm:$0xff] %vm827, %v2855
        %2944 = vst.msk [vmem:[#allocation3 + $0x40] sm:$0xff] %vm827, %v2857
        %2945 = vst.msk [vmem:[#allocation3 + $0x48] sm:$0xff] %vm827, %v2859
        %2946 = vst.msk [vmem:[#allocation3 + $0x50] sm:$0xff] %vm827, %v2861
        %2947 = vst.msk [vmem:[#allocation3 + $0x58] sm:$0xff] %vm827, %v2863
        %2948 = vst.msk [vmem:[#allocation3 + $0x60] sm:$0xff] %vm827, %v2865
        %2949 = vst.msk [vmem:[#allocation3 + $0x68] sm:$0xff] %vm827, %v2867
        %2950 = vst.msk [vmem:[#allocation3 + $0x70] sm:$0xff] %vm827, %v2869
        %2951 = vst.msk [vmem:[#allocation3 + $0x78] sm:$0xff] %vm827, %v2871
        %2952 = vst.msk [vmem:[#allocation3 + $0x80] sm:$0xff] %vm827, %v2873
        %2953 = vst.msk [vmem:[#allocation3 + $0x88] sm:$0xff] %vm827, %v2875
        %2954 = vst.msk [vmem:[#allocation3 + $0x90] sm:$0xff] %vm827, %v2877
        %2955 = vst.msk [vmem:[#allocation3 + $0x98] sm:$0xff] %vm827, %v2879
        %2956 = vst.msk [vmem:[#allocation3 + $0xa0] sm:$0xff] %vm827, %v2881
        %2957 = vst.msk [vmem:[#allocation3 + $0xa8] sm:$0xff] %vm827, %v2883
        %2958 = vst.msk [vmem:[#allocation3 + $0xb0] sm:$0xff] %vm827, %v2885
        %2959 = vst.msk [vmem:[#allocation3 + $0xb8] sm:$0xff] %vm827, %v2887
        %2960 = vst.msk [vmem:[#allocation3 + $0xc0] sm:$0xff] %vm827, %v2889
        %2961 = vst.msk [vmem:[#allocation3 + $0xc8] sm:$0xff] %vm827, %v2891
        %2962 = vst.msk [vmem:[#allocation3 + $0xd0] sm:$0xff] %vm827, %v2893
        %2963 = vst.msk [vmem:[#allocation3 + $0xd8] sm:$0xff] %vm827, %v2895
        %2964 = vst.msk [vmem:[#allocation3 + $0xe0] sm:$0xff] %vm827, %v2897
        %2965 = vst.msk [vmem:[#allocation3 + $0xe8] sm:$0xff] %vm827, %v2899
        %2966 = vst.msk [vmem:[#allocation3 + $0xf0] sm:$0xff] %vm827, %v2901
        %2967 = vst.msk [vmem:[#allocation3 + $0xf8] sm:$0xff] %vm827, %v2903
        %v2968 = vld [vmem:[#allocation2 + $0x2] sm:$0xff]
        %v2969 = vld [vmem:[#allocation2 + $0xa] sm:$0xff]
        %v2970 = vld [vmem:[#allocation2 + $0x1a] sm:$0xff]
        %v2971 = vld [vmem:[#allocation2 + $0x22] sm:$0xff]
        %v2972 = vld [vmem:[#allocation2 + $0x32] sm:$0xff]
        %v2973 = vld [vmem:[#allocation2 + $0x3a] sm:$0xff]
        %v2974 = vld [vmem:[#allocation2 + $0x4a] sm:$0xff]
        %v2975 = vld [vmem:[#allocation2 + $0x52] sm:$0xff]
        %v2976 = vld [vmem:[#allocation2 + $0x62] sm:$0xff]
        %v2977 = vld [vmem:[#allocation2 + $0x6a] sm:$0xff]
        %v2978 = vld [vmem:[#allocation2 + $0x7a] sm:$0xff]
        %v2979 = vld [vmem:[#allocation2 + $0x82] sm:$0xff]
        %v2980 = vld [vmem:[#allocation2 + $0x92] sm:$0xff]
        %v2981 = vld [vmem:[#allocation2 + $0x9a] sm:$0xff]
        %v2982 = vld [vmem:[#allocation2 + $0xaa] sm:$0xff]
        %v2983 = vld [vmem:[#allocation2 + $0xb2] sm:$0xff]
        %v2984 = vld [vmem:[#allocation2 + $0xc2] sm:$0xff]
        %v2985 = vld [vmem:[#allocation2 + $0xca] sm:$0xff]
        %v2986 = vld [vmem:[#allocation2 + $0xda] sm:$0xff]
        %v2987 = vld [vmem:[#allocation2 + $0xe2] sm:$0xff]
        %v2988 = vld [vmem:[#allocation2 + $0xf2] sm:$0xff]
        %v2989 = vld [vmem:[#allocation2 + $0xfa] sm:$0xff]
        %v2990 = vld [vmem:[#allocation2 + $0x10a] sm:$0xff]
        %v2991 = vld [vmem:[#allocation2 + $0x112] sm:$0xff]
        %v2992 = vld [vmem:[#allocation2 + $0x122] sm:$0xff]
        %v2993 = vld [vmem:[#allocation2 + $0x12a] sm:$0xff]
        %v2994 = vld [vmem:[#allocation2 + $0x13a] sm:$0xff]
        %v2995 = vld [vmem:[#allocation2 + $0x142] sm:$0xff]
        %v2996 = vld [vmem:[#allocation2 + $0x152] sm:$0xff]
        %v2997 = vld [vmem:[#allocation2 + $0x15a] sm:$0xff]
        %v2998 = vld [vmem:[#allocation2 + $0x16a] sm:$0xff]
        %v2999 = vld [vmem:[#allocation2 + $0x172] sm:$0xff]
        %3032 = vrot.lane.b32.xlu0 %v2968, 16
        %v3033 = vpop.permute.xlu0 %3032
        %3034 = vrot.lane.b32.xlu0 %v2969, 16
        %v3035 = vpop.permute.xlu0 %3034
        %3036 = vrot.lane.b32.xlu0 %v2970, 16
        %v3037 = vpop.permute.xlu0 %3036
        %3038 = vrot.lane.b32.xlu0 %v2971, 16
        %v3039 = vpop.permute.xlu0 %3038
        %3040 = vrot.lane.b32.xlu0 %v2972, 16
        %v3041 = vpop.permute.xlu0 %3040
        %3042 = vrot.lane.b32.xlu0 %v2973, 16
        %v3043 = vpop.permute.xlu0 %3042
        %3044 = vrot.lane.b32.xlu0 %v2974, 16
        %v3045 = vpop.permute.xlu0 %3044
        %3046 = vrot.lane.b32.xlu0 %v2975, 16
        %v3047 = vpop.permute.xlu0 %3046
        %3048 = vrot.lane.b32.xlu0 %v2976, 16
        %v3049 = vpop.permute.xlu0 %3048
        %3050 = vrot.lane.b32.xlu0 %v2977, 16
        %v3051 = vpop.permute.xlu0 %3050
        %3052 = vrot.lane.b32.xlu0 %v2978, 16
        %v3053 = vpop.permute.xlu0 %3052
        %3054 = vrot.lane.b32.xlu0 %v2979, 16
        %v3055 = vpop.permute.xlu0 %3054
        %3056 = vrot.lane.b32.xlu0 %v2980, 16
        %v3057 = vpop.permute.xlu0 %3056
        %3058 = vrot.lane.b32.xlu0 %v2981, 16
        %v3059 = vpop.permute.xlu0 %3058
        %3060 = vrot.lane.b32.xlu0 %v2982, 16
        %v3061 = vpop.permute.xlu0 %3060
        %3062 = vrot.lane.b32.xlu0 %v2983, 16
        %v3063 = vpop.permute.xlu0 %3062
        %3064 = vrot.lane.b32.xlu0 %v2984, 16
        %v3065 = vpop.permute.xlu0 %3064
        %3066 = vrot.lane.b32.xlu0 %v2985, 16
        %v3067 = vpop.permute.xlu0 %3066
        %3068 = vrot.lane.b32.xlu0 %v2986, 16
        %v3069 = vpop.permute.xlu0 %3068
        %3070 = vrot.lane.b32.xlu0 %v2987, 16
        %v3071 = vpop.permute.xlu0 %3070
        %3072 = vrot.lane.b32.xlu0 %v2988, 16
        %v3073 = vpop.permute.xlu0 %3072
        %3074 = vrot.lane.b32.xlu0 %v2989, 16
        %v3075 = vpop.permute.xlu0 %3074
        %3076 = vrot.lane.b32.xlu0 %v2990, 16
        %v3077 = vpop.permute.xlu0 %3076
        %3078 = vrot.lane.b32.xlu0 %v2991, 16
        %v3079 = vpop.permute.xlu0 %3078
        %3080 = vrot.lane.b32.xlu0 %v2992, 16
        %v3081 = vpop.permute.xlu0 %3080
        %3082 = vrot.lane.b32.xlu0 %v2993, 16
        %v3083 = vpop.permute.xlu0 %3082
        %3084 = vrot.lane.b32.xlu0 %v2994, 16
        %v3085 = vpop.permute.xlu0 %3084
        %3086 = vrot.lane.b32.xlu0 %v2995, 16
        %v3087 = vpop.permute.xlu0 %3086
        %3088 = vrot.lane.b32.xlu0 %v2996, 16
        %v3089 = vpop.permute.xlu0 %3088
        %3090 = vrot.lane.b32.xlu0 %v2997, 16
        %v3091 = vpop.permute.xlu0 %3090
        %3092 = vrot.lane.b32.xlu0 %v2998, 16
        %v3093 = vpop.permute.xlu0 %3092
        %3094 = vrot.lane.b32.xlu0 %v2999, 16
        %v3095 = vpop.permute.xlu0 %3094
        %3128 = vst.msk [vmem:[#allocation3] sm:$0xff] %vm1020, %v3033
        %3129 = vst.msk [vmem:[#allocation3 + $0x8] sm:$0xff] %vm1020, %v3035
        %3130 = vst.msk [vmem:[#allocation3 + $0x10] sm:$0xff] %vm1020, %v3037
        %3131 = vst.msk [vmem:[#allocation3 + $0x18] sm:$0xff] %vm1020, %v3039
        %3132 = vst.msk [vmem:[#allocation3 + $0x20] sm:$0xff] %vm1020, %v3041
        %3133 = vst.msk [vmem:[#allocation3 + $0x28] sm:$0xff] %vm1020, %v3043
        %3134 = vst.msk [vmem:[#allocation3 + $0x30] sm:$0xff] %vm1020, %v3045
        %3135 = vst.msk [vmem:[#allocation3 + $0x38] sm:$0xff] %vm1020, %v3047
        %3136 = vst.msk [vmem:[#allocation3 + $0x40] sm:$0xff] %vm1020, %v3049
        %3137 = vst.msk [vmem:[#allocation3 + $0x48] sm:$0xff] %vm1020, %v3051
        %3138 = vst.msk [vmem:[#allocation3 + $0x50] sm:$0xff] %vm1020, %v3053
        %3139 = vst.msk [vmem:[#allocation3 + $0x58] sm:$0xff] %vm1020, %v3055
        %3140 = vst.msk [vmem:[#allocation3 + $0x60] sm:$0xff] %vm1020, %v3057
        %3141 = vst.msk [vmem:[#allocation3 + $0x68] sm:$0xff] %vm1020, %v3059
        %3142 = vst.msk [vmem:[#allocation3 + $0x70] sm:$0xff] %vm1020, %v3061
        %3143 = vst.msk [vmem:[#allocation3 + $0x78] sm:$0xff] %vm1020, %v3063
        %3144 = vst.msk [vmem:[#allocation3 + $0x80] sm:$0xff] %vm1020, %v3065
        %3145 = vst.msk [vmem:[#allocation3 + $0x88] sm:$0xff] %vm1020, %v3067
        %3146 = vst.msk [vmem:[#allocation3 + $0x90] sm:$0xff] %vm1020, %v3069
        %3147 = vst.msk [vmem:[#allocation3 + $0x98] sm:$0xff] %vm1020, %v3071
        %3148 = vst.msk [vmem:[#allocation3 + $0xa0] sm:$0xff] %vm1020, %v3073
        %3149 = vst.msk [vmem:[#allocation3 + $0xa8] sm:$0xff] %vm1020, %v3075
        %3150 = vst.msk [vmem:[#allocation3 + $0xb0] sm:$0xff] %vm1020, %v3077
        %3151 = vst.msk [vmem:[#allocation3 + $0xb8] sm:$0xff] %vm1020, %v3079
        %3152 = vst.msk [vmem:[#allocation3 + $0xc0] sm:$0xff] %vm1020, %v3081
        %3153 = vst.msk [vmem:[#allocation3 + $0xc8] sm:$0xff] %vm1020, %v3083
        %3154 = vst.msk [vmem:[#allocation3 + $0xd0] sm:$0xff] %vm1020, %v3085
        %3155 = vst.msk [vmem:[#allocation3 + $0xd8] sm:$0xff] %vm1020, %v3087
        %3156 = vst.msk [vmem:[#allocation3 + $0xe0] sm:$0xff] %vm1020, %v3089
        %3157 = vst.msk [vmem:[#allocation3 + $0xe8] sm:$0xff] %vm1020, %v3091
        %3158 = vst.msk [vmem:[#allocation3 + $0xf0] sm:$0xff] %vm1020, %v3093
        %3159 = vst.msk [vmem:[#allocation3 + $0xf8] sm:$0xff] %vm1020, %v3095
        %v3160 = vld [vmem:[%s570] sm:$0xff]
        %v3161 = vld [vmem:[%s570 + $0x8] sm:$0xff]
        %v3162 = vld [vmem:[%s570 + $0x18] sm:$0xff]
        %v3163 = vld [vmem:[%s570 + $0x20] sm:$0xff]
        %v3164 = vld [vmem:[%s570 + $0x30] sm:$0xff]
        %v3165 = vld [vmem:[%s570 + $0x38] sm:$0xff]
        %v3166 = vld [vmem:[%s570 + $0x48] sm:$0xff]
        %v3167 = vld [vmem:[%s570 + $0x50] sm:$0xff]
        %v3168 = vld [vmem:[%s570 + $0x60] sm:$0xff]
        %v3169 = vld [vmem:[%s570 + $0x68] sm:$0xff]
        %v3170 = vld [vmem:[%s570 + $0x78] sm:$0xff]
        %v3171 = vld [vmem:[%s570 + $0x80] sm:$0xff]
        %v3172 = vld [vmem:[%s570 + $0x90] sm:$0xff]
        %v3173 = vld [vmem:[%s570 + $0x98] sm:$0xff]
        %v3174 = vld [vmem:[%s570 + $0xa8] sm:$0xff]
        %v3175 = vld [vmem:[%s570 + $0xb0] sm:$0xff]
        %v3176 = vld [vmem:[%s570 + $0xc0] sm:$0xff]
        %v3177 = vld [vmem:[%s570 + $0xc8] sm:$0xff]
        %v3178 = vld [vmem:[%s570 + $0xd8] sm:$0xff]
        %v3179 = vld [vmem:[%s570 + $0xe0] sm:$0xff]
        %v3180 = vld [vmem:[%s570 + $0xf0] sm:$0xff]
        %v3181 = vld [vmem:[%s570 + $0xf8] sm:$0xff]
        %v3182 = vld [vmem:[%s570 + $0x108] sm:$0xff]
        %v3183 = vld [vmem:[%s570 + $0x110] sm:$0xff]
        %v3184 = vld [vmem:[%s570 + $0x120] sm:$0xff]
        %v3185 = vld [vmem:[%s570 + $0x128] sm:$0xff]
        %v3186 = vld [vmem:[%s570 + $0x138] sm:$0xff]
        %v3187 = vld [vmem:[%s570 + $0x140] sm:$0xff]
        %v3188 = vld [vmem:[%s570 + $0x150] sm:$0xff]
        %v3189 = vld [vmem:[%s570 + $0x158] sm:$0xff]
        %v3190 = vld [vmem:[%s570 + $0x168] sm:$0xff]
        %v3191 = vld [vmem:[%s570 + $0x170] sm:$0xff]
        %3224 = vrot.lane.b32.xlu0 %v3160, 24
        %v3225 = vpop.permute.xlu0 %3224
        %3226 = vrot.lane.b32.xlu0 %v3161, 24
        %v3227 = vpop.permute.xlu0 %3226
        %3228 = vrot.lane.b32.xlu0 %v3162, 24
        %v3229 = vpop.permute.xlu0 %3228
        %3230 = vrot.lane.b32.xlu0 %v3163, 24
        %v3231 = vpop.permute.xlu0 %3230
        %3232 = vrot.lane.b32.xlu0 %v3164, 24
        %v3233 = vpop.permute.xlu0 %3232
        %3234 = vrot.lane.b32.xlu0 %v3165, 24
        %v3235 = vpop.permute.xlu0 %3234
        %3236 = vrot.lane.b32.xlu0 %v3166, 24
        %v3237 = vpop.permute.xlu0 %3236
        %3238 = vrot.lane.b32.xlu0 %v3167, 24
        %v3239 = vpop.permute.xlu0 %3238
        %3240 = vrot.lane.b32.xlu0 %v3168, 24
        %v3241 = vpop.permute.xlu0 %3240
        %3242 = vrot.lane.b32.xlu0 %v3169, 24
        %v3243 = vpop.permute.xlu0 %3242
        %3244 = vrot.lane.b32.xlu0 %v3170, 24
        %v3245 = vpop.permute.xlu0 %3244
        %3246 = vrot.lane.b32.xlu0 %v3171, 24
        %v3247 = vpop.permute.xlu0 %3246
        %3248 = vrot.lane.b32.xlu0 %v3172, 24
        %v3249 = vpop.permute.xlu0 %3248
        %3250 = vrot.lane.b32.xlu0 %v3173, 24
        %v3251 = vpop.permute.xlu0 %3250
        %3252 = vrot.lane.b32.xlu0 %v3174, 24
        %v3253 = vpop.permute.xlu0 %3252
        %3254 = vrot.lane.b32.xlu0 %v3175, 24
        %v3255 = vpop.permute.xlu0 %3254
        %3256 = vrot.lane.b32.xlu0 %v3176, 24
        %v3257 = vpop.permute.xlu0 %3256
        %3258 = vrot.lane.b32.xlu0 %v3177, 24
        %v3259 = vpop.permute.xlu0 %3258
        %3260 = vrot.lane.b32.xlu0 %v3178, 24
        %v3261 = vpop.permute.xlu0 %3260
        %3262 = vrot.lane.b32.xlu0 %v3179, 24
        %v3263 = vpop.permute.xlu0 %3262
        %3264 = vrot.lane.b32.xlu0 %v3180, 24
        %v3265 = vpop.permute.xlu0 %3264
        %3266 = vrot.lane.b32.xlu0 %v3181, 24
        %v3267 = vpop.permute.xlu0 %3266
        %3268 = vrot.lane.b32.xlu0 %v3182, 24
        %v3269 = vpop.permute.xlu0 %3268
        %3270 = vrot.lane.b32.xlu0 %v3183, 24
        %v3271 = vpop.permute.xlu0 %3270
        %3272 = vrot.lane.b32.xlu0 %v3184, 24
        %v3273 = vpop.permute.xlu0 %3272
        %3274 = vrot.lane.b32.xlu0 %v3185, 24
        %v3275 = vpop.permute.xlu0 %3274
        %3276 = vrot.lane.b32.xlu0 %v3186, 24
        %v3277 = vpop.permute.xlu0 %3276
        %3278 = vrot.lane.b32.xlu0 %v3187, 24
        %v3279 = vpop.permute.xlu0 %3278
        %3280 = vrot.lane.b32.xlu0 %v3188, 24
        %v3281 = vpop.permute.xlu0 %3280
        %3282 = vrot.lane.b32.xlu0 %v3189, 24
        %v3283 = vpop.permute.xlu0 %3282
        %3284 = vrot.lane.b32.xlu0 %v3190, 24
        %v3285 = vpop.permute.xlu0 %3284
        %3286 = vrot.lane.b32.xlu0 %v3191, 24
        %v3287 = vpop.permute.xlu0 %3286
        %3320 = vst.msk [vmem:[#allocation3] sm:$0xff] %vm1213, %v3225
        %3321 = vst.msk [vmem:[#allocation3 + $0x8] sm:$0xff] %vm1213, %v3227
        %3322 = vst.msk [vmem:[#allocation3 + $0x10] sm:$0xff] %vm1213, %v3229
        %3323 = vst.msk [vmem:[#allocation3 + $0x18] sm:$0xff] %vm1213, %v3231
        %3324 = vst.msk [vmem:[#allocation3 + $0x20] sm:$0xff] %vm1213, %v3233
        %3325 = vst.msk [vmem:[#allocation3 + $0x28] sm:$0xff] %vm1213, %v3235
        %3326 = vst.msk [vmem:[#allocation3 + $0x30] sm:$0xff] %vm1213, %v3237
        %3327 = vst.msk [vmem:[#allocation3 + $0x38] sm:$0xff] %vm1213, %v3239
        %3328 = vst.msk [vmem:[#allocation3 + $0x40] sm:$0xff] %vm1213, %v3241
        %3329 = vst.msk [vmem:[#allocation3 + $0x48] sm:$0xff] %vm1213, %v3243
        %3330 = vst.msk [vmem:[#allocation3 + $0x50] sm:$0xff] %vm1213, %v3245
        %3331 = vst.msk [vmem:[#allocation3 + $0x58] sm:$0xff] %vm1213, %v3247
        %3332 = vst.msk [vmem:[#allocation3 + $0x60] sm:$0xff] %vm1213, %v3249
        %3333 = vst.msk [vmem:[#allocation3 + $0x68] sm:$0xff] %vm1213, %v3251
        %3334 = vst.msk [vmem:[#allocation3 + $0x70] sm:$0xff] %vm1213, %v3253
        %3335 = vst.msk [vmem:[#allocation3 + $0x78] sm:$0xff] %vm1213, %v3255
        %3336 = vst.msk [vmem:[#allocation3 + $0x80] sm:$0xff] %vm1213, %v3257
        %3337 = vst.msk [vmem:[#allocation3 + $0x88] sm:$0xff] %vm1213, %v3259
        %3338 = vst.msk [vmem:[#allocation3 + $0x90] sm:$0xff] %vm1213, %v3261
        %3339 = vst.msk [vmem:[#allocation3 + $0x98] sm:$0xff] %vm1213, %v3263
        %3340 = vst.msk [vmem:[#allocation3 + $0xa0] sm:$0xff] %vm1213, %v3265
        %3341 = vst.msk [vmem:[#allocation3 + $0xa8] sm:$0xff] %vm1213, %v3267
        %3342 = vst.msk [vmem:[#allocation3 + $0xb0] sm:$0xff] %vm1213, %v3269
        %3343 = vst.msk [vmem:[#allocation3 + $0xb8] sm:$0xff] %vm1213, %v3271
        %3344 = vst.msk [vmem:[#allocation3 + $0xc0] sm:$0xff] %vm1213, %v3273
        %3345 = vst.msk [vmem:[#allocation3 + $0xc8] sm:$0xff] %vm1213, %v3275
        %3346 = vst.msk [vmem:[#allocation3 + $0xd0] sm:$0xff] %vm1213, %v3277
        %3347 = vst.msk [vmem:[#allocation3 + $0xd8] sm:$0xff] %vm1213, %v3279
        %3348 = vst.msk [vmem:[#allocation3 + $0xe0] sm:$0xff] %vm1213, %v3281
        %3349 = vst.msk [vmem:[#allocation3 + $0xe8] sm:$0xff] %vm1213, %v3283
        %3350 = vst.msk [vmem:[#allocation3 + $0xf0] sm:$0xff] %vm1213, %v3285
        %3351 = vst.msk [vmem:[#allocation3 + $0xf8] sm:$0xff] %vm1213, %v3287
        %v3352 = vld [vmem:[%s570 + $0x1] sm:$0xff]
        %v3353 = vld [vmem:[%s570 + $0x9] sm:$0xff]
        %v3354 = vld [vmem:[%s570 + $0x19] sm:$0xff]
        %v3355 = vld [vmem:[%s570 + $0x21] sm:$0xff]
        %v3356 = vld [vmem:[%s570 + $0x31] sm:$0xff]
        %v3357 = vld [vmem:[%s570 + $0x39] sm:$0xff]
        %v3358 = vld [vmem:[%s570 + $0x49] sm:$0xff]
        %v3359 = vld [vmem:[%s570 + $0x51] sm:$0xff]
        %v3360 = vld [vmem:[%s570 + $0x61] sm:$0xff]
        %v3361 = vld [vmem:[%s570 + $0x69] sm:$0xff]
        %v3362 = vld [vmem:[%s570 + $0x79] sm:$0xff]
        %v3363 = vld [vmem:[%s570 + $0x81] sm:$0xff]
        %v3364 = vld [vmem:[%s570 + $0x91] sm:$0xff]
        %v3365 = vld [vmem:[%s570 + $0x99] sm:$0xff]
        %v3366 = vld [vmem:[%s570 + $0xa9] sm:$0xff]
        %v3367 = vld [vmem:[%s570 + $0xb1] sm:$0xff]
        %v3368 = vld [vmem:[%s570 + $0xc1] sm:$0xff]
        %v3369 = vld [vmem:[%s570 + $0xc9] sm:$0xff]
        %v3370 = vld [vmem:[%s570 + $0xd9] sm:$0xff]
        %v3371 = vld [vmem:[%s570 + $0xe1] sm:$0xff]
        %v3372 = vld [vmem:[%s570 + $0xf1] sm:$0xff]
        %v3373 = vld [vmem:[%s570 + $0xf9] sm:$0xff]
        %v3374 = vld [vmem:[%s570 + $0x109] sm:$0xff]
        %v3375 = vld [vmem:[%s570 + $0x111] sm:$0xff]
        %v3376 = vld [vmem:[%s570 + $0x121] sm:$0xff]
        %v3377 = vld [vmem:[%s570 + $0x129] sm:$0xff]
        %v3378 = vld [vmem:[%s570 + $0x139] sm:$0xff]
        %v3379 = vld [vmem:[%s570 + $0x141] sm:$0xff]
        %v3380 = vld [vmem:[%s570 + $0x151] sm:$0xff]
        %v3381 = vld [vmem:[%s570 + $0x159] sm:$0xff]
        %v3382 = vld [vmem:[%s570 + $0x169] sm:$0xff]
        %v3383 = vld [vmem:[%s570 + $0x171] sm:$0xff]
        %3416 = vrot.lane.b32.xlu0 %v3352, 32
        %v3417 = vpop.permute.xlu0 %3416
        %3418 = vrot.lane.b32.xlu0 %v3353, 32
        %v3419 = vpop.permute.xlu0 %3418
        %3420 = vrot.lane.b32.xlu0 %v3354, 32
        %v3421 = vpop.permute.xlu0 %3420
        %3422 = vrot.lane.b32.xlu0 %v3355, 32
        %v3423 = vpop.permute.xlu0 %3422
        %3424 = vrot.lane.b32.xlu0 %v3356, 32
        %v3425 = vpop.permute.xlu0 %3424
        %3426 = vrot.lane.b32.xlu0 %v3357, 32
        %v3427 = vpop.permute.xlu0 %3426
        %3428 = vrot.lane.b32.xlu0 %v3358, 32
        %v3429 = vpop.permute.xlu0 %3428
        %3430 = vrot.lane.b32.xlu0 %v3359, 32
        %v3431 = vpop.permute.xlu0 %3430
        %3432 = vrot.lane.b32.xlu0 %v3360, 32
        %v3433 = vpop.permute.xlu0 %3432
        %3434 = vrot.lane.b32.xlu0 %v3361, 32
        %v3435 = vpop.permute.xlu0 %3434
        %3436 = vrot.lane.b32.xlu0 %v3362, 32
        %v3437 = vpop.permute.xlu0 %3436
        %3438 = vrot.lane.b32.xlu0 %v3363, 32
        %v3439 = vpop.permute.xlu0 %3438
        %3440 = vrot.lane.b32.xlu0 %v3364, 32
        %v3441 = vpop.permute.xlu0 %3440
        %3442 = vrot.lane.b32.xlu0 %v3365, 32
        %v3443 = vpop.permute.xlu0 %3442
        %3444 = vrot.lane.b32.xlu0 %v3366, 32
        %v3445 = vpop.permute.xlu0 %3444
        %3446 = vrot.lane.b32.xlu0 %v3367, 32
        %v3447 = vpop.permute.xlu0 %3446
        %3448 = vrot.lane.b32.xlu0 %v3368, 32
        %v3449 = vpop.permute.xlu0 %3448
        %3450 = vrot.lane.b32.xlu0 %v3369, 32
        %v3451 = vpop.permute.xlu0 %3450
        %3452 = vrot.lane.b32.xlu0 %v3370, 32
        %v3453 = vpop.permute.xlu0 %3452
        %3454 = vrot.lane.b32.xlu0 %v3371, 32
        %v3455 = vpop.permute.xlu0 %3454
        %3456 = vrot.lane.b32.xlu0 %v3372, 32
        %v3457 = vpop.permute.xlu0 %3456
        %3458 = vrot.lane.b32.xlu0 %v3373, 32
        %v3459 = vpop.permute.xlu0 %3458
        %3460 = vrot.lane.b32.xlu0 %v3374, 32
        %v3461 = vpop.permute.xlu0 %3460
        %3462 = vrot.lane.b32.xlu0 %v3375, 32
        %v3463 = vpop.permute.xlu0 %3462
        %3464 = vrot.lane.b32.xlu0 %v3376, 32
        %v3465 = vpop.permute.xlu0 %3464
        %3466 = vrot.lane.b32.xlu0 %v3377, 32
        %v3467 = vpop.permute.xlu0 %3466
        %3468 = vrot.lane.b32.xlu0 %v3378, 32
        %v3469 = vpop.permute.xlu0 %3468
        %3470 = vrot.lane.b32.xlu0 %v3379, 32
        %v3471 = vpop.permute.xlu0 %3470
        %3472 = vrot.lane.b32.xlu0 %v3380, 32
        %v3473 = vpop.permute.xlu0 %3472
        %3474 = vrot.lane.b32.xlu0 %v3381, 32
        %v3475 = vpop.permute.xlu0 %3474
        %3476 = vrot.lane.b32.xlu0 %v3382, 32
        %v3477 = vpop.permute.xlu0 %3476
        %3478 = vrot.lane.b32.xlu0 %v3383, 32
        %v3479 = vpop.permute.xlu0 %3478
        %3512 = vst.msk [vmem:[#allocation3] sm:$0xff] %vm1406, %v3417
        %3513 = vst.msk [vmem:[#allocation3 + $0x8] sm:$0xff] %vm1406, %v3419
        %3514 = vst.msk [vmem:[#allocation3 + $0x10] sm:$0xff] %vm1406, %v3421
        %3515 = vst.msk [vmem:[#allocation3 + $0x18] sm:$0xff] %vm1406, %v3423
        %3516 = vst.msk [vmem:[#allocation3 + $0x20] sm:$0xff] %vm1406, %v3425
        %3517 = vst.msk [vmem:[#allocation3 + $0x28] sm:$0xff] %vm1406, %v3427
        %3518 = vst.msk [vmem:[#allocation3 + $0x30] sm:$0xff] %vm1406, %v3429
        %3519 = vst.msk [vmem:[#allocation3 + $0x38] sm:$0xff] %vm1406, %v3431
        %3520 = vst.msk [vmem:[#allocation3 + $0x40] sm:$0xff] %vm1406, %v3433
        %3521 = vst.msk [vmem:[#allocation3 + $0x48] sm:$0xff] %vm1406, %v3435
        %3522 = vst.msk [vmem:[#allocation3 + $0x50] sm:$0xff] %vm1406, %v3437
        %3523 = vst.msk [vmem:[#allocation3 + $0x58] sm:$0xff] %vm1406, %v3439
        %3524 = vst.msk [vmem:[#allocation3 + $0x60] sm:$0xff] %vm1406, %v3441
        %3525 = vst.msk [vmem:[#allocation3 + $0x68] sm:$0xff] %vm1406, %v3443
        %3526 = vst.msk [vmem:[#allocation3 + $0x70] sm:$0xff] %vm1406, %v3445
        %3527 = vst.msk [vmem:[#allocation3 + $0x78] sm:$0xff] %vm1406, %v3447
        %3528 = vst.msk [vmem:[#allocation3 + $0x80] sm:$0xff] %vm1406, %v3449
        %3529 = vst.msk [vmem:[#allocation3 + $0x88] sm:$0xff] %vm1406, %v3451
        %3530 = vst.msk [vmem:[#allocation3 + $0x90] sm:$0xff] %vm1406, %v3453
        %3531 = vst.msk [vmem:[#allocation3 + $0x98] sm:$0xff] %vm1406, %v3455
        %3532 = vst.msk [vmem:[#allocation3 + $0xa0] sm:$0xff] %vm1406, %v3457
        %3533 = vst.msk [vmem:[#allocation3 + $0xa8] sm:$0xff] %vm1406, %v3459
        %3534 = vst.msk [vmem:[#allocation3 + $0xb0] sm:$0xff] %vm1406, %v3461
        %3535 = vst.msk [vmem:[#allocation3 + $0xb8] sm:$0xff] %vm1406, %v3463
        %3536 = vst.msk [vmem:[#allocation3 + $0xc0] sm:$0xff] %vm1406, %v3465
        %3537 = vst.msk [vmem:[#allocation3 + $0xc8] sm:$0xff] %vm1406, %v3467
        %3538 = vst.msk [vmem:[#allocation3 + $0xd0] sm:$0xff] %vm1406, %v3469
        %3539 = vst.msk [vmem:[#allocation3 + $0xd8] sm:$0xff] %vm1406, %v3471
        %3540 = vst.msk [vmem:[#allocation3 + $0xe0] sm:$0xff] %vm1406, %v3473
        %3541 = vst.msk [vmem:[#allocation3 + $0xe8] sm:$0xff] %vm1406, %v3475
        %3542 = vst.msk [vmem:[#allocation3 + $0xf0] sm:$0xff] %vm1406, %v3477
        %3543 = vst.msk [vmem:[#allocation3 + $0xf8] sm:$0xff] %vm1406, %v3479
        %v3544 = vld [vmem:[%s570 + $0x2] sm:$0xff]
        %v3545 = vld [vmem:[%s570 + $0xa] sm:$0xff]
        %v3546 = vld [vmem:[%s570 + $0x1a] sm:$0xff]
        %v3547 = vld [vmem:[%s570 + $0x22] sm:$0xff]
        %v3548 = vld [vmem:[%s570 + $0x32] sm:$0xff]
        %v3549 = vld [vmem:[%s570 + $0x3a] sm:$0xff]
        %v3550 = vld [vmem:[%s570 + $0x4a] sm:$0xff]
        %v3551 = vld [vmem:[%s570 + $0x52] sm:$0xff]
        %v3552 = vld [vmem:[%s570 + $0x62] sm:$0xff]
        %v3553 = vld [vmem:[%s570 + $0x6a] sm:$0xff]
        %v3554 = vld [vmem:[%s570 + $0x7a] sm:$0xff]
        %v3555 = vld [vmem:[%s570 + $0x82] sm:$0xff]
        %v3556 = vld [vmem:[%s570 + $0x92] sm:$0xff]
        %v3557 = vld [vmem:[%s570 + $0x9a] sm:$0xff]
        %v3558 = vld [vmem:[%s570 + $0xaa] sm:$0xff]
        %v3559 = vld [vmem:[%s570 + $0xb2] sm:$0xff]
        %v3560 = vld [vmem:[%s570 + $0xc2] sm:$0xff]
        %v3561 = vld [vmem:[%s570 + $0xca] sm:$0xff]
        %v3562 = vld [vmem:[%s570 + $0xda] sm:$0xff]
        %v3563 = vld [vmem:[%s570 + $0xe2] sm:$0xff]
        %v3564 = vld [vmem:[%s570 + $0xf2] sm:$0xff]
        %v3565 = vld [vmem:[%s570 + $0xfa] sm:$0xff]
        %v3566 = vld [vmem:[%s570 + $0x10a] sm:$0xff]
        %v3567 = vld [vmem:[%s570 + $0x112] sm:$0xff]
        %v3568 = vld [vmem:[%s570 + $0x122] sm:$0xff]
        %v3569 = vld [vmem:[%s570 + $0x12a] sm:$0xff]
        %v3570 = vld [vmem:[%s570 + $0x13a] sm:$0xff]
        %v3571 = vld [vmem:[%s570 + $0x142] sm:$0xff]
        %v3572 = vld [vmem:[%s570 + $0x152] sm:$0xff]
        %v3573 = vld [vmem:[%s570 + $0x15a] sm:$0xff]
        %v3574 = vld [vmem:[%s570 + $0x16a] sm:$0xff]
        %v3575 = vld [vmem:[%s570 + $0x172] sm:$0xff]
        %3608 = vrot.lane.b32.xlu0 %v3544, 40
        %v3609 = vpop.permute.xlu0 %3608
        %3610 = vrot.lane.b32.xlu0 %v3545, 40
        %v3611 = vpop.permute.xlu0 %3610
        %3612 = vrot.lane.b32.xlu0 %v3546, 40
        %v3613 = vpop.permute.xlu0 %3612
        %3614 = vrot.lane.b32.xlu0 %v3547, 40
        %v3615 = vpop.permute.xlu0 %3614
        %3616 = vrot.lane.b32.xlu0 %v3548, 40
        %v3617 = vpop.permute.xlu0 %3616
        %3618 = vrot.lane.b32.xlu0 %v3549, 40
        %v3619 = vpop.permute.xlu0 %3618
        %3620 = vrot.lane.b32.xlu0 %v3550, 40
        %v3621 = vpop.permute.xlu0 %3620
        %3622 = vrot.lane.b32.xlu0 %v3551, 40
        %v3623 = vpop.permute.xlu0 %3622
        %3624 = vrot.lane.b32.xlu0 %v3552, 40
        %v3625 = vpop.permute.xlu0 %3624
        %3626 = vrot.lane.b32.xlu0 %v3553, 40
        %v3627 = vpop.permute.xlu0 %3626
        %3628 = vrot.lane.b32.xlu0 %v3554, 40
        %v3629 = vpop.permute.xlu0 %3628
        %3630 = vrot.lane.b32.xlu0 %v3555, 40
        %v3631 = vpop.permute.xlu0 %3630
        %3632 = vrot.lane.b32.xlu0 %v3556, 40
        %v3633 = vpop.permute.xlu0 %3632
        %3634 = vrot.lane.b32.xlu0 %v3557, 40
        %v3635 = vpop.permute.xlu0 %3634
        %3636 = vrot.lane.b32.xlu0 %v3558, 40
        %v3637 = vpop.permute.xlu0 %3636
        %3638 = vrot.lane.b32.xlu0 %v3559, 40
        %v3639 = vpop.permute.xlu0 %3638
        %3640 = vrot.lane.b32.xlu0 %v3560, 40
        %v3641 = vpop.permute.xlu0 %3640
        %3642 = vrot.lane.b32.xlu0 %v3561, 40
        %v3643 = vpop.permute.xlu0 %3642
        %3644 = vrot.lane.b32.xlu0 %v3562, 40
        %v3645 = vpop.permute.xlu0 %3644
        %3646 = vrot.lane.b32.xlu0 %v3563, 40
        %v3647 = vpop.permute.xlu0 %3646
        %3648 = vrot.lane.b32.xlu0 %v3564, 40
        %v3649 = vpop.permute.xlu0 %3648
        %3650 = vrot.lane.b32.xlu0 %v3565, 40
        %v3651 = vpop.permute.xlu0 %3650
        %3652 = vrot.lane.b32.xlu0 %v3566, 40
        %v3653 = vpop.permute.xlu0 %3652
        %3654 = vrot.lane.b32.xlu0 %v3567, 40
        %v3655 = vpop.permute.xlu0 %3654
        %3656 = vrot.lane.b32.xlu0 %v3568, 40
        %v3657 = vpop.permute.xlu0 %3656
        %3658 = vrot.lane.b32.xlu0 %v3569, 40
        %v3659 = vpop.permute.xlu0 %3658
        %3660 = vrot.lane.b32.xlu0 %v3570, 40
        %v3661 = vpop.permute.xlu0 %3660
        %3662 = vrot.lane.b32.xlu0 %v3571, 40
        %v3663 = vpop.permute.xlu0 %3662
        %3664 = vrot.lane.b32.xlu0 %v3572, 40
        %v3665 = vpop.permute.xlu0 %3664
        %3666 = vrot.lane.b32.xlu0 %v3573, 40
        %v3667 = vpop.permute.xlu0 %3666
        %3668 = vrot.lane.b32.xlu0 %v3574, 40
        %v3669 = vpop.permute.xlu0 %3668
        %3670 = vrot.lane.b32.xlu0 %v3575, 40
        %v3671 = vpop.permute.xlu0 %3670
        %3704 = vst.msk [vmem:[#allocation3] sm:$0xff] %vm1599, %v3609
        %3705 = vst.msk [vmem:[#allocation3 + $0x8] sm:$0xff] %vm1599, %v3611
        %3706 = vst.msk [vmem:[#allocation3 + $0x10] sm:$0xff] %vm1599, %v3613
        %3707 = vst.msk [vmem:[#allocation3 + $0x18] sm:$0xff] %vm1599, %v3615
        %3708 = vst.msk [vmem:[#allocation3 + $0x20] sm:$0xff] %vm1599, %v3617
        %3709 = vst.msk [vmem:[#allocation3 + $0x28] sm:$0xff] %vm1599, %v3619
        %3710 = vst.msk [vmem:[#allocation3 + $0x30] sm:$0xff] %vm1599, %v3621
        %3711 = vst.msk [vmem:[#allocation3 + $0x38] sm:$0xff] %vm1599, %v3623
        %3712 = vst.msk [vmem:[#allocation3 + $0x40] sm:$0xff] %vm1599, %v3625
        %3713 = vst.msk [vmem:[#allocation3 + $0x48] sm:$0xff] %vm1599, %v3627
        %3714 = vst.msk [vmem:[#allocation3 + $0x50] sm:$0xff] %vm1599, %v3629
        %3715 = vst.msk [vmem:[#allocation3 + $0x58] sm:$0xff] %vm1599, %v3631
        %3716 = vst.msk [vmem:[#allocation3 + $0x60] sm:$0xff] %vm1599, %v3633
        %3717 = vst.msk [vmem:[#allocation3 + $0x68] sm:$0xff] %vm1599, %v3635
        %3718 = vst.msk [vmem:[#allocation3 + $0x70] sm:$0xff] %vm1599, %v3637
        %3719 = vst.msk [vmem:[#allocation3 + $0x78] sm:$0xff] %vm1599, %v3639
        %3720 = vst.msk [vmem:[#allocation3 + $0x80] sm:$0xff] %vm1599, %v3641
        %3721 = vst.msk [vmem:[#allocation3 + $0x88] sm:$0xff] %vm1599, %v3643
        %3722 = vst.msk [vmem:[#allocation3 + $0x90] sm:$0xff] %vm1599, %v3645
        %3723 = vst.msk [vmem:[#allocation3 + $0x98] sm:$0xff] %vm1599, %v3647
        %3724 = vst.msk [vmem:[#allocation3 + $0xa0] sm:$0xff] %vm1599, %v3649
        %3725 = vst.msk [vmem:[#allocation3 + $0xa8] sm:$0xff] %vm1599, %v3651
        %3726 = vst.msk [vmem:[#allocation3 + $0xb0] sm:$0xff] %vm1599, %v3653
        %3727 = vst.msk [vmem:[#allocation3 + $0xb8] sm:$0xff] %vm1599, %v3655
        %3728 = vst.msk [vmem:[#allocation3 + $0xc0] sm:$0xff] %vm1599, %v3657
        %3729 = vst.msk [vmem:[#allocation3 + $0xc8] sm:$0xff] %vm1599, %v3659
        %3730 = vst.msk [vmem:[#allocation3 + $0xd0] sm:$0xff] %vm1599, %v3661
        %3731 = vst.msk [vmem:[#allocation3 + $0xd8] sm:$0xff] %vm1599, %v3663
        %3732 = vst.msk [vmem:[#allocation3 + $0xe0] sm:$0xff] %vm1599, %v3665
        %3733 = vst.msk [vmem:[#allocation3 + $0xe8] sm:$0xff] %vm1599, %v3667
        %3734 = vst.msk [vmem:[#allocation3 + $0xf0] sm:$0xff] %vm1599, %v3669
        %3735 = vst.msk [vmem:[#allocation3 + $0xf8] sm:$0xff] %vm1599, %v3671
        %v3736 = vld [vmem:[%s1632] sm:$0xff]
        %v3737 = vld [vmem:[%s1632 + $0x8] sm:$0xff]
        %v3738 = vld [vmem:[%s1632 + $0x18] sm:$0xff]
        %v3739 = vld [vmem:[%s1632 + $0x20] sm:$0xff]
        %v3740 = vld [vmem:[%s1632 + $0x30] sm:$0xff]
        %v3741 = vld [vmem:[%s1632 + $0x38] sm:$0xff]
        %v3742 = vld [vmem:[%s1632 + $0x48] sm:$0xff]
        %v3743 = vld [vmem:[%s1632 + $0x50] sm:$0xff]
        %v3744 = vld [vmem:[%s1632 + $0x60] sm:$0xff]
        %v3745 = vld [vmem:[%s1632 + $0x68] sm:$0xff]
        %v3746 = vld [vmem:[%s1632 + $0x78] sm:$0xff]
        %v3747 = vld [vmem:[%s1632 + $0x80] sm:$0xff]
        %v3748 = vld [vmem:[%s1632 + $0x90] sm:$0xff]
        %v3749 = vld [vmem:[%s1632 + $0x98] sm:$0xff]
        %v3750 = vld [vmem:[%s1632 + $0xa8] sm:$0xff]
        %v3751 = vld [vmem:[%s1632 + $0xb0] sm:$0xff]
        %v3752 = vld [vmem:[%s1632 + $0xc0] sm:$0xff]
        %v3753 = vld [vmem:[%s1632 + $0xc8] sm:$0xff]
        %v3754 = vld [vmem:[%s1632 + $0xd8] sm:$0xff]
        %v3755 = vld [vmem:[%s1632 + $0xe0] sm:$0xff]
        %v3756 = vld [vmem:[%s1632 + $0xf0] sm:$0xff]
        %v3757 = vld [vmem:[%s1632 + $0xf8] sm:$0xff]
        %v3758 = vld [vmem:[%s1632 + $0x108] sm:$0xff]
        %v3759 = vld [vmem:[%s1632 + $0x110] sm:$0xff]
        %v3760 = vld [vmem:[%s1632 + $0x120] sm:$0xff]
        %v3761 = vld [vmem:[%s1632 + $0x128] sm:$0xff]
        %v3762 = vld [vmem:[%s1632 + $0x138] sm:$0xff]
        %v3763 = vld [vmem:[%s1632 + $0x140] sm:$0xff]
        %v3764 = vld [vmem:[%s1632 + $0x150] sm:$0xff]
        %v3765 = vld [vmem:[%s1632 + $0x158] sm:$0xff]
        %v3766 = vld [vmem:[%s1632 + $0x168] sm:$0xff]
        %v3767 = vld [vmem:[%s1632 + $0x170] sm:$0xff]
        %3800 = vrot.lane.b32.xlu0 %v3736, 48
        %v3801 = vpop.permute.xlu0 %3800
        %3802 = vrot.lane.b32.xlu0 %v3737, 48
        %v3803 = vpop.permute.xlu0 %3802
        %3804 = vrot.lane.b32.xlu0 %v3738, 48
        %v3805 = vpop.permute.xlu0 %3804
        %3806 = vrot.lane.b32.xlu0 %v3739, 48
        %v3807 = vpop.permute.xlu0 %3806
        %3808 = vrot.lane.b32.xlu0 %v3740, 48
        %v3809 = vpop.permute.xlu0 %3808
        %3810 = vrot.lane.b32.xlu0 %v3741, 48
        %v3811 = vpop.permute.xlu0 %3810
        %3812 = vrot.lane.b32.xlu0 %v3742, 48
        %v3813 = vpop.permute.xlu0 %3812
        %3814 = vrot.lane.b32.xlu0 %v3743, 48
        %v3815 = vpop.permute.xlu0 %3814
        %3816 = vrot.lane.b32.xlu0 %v3744, 48
        %v3817 = vpop.permute.xlu0 %3816
        %3818 = vrot.lane.b32.xlu0 %v3745, 48
        %v3819 = vpop.permute.xlu0 %3818
        %3820 = vrot.lane.b32.xlu0 %v3746, 48
        %v3821 = vpop.permute.xlu0 %3820
        %3822 = vrot.lane.b32.xlu0 %v3747, 48
        %v3823 = vpop.permute.xlu0 %3822
        %3824 = vrot.lane.b32.xlu0 %v3748, 48
        %v3825 = vpop.permute.xlu0 %3824
        %3826 = vrot.lane.b32.xlu0 %v3749, 48
        %v3827 = vpop.permute.xlu0 %3826
        %3828 = vrot.lane.b32.xlu0 %v3750, 48
        %v3829 = vpop.permute.xlu0 %3828
        %3830 = vrot.lane.b32.xlu0 %v3751, 48
        %v3831 = vpop.permute.xlu0 %3830
        %3832 = vrot.lane.b32.xlu0 %v3752, 48
        %v3833 = vpop.permute.xlu0 %3832
        %3834 = vrot.lane.b32.xlu0 %v3753, 48
        %v3835 = vpop.permute.xlu0 %3834
        %3836 = vrot.lane.b32.xlu0 %v3754, 48
        %v3837 = vpop.permute.xlu0 %3836
        %3838 = vrot.lane.b32.xlu0 %v3755, 48
        %v3839 = vpop.permute.xlu0 %3838
        %3840 = vrot.lane.b32.xlu0 %v3756, 48
        %v3841 = vpop.permute.xlu0 %3840
        %3842 = vrot.lane.b32.xlu0 %v3757, 48
        %v3843 = vpop.permute.xlu0 %3842
        %3844 = vrot.lane.b32.xlu0 %v3758, 48
        %v3845 = vpop.permute.xlu0 %3844
        %3846 = vrot.lane.b32.xlu0 %v3759, 48
        %v3847 = vpop.permute.xlu0 %3846
        %3848 = vrot.lane.b32.xlu0 %v3760, 48
        %v3849 = vpop.permute.xlu0 %3848
        %3850 = vrot.lane.b32.xlu0 %v3761, 48
        %v3851 = vpop.permute.xlu0 %3850
        %3852 = vrot.lane.b32.xlu0 %v3762, 48
        %v3853 = vpop.permute.xlu0 %3852
        %3854 = vrot.lane.b32.xlu0 %v3763, 48
        %v3855 = vpop.permute.xlu0 %3854
        %3856 = vrot.lane.b32.xlu0 %v3764, 48
        %v3857 = vpop.permute.xlu0 %3856
        %3858 = vrot.lane.b32.xlu0 %v3765, 48
        %v3859 = vpop.permute.xlu0 %3858
        %3860 = vrot.lane.b32.xlu0 %v3766, 48
        %v3861 = vpop.permute.xlu0 %3860
        %3862 = vrot.lane.b32.xlu0 %v3767, 48
        %v3863 = vpop.permute.xlu0 %3862
        %3896 = vst.msk [vmem:[#allocation3] sm:$0xff] %vm1793, %v3801
        %3897 = vst.msk [vmem:[#allocation3 + $0x8] sm:$0xff] %vm1793, %v3803
        %3898 = vst.msk [vmem:[#allocation3 + $0x10] sm:$0xff] %vm1793, %v3805
        %3899 = vst.msk [vmem:[#allocation3 + $0x18] sm:$0xff] %vm1793, %v3807
        %3900 = vst.msk [vmem:[#allocation3 + $0x20] sm:$0xff] %vm1793, %v3809
        %3901 = vst.msk [vmem:[#allocation3 + $0x28] sm:$0xff] %vm1793, %v3811
        %3902 = vst.msk [vmem:[#allocation3 + $0x30] sm:$0xff] %vm1793, %v3813
        %3903 = vst.msk [vmem:[#allocation3 + $0x38] sm:$0xff] %vm1793, %v3815
        %3904 = vst.msk [vmem:[#allocation3 + $0x40] sm:$0xff] %vm1793, %v3817
        %3905 = vst.msk [vmem:[#allocation3 + $0x48] sm:$0xff] %vm1793, %v3819
        %3906 = vst.msk [vmem:[#allocation3 + $0x50] sm:$0xff] %vm1793, %v3821
        %3907 = vst.msk [vmem:[#allocation3 + $0x58] sm:$0xff] %vm1793, %v3823
        %3908 = vst.msk [vmem:[#allocation3 + $0x60] sm:$0xff] %vm1793, %v3825
        %3909 = vst.msk [vmem:[#allocation3 + $0x68] sm:$0xff] %vm1793, %v3827
        %3910 = vst.msk [vmem:[#allocation3 + $0x70] sm:$0xff] %vm1793, %v3829
        %3911 = vst.msk [vmem:[#allocation3 + $0x78] sm:$0xff] %vm1793, %v3831
        %3912 = vst.msk [vmem:[#allocation3 + $0x80] sm:$0xff] %vm1793, %v3833
        %3913 = vst.msk [vmem:[#allocation3 + $0x88] sm:$0xff] %vm1793, %v3835
        %3914 = vst.msk [vmem:[#allocation3 + $0x90] sm:$0xff] %vm1793, %v3837
        %3915 = vst.msk [vmem:[#allocation3 + $0x98] sm:$0xff] %vm1793, %v3839
        %3916 = vst.msk [vmem:[#allocation3 + $0xa0] sm:$0xff] %vm1793, %v3841
        %3917 = vst.msk [vmem:[#allocation3 + $0xa8] sm:$0xff] %vm1793, %v3843
        %3918 = vst.msk [vmem:[#allocation3 + $0xb0] sm:$0xff] %vm1793, %v3845
        %3919 = vst.msk [vmem:[#allocation3 + $0xb8] sm:$0xff] %vm1793, %v3847
        %3920 = vst.msk [vmem:[#allocation3 + $0xc0] sm:$0xff] %vm1793, %v3849
        %3921 = vst.msk [vmem:[#allocation3 + $0xc8] sm:$0xff] %vm1793, %v3851
        %3922 = vst.msk [vmem:[#allocation3 + $0xd0] sm:$0xff] %vm1793, %v3853
        %3923 = vst.msk [vmem:[#allocation3 + $0xd8] sm:$0xff] %vm1793, %v3855
        %3924 = vst.msk [vmem:[#allocation3 + $0xe0] sm:$0xff] %vm1793, %v3857
        %3925 = vst.msk [vmem:[#allocation3 + $0xe8] sm:$0xff] %vm1793, %v3859
        %3926 = vst.msk [vmem:[#allocation3 + $0xf0] sm:$0xff] %vm1793, %v3861
        %3927 = vst.msk [vmem:[#allocation3 + $0xf8] sm:$0xff] %vm1793, %v3863
        %v3928 = vld [vmem:[%s1632 + $0x1] sm:$0xff]
        %v3929 = vld [vmem:[%s1632 + $0x9] sm:$0xff]
        %v3930 = vld [vmem:[%s1632 + $0x19] sm:$0xff]
        %v3931 = vld [vmem:[%s1632 + $0x21] sm:$0xff]
        %v3932 = vld [vmem:[%s1632 + $0x31] sm:$0xff]
        %v3933 = vld [vmem:[%s1632 + $0x39] sm:$0xff]
        %v3934 = vld [vmem:[%s1632 + $0x49] sm:$0xff]
        %v3935 = vld [vmem:[%s1632 + $0x51] sm:$0xff]
        %v3936 = vld [vmem:[%s1632 + $0x61] sm:$0xff]
        %v3937 = vld [vmem:[%s1632 + $0x69] sm:$0xff]
        %v3938 = vld [vmem:[%s1632 + $0x79] sm:$0xff]
        %v3939 = vld [vmem:[%s1632 + $0x81] sm:$0xff]
        %v3940 = vld [vmem:[%s1632 + $0x91] sm:$0xff]
        %v3941 = vld [vmem:[%s1632 + $0x99] sm:$0xff]
        %v3942 = vld [vmem:[%s1632 + $0xa9] sm:$0xff]
        %v3943 = vld [vmem:[%s1632 + $0xb1] sm:$0xff]
        %v3944 = vld [vmem:[%s1632 + $0xc1] sm:$0xff]
        %v3945 = vld [vmem:[%s1632 + $0xc9] sm:$0xff]
        %v3946 = vld [vmem:[%s1632 + $0xd9] sm:$0xff]
        %v3947 = vld [vmem:[%s1632 + $0xe1] sm:$0xff]
        %v3948 = vld [vmem:[%s1632 + $0xf1] sm:$0xff]
        %v3949 = vld [vmem:[%s1632 + $0xf9] sm:$0xff]
        %v3950 = vld [vmem:[%s1632 + $0x109] sm:$0xff]
        %v3951 = vld [vmem:[%s1632 + $0x111] sm:$0xff]
        %v3952 = vld [vmem:[%s1632 + $0x121] sm:$0xff]
        %v3953 = vld [vmem:[%s1632 + $0x129] sm:$0xff]
        %v3954 = vld [vmem:[%s1632 + $0x139] sm:$0xff]
        %v3955 = vld [vmem:[%s1632 + $0x141] sm:$0xff]
        %v3956 = vld [vmem:[%s1632 + $0x151] sm:$0xff]
        %v3957 = vld [vmem:[%s1632 + $0x159] sm:$0xff]
        %v3958 = vld [vmem:[%s1632 + $0x169] sm:$0xff]
        %v3959 = vld [vmem:[%s1632 + $0x171] sm:$0xff]
        %3992 = vrot.lane.b32.xlu0 %v3928, 56
        %v3993 = vpop.permute.xlu0 %3992
        %3994 = vrot.lane.b32.xlu0 %v3929, 56
        %v3995 = vpop.permute.xlu0 %3994
        %3996 = vrot.lane.b32.xlu0 %v3930, 56
        %v3997 = vpop.permute.xlu0 %3996
        %3998 = vrot.lane.b32.xlu0 %v3931, 56
        %v3999 = vpop.permute.xlu0 %3998
        %4000 = vrot.lane.b32.xlu0 %v3932, 56
        %v4001 = vpop.permute.xlu0 %4000
        %4002 = vrot.lane.b32.xlu0 %v3933, 56
        %v4003 = vpop.permute.xlu0 %4002
        %4004 = vrot.lane.b32.xlu0 %v3934, 56
        %v4005 = vpop.permute.xlu0 %4004
        %4006 = vrot.lane.b32.xlu0 %v3935, 56
        %v4007 = vpop.permute.xlu0 %4006
        %4008 = vrot.lane.b32.xlu0 %v3936, 56
        %v4009 = vpop.permute.xlu0 %4008
        %4010 = vrot.lane.b32.xlu0 %v3937, 56
        %v4011 = vpop.permute.xlu0 %4010
        %4012 = vrot.lane.b32.xlu0 %v3938, 56
        %v4013 = vpop.permute.xlu0 %4012
        %4014 = vrot.lane.b32.xlu0 %v3939, 56
        %v4015 = vpop.permute.xlu0 %4014
        %4016 = vrot.lane.b32.xlu0 %v3940, 56
        %v4017 = vpop.permute.xlu0 %4016
        %4018 = vrot.lane.b32.xlu0 %v3941, 56
        %v4019 = vpop.permute.xlu0 %4018
        %4020 = vrot.lane.b32.xlu0 %v3942, 56
        %v4021 = vpop.permute.xlu0 %4020
        %4022 = vrot.lane.b32.xlu0 %v3943, 56
        %v4023 = vpop.permute.xlu0 %4022
        %4024 = vrot.lane.b32.xlu0 %v3944, 56
        %v4025 = vpop.permute.xlu0 %4024
        %4026 = vrot.lane.b32.xlu0 %v3945, 56
        %v4027 = vpop.permute.xlu0 %4026
        %4028 = vrot.lane.b32.xlu0 %v3946, 56
        %v4029 = vpop.permute.xlu0 %4028
        %4030 = vrot.lane.b32.xlu0 %v3947, 56
        %v4031 = vpop.permute.xlu0 %4030
        %4032 = vrot.lane.b32.xlu0 %v3948, 56
        %v4033 = vpop.permute.xlu0 %4032
        %4034 = vrot.lane.b32.xlu0 %v3949, 56
        %v4035 = vpop.permute.xlu0 %4034
        %4036 = vrot.lane.b32.xlu0 %v3950, 56
        %v4037 = vpop.permute.xlu0 %4036
        %4038 = vrot.lane.b32.xlu0 %v3951, 56
        %v4039 = vpop.permute.xlu0 %4038
        %4040 = vrot.lane.b32.xlu0 %v3952, 56
        %v4041 = vpop.permute.xlu0 %4040
        %4042 = vrot.lane.b32.xlu0 %v3953, 56
        %v4043 = vpop.permute.xlu0 %4042
        %4044 = vrot.lane.b32.xlu0 %v3954, 56
        %v4045 = vpop.permute.xlu0 %4044
        %4046 = vrot.lane.b32.xlu0 %v3955, 56
        %v4047 = vpop.permute.xlu0 %4046
        %4048 = vrot.lane.b32.xlu0 %v3956, 56
        %v4049 = vpop.permute.xlu0 %4048
        %4050 = vrot.lane.b32.xlu0 %v3957, 56
        %v4051 = vpop.permute.xlu0 %4050
        %4052 = vrot.lane.b32.xlu0 %v3958, 56
        %v4053 = vpop.permute.xlu0 %4052
        %4054 = vrot.lane.b32.xlu0 %v3959, 56
        %v4055 = vpop.permute.xlu0 %4054
        %4088 = vst.msk [vmem:[#allocation3] sm:$0xff] %vm1986, %v3993
        %4089 = vst.msk [vmem:[#allocation3 + $0x8] sm:$0xff] %vm1986, %v3995
        %4090 = vst.msk [vmem:[#allocation3 + $0x10] sm:$0xff] %vm1986, %v3997
        %4091 = vst.msk [vmem:[#allocation3 + $0x18] sm:$0xff] %vm1986, %v3999
        %4092 = vst.msk [vmem:[#allocation3 + $0x20] sm:$0xff] %vm1986, %v4001
        %4093 = vst.msk [vmem:[#allocation3 + $0x28] sm:$0xff] %vm1986, %v4003
        %4094 = vst.msk [vmem:[#allocation3 + $0x30] sm:$0xff] %vm1986, %v4005
        %4095 = vst.msk [vmem:[#allocation3 + $0x38] sm:$0xff] %vm1986, %v4007
        %4096 = vst.msk [vmem:[#allocation3 + $0x40] sm:$0xff] %vm1986, %v4009
        %4097 = vst.msk [vmem:[#allocation3 + $0x48] sm:$0xff] %vm1986, %v4011
        %4098 = vst.msk [vmem:[#allocation3 + $0x50] sm:$0xff] %vm1986, %v4013
        %4099 = vst.msk [vmem:[#allocation3 + $0x58] sm:$0xff] %vm1986, %v4015
        %4100 = vst.msk [vmem:[#allocation3 + $0x60] sm:$0xff] %vm1986, %v4017
        %4101 = vst.msk [vmem:[#allocation3 + $0x68] sm:$0xff] %vm1986, %v4019
        %4102 = vst.msk [vmem:[#allocation3 + $0x70] sm:$0xff] %vm1986, %v4021
        %4103 = vst.msk [vmem:[#allocation3 + $0x78] sm:$0xff] %vm1986, %v4023
        %4104 = vst.msk [vmem:[#allocation3 + $0x80] sm:$0xff] %vm1986, %v4025
        %4105 = vst.msk [vmem:[#allocation3 + $0x88] sm:$0xff] %vm1986, %v4027
        %4106 = vst.msk [vmem:[#allocation3 + $0x90] sm:$0xff] %vm1986, %v4029
        %4107 = vst.msk [vmem:[#allocation3 + $0x98] sm:$0xff] %vm1986, %v4031
        %4108 = vst.msk [vmem:[#allocation3 + $0xa0] sm:$0xff] %vm1986, %v4033
        %4109 = vst.msk [vmem:[#allocation3 + $0xa8] sm:$0xff] %vm1986, %v4035
        %4110 = vst.msk [vmem:[#allocation3 + $0xb0] sm:$0xff] %vm1986, %v4037
        %4111 = vst.msk [vmem:[#allocation3 + $0xb8] sm:$0xff] %vm1986, %v4039
        %4112 = vst.msk [vmem:[#allocation3 + $0xc0] sm:$0xff] %vm1986, %v4041
        %4113 = vst.msk [vmem:[#allocation3 + $0xc8] sm:$0xff] %vm1986, %v4043
        %4114 = vst.msk [vmem:[#allocation3 + $0xd0] sm:$0xff] %vm1986, %v4045
        %4115 = vst.msk [vmem:[#allocation3 + $0xd8] sm:$0xff] %vm1986, %v4047
        %4116 = vst.msk [vmem:[#allocation3 + $0xe0] sm:$0xff] %vm1986, %v4049
        %4117 = vst.msk [vmem:[#allocation3 + $0xe8] sm:$0xff] %vm1986, %v4051
        %4118 = vst.msk [vmem:[#allocation3 + $0xf0] sm:$0xff] %vm1986, %v4053
        %4119 = vst.msk [vmem:[#allocation3 + $0xf8] sm:$0xff] %vm1986, %v4055
        %v4120 = vld [vmem:[%s1632 + $0x2] sm:$0xff]
        %v4121 = vld [vmem:[%s1632 + $0xa] sm:$0xff]
        %v4122 = vld [vmem:[%s1632 + $0x1a] sm:$0xff]
        %v4123 = vld [vmem:[%s1632 + $0x22] sm:$0xff]
        %v4124 = vld [vmem:[%s1632 + $0x32] sm:$0xff]
        %v4125 = vld [vmem:[%s1632 + $0x3a] sm:$0xff]
        %v4126 = vld [vmem:[%s1632 + $0x4a] sm:$0xff]
        %v4127 = vld [vmem:[%s1632 + $0x52] sm:$0xff]
        %v4128 = vld [vmem:[%s1632 + $0x62] sm:$0xff]
        %v4129 = vld [vmem:[%s1632 + $0x6a] sm:$0xff]
        %v4130 = vld [vmem:[%s1632 + $0x7a] sm:$0xff]
        %v4131 = vld [vmem:[%s1632 + $0x82] sm:$0xff]
        %v4132 = vld [vmem:[%s1632 + $0x92] sm:$0xff]
        %v4133 = vld [vmem:[%s1632 + $0x9a] sm:$0xff]
        %v4134 = vld [vmem:[%s1632 + $0xaa] sm:$0xff]
        %v4135 = vld [vmem:[%s1632 + $0xb2] sm:$0xff]
        %v4136 = vld [vmem:[%s1632 + $0xc2] sm:$0xff]
        %v4137 = vld [vmem:[%s1632 + $0xca] sm:$0xff]
        %v4138 = vld [vmem:[%s1632 + $0xda] sm:$0xff]
        %v4139 = vld [vmem:[%s1632 + $0xe2] sm:$0xff]
        %v4140 = vld [vmem:[%s1632 + $0xf2] sm:$0xff]
        %v4141 = vld [vmem:[%s1632 + $0xfa] sm:$0xff]
        %v4142 = vld [vmem:[%s1632 + $0x10a] sm:$0xff]
        %v4143 = vld [vmem:[%s1632 + $0x112] sm:$0xff]
        %v4144 = vld [vmem:[%s1632 + $0x122] sm:$0xff]
        %v4145 = vld [vmem:[%s1632 + $0x12a] sm:$0xff]
        %v4146 = vld [vmem:[%s1632 + $0x13a] sm:$0xff]
        %v4147 = vld [vmem:[%s1632 + $0x142] sm:$0xff]
        %v4148 = vld [vmem:[%s1632 + $0x152] sm:$0xff]
        %v4149 = vld [vmem:[%s1632 + $0x15a] sm:$0xff]
        %v4150 = vld [vmem:[%s1632 + $0x16a] sm:$0xff]
        %v4151 = vld [vmem:[%s1632 + $0x172] sm:$0xff]
        %4184 = vrot.lane.b32.xlu0 %v4120, 64
        %v4185 = vpop.permute.xlu0 %4184
        %4186 = vrot.lane.b32.xlu0 %v4121, 64
        %v4187 = vpop.permute.xlu0 %4186
        %4188 = vrot.lane.b32.xlu0 %v4122, 64
        %v4189 = vpop.permute.xlu0 %4188
        %4190 = vrot.lane.b32.xlu0 %v4123, 64
        %v4191 = vpop.permute.xlu0 %4190
        %4192 = vrot.lane.b32.xlu0 %v4124, 64
        %v4193 = vpop.permute.xlu0 %4192
        %4194 = vrot.lane.b32.xlu0 %v4125, 64
        %v4195 = vpop.permute.xlu0 %4194
        %4196 = vrot.lane.b32.xlu0 %v4126, 64
        %v4197 = vpop.permute.xlu0 %4196
        %4198 = vrot.lane.b32.xlu0 %v4127, 64
        %v4199 = vpop.permute.xlu0 %4198
        %4200 = vrot.lane.b32.xlu0 %v4128, 64
        %v4201 = vpop.permute.xlu0 %4200
        %4202 = vrot.lane.b32.xlu0 %v4129, 64
        %v4203 = vpop.permute.xlu0 %4202
        %4204 = vrot.lane.b32.xlu0 %v4130, 64
        %v4205 = vpop.permute.xlu0 %4204
        %4206 = vrot.lane.b32.xlu0 %v4131, 64
        %v4207 = vpop.permute.xlu0 %4206
        %4208 = vrot.lane.b32.xlu0 %v4132, 64
        %v4209 = vpop.permute.xlu0 %4208
        %4210 = vrot.lane.b32.xlu0 %v4133, 64
        %v4211 = vpop.permute.xlu0 %4210
        %4212 = vrot.lane.b32.xlu0 %v4134, 64
        %v4213 = vpop.permute.xlu0 %4212
        %4214 = vrot.lane.b32.xlu0 %v4135, 64
        %v4215 = vpop.permute.xlu0 %4214
        %4216 = vrot.lane.b32.xlu0 %v4136, 64
        %v4217 = vpop.permute.xlu0 %4216
        %4218 = vrot.lane.b32.xlu0 %v4137, 64
        %v4219 = vpop.permute.xlu0 %4218
        %4220 = vrot.lane.b32.xlu0 %v4138, 64
        %v4221 = vpop.permute.xlu0 %4220
        %4222 = vrot.lane.b32.xlu0 %v4139, 64
        %v4223 = vpop.permute.xlu0 %4222
        %4224 = vrot.lane.b32.xlu0 %v4140, 64
        %v4225 = vpop.permute.xlu0 %4224
        %4226 = vrot.lane.b32.xlu0 %v4141, 64
        %v4227 = vpop.permute.xlu0 %4226
        %4228 = vrot.lane.b32.xlu0 %v4142, 64
        %v4229 = vpop.permute.xlu0 %4228
        %4230 = vrot.lane.b32.xlu0 %v4143, 64
        %v4231 = vpop.permute.xlu0 %4230
        %4232 = vrot.lane.b32.xlu0 %v4144, 64
        %v4233 = vpop.permute.xlu0 %4232
        %4234 = vrot.lane.b32.xlu0 %v4145, 64
        %v4235 = vpop.permute.xlu0 %4234
        %4236 = vrot.lane.b32.xlu0 %v4146, 64
        %v4237 = vpop.permute.xlu0 %4236
        %4238 = vrot.lane.b32.xlu0 %v4147, 64
        %v4239 = vpop.permute.xlu0 %4238
        %4240 = vrot.lane.b32.xlu0 %v4148, 64
        %v4241 = vpop.permute.xlu0 %4240
        %4242 = vrot.lane.b32.xlu0 %v4149, 64
        %v4243 = vpop.permute.xlu0 %4242
        %4244 = vrot.lane.b32.xlu0 %v4150, 64
        %v4245 = vpop.permute.xlu0 %4244
        %4246 = vrot.lane.b32.xlu0 %v4151, 64
        %v4247 = vpop.permute.xlu0 %4246
        %4280 = vst.msk [vmem:[#allocation3] sm:$0xff] %vm2179, %v4185
        %4281 = vst.msk [vmem:[#allocation3 + $0x8] sm:$0xff] %vm2179, %v4187
        %4282 = vst.msk [vmem:[#allocation3 + $0x10] sm:$0xff] %vm2179, %v4189
        %4283 = vst.msk [vmem:[#allocation3 + $0x18] sm:$0xff] %vm2179, %v4191
        %4284 = vst.msk [vmem:[#allocation3 + $0x20] sm:$0xff] %vm2179, %v4193
        %4285 = vst.msk [vmem:[#allocation3 + $0x28] sm:$0xff] %vm2179, %v4195
        %4286 = vst.msk [vmem:[#allocation3 + $0x30] sm:$0xff] %vm2179, %v4197
        %4287 = vst.msk [vmem:[#allocation3 + $0x38] sm:$0xff] %vm2179, %v4199
        %4288 = vst.msk [vmem:[#allocation3 + $0x40] sm:$0xff] %vm2179, %v4201
        %4289 = vst.msk [vmem:[#allocation3 + $0x48] sm:$0xff] %vm2179, %v4203
        %4290 = vst.msk [vmem:[#allocation3 + $0x50] sm:$0xff] %vm2179, %v4205
        %4291 = vst.msk [vmem:[#allocation3 + $0x58] sm:$0xff] %vm2179, %v4207
        %4292 = vst.msk [vmem:[#allocation3 + $0x60] sm:$0xff] %vm2179, %v4209
        %4293 = vst.msk [vmem:[#allocation3 + $0x68] sm:$0xff] %vm2179, %v4211
        %4294 = vst.msk [vmem:[#allocation3 + $0x70] sm:$0xff] %vm2179, %v4213
        %4295 = vst.msk [vmem:[#allocation3 + $0x78] sm:$0xff] %vm2179, %v4215
        %4296 = vst.msk [vmem:[#allocation3 + $0x80] sm:$0xff] %vm2179, %v4217
        %4297 = vst.msk [vmem:[#allocation3 + $0x88] sm:$0xff] %vm2179, %v4219
        %4298 = vst.msk [vmem:[#allocation3 + $0x90] sm:$0xff] %vm2179, %v4221
        %4299 = vst.msk [vmem:[#allocation3 + $0x98] sm:$0xff] %vm2179, %v4223
        %4300 = vst.msk [vmem:[#allocation3 + $0xa0] sm:$0xff] %vm2179, %v4225
        %4301 = vst.msk [vmem:[#allocation3 + $0xa8] sm:$0xff] %vm2179, %v4227
        %4302 = vst.msk [vmem:[#allocation3 + $0xb0] sm:$0xff] %vm2179, %v4229
        %4303 = vst.msk [vmem:[#allocation3 + $0xb8] sm:$0xff] %vm2179, %v4231
        %4304 = vst.msk [vmem:[#allocation3 + $0xc0] sm:$0xff] %vm2179, %v4233
        %4305 = vst.msk [vmem:[#allocation3 + $0xc8] sm:$0xff] %vm2179, %v4235
        %4306 = vst.msk [vmem:[#allocation3 + $0xd0] sm:$0xff] %vm2179, %v4237
        %4307 = vst.msk [vmem:[#allocation3 + $0xd8] sm:$0xff] %vm2179, %v4239
        %4308 = vst.msk [vmem:[#allocation3 + $0xe0] sm:$0xff] %vm2179, %v4241
        %4309 = vst.msk [vmem:[#allocation3 + $0xe8] sm:$0xff] %vm2179, %v4243
        %4310 = vst.msk [vmem:[#allocation3 + $0xf0] sm:$0xff] %vm2179, %v4245
        %4311 = vst.msk [vmem:[#allocation3 + $0xf8] sm:$0xff] %vm2179, %v4247
        %v4312 = vld [vmem:[#allocation3] sm:$0xff]
        %v4313 = vld [vmem:[#allocation3 + $0x8] sm:$0xff]
        %v4314 = vld [vmem:[#allocation3 + $0x10] sm:$0xff]
        %v4315 = vld [vmem:[#allocation3 + $0x18] sm:$0xff]
        %v4316 = vld [vmem:[#allocation3 + $0x20] sm:$0xff]
        %v4317 = vld [vmem:[#allocation3 + $0x28] sm:$0xff]
        %v4318 = vld [vmem:[#allocation3 + $0x30] sm:$0xff]
        %v4319 = vld [vmem:[#allocation3 + $0x38] sm:$0xff]
        %v4320 = vld [vmem:[#allocation3 + $0x40] sm:$0xff]
        %v4321 = vld [vmem:[#allocation3 + $0x48] sm:$0xff]
        %v4322 = vld [vmem:[#allocation3 + $0x50] sm:$0xff]
        %v4323 = vld [vmem:[#allocation3 + $0x58] sm:$0xff]
        %v4324 = vld [vmem:[#allocation3 + $0x60] sm:$0xff]
        %v4325 = vld [vmem:[#allocation3 + $0x68] sm:$0xff]
        %v4326 = vld [vmem:[#allocation3 + $0x70] sm:$0xff]
        %v4327 = vld [vmem:[#allocation3 + $0x78] sm:$0xff]
        %v4328 = vld [vmem:[#allocation3 + $0x80] sm:$0xff]
        %v4329 = vld [vmem:[#allocation3 + $0x88] sm:$0xff]
        %v4330 = vld [vmem:[#allocation3 + $0x90] sm:$0xff]
        %v4331 = vld [vmem:[#allocation3 + $0x98] sm:$0xff]
        %v4332 = vld [vmem:[#allocation3 + $0xa0] sm:$0xff]
        %v4333 = vld [vmem:[#allocation3 + $0xa8] sm:$0xff]
        %v4334 = vld [vmem:[#allocation3 + $0xb0] sm:$0xff]
        %v4335 = vld [vmem:[#allocation3 + $0xb8] sm:$0xff]
        %v4336 = vld [vmem:[#allocation3 + $0xc0] sm:$0xff]
        %v4337 = vld [vmem:[#allocation3 + $0xc8] sm:$0xff]
        %v4338 = vld [vmem:[#allocation3 + $0xd0] sm:$0xff]
        %v4339 = vld [vmem:[#allocation3 + $0xd8] sm:$0xff]
        %v4340 = vld [vmem:[#allocation3 + $0xe0] sm:$0xff]
        %v4341 = vld [vmem:[#allocation3 + $0xe8] sm:$0xff]
        %v4342 = vld [vmem:[#allocation3 + $0xf0] sm:$0xff]
        %v4343 = vld [vmem:[#allocation3 + $0xf8] sm:$0xff]
        %v4344 = vld [vmem:[%s3] sm:$0xff]
        %v4345 = vld [vmem:[%s3 + $0x8] sm:$0xff]
        %v4346 = vld [vmem:[%s3 + $0x10] sm:$0xff]
        %v4347 = vld [vmem:[%s3 + $0x18] sm:$0xff]
        %v4348 = vld [vmem:[%s3 + $0x20] sm:$0xff]
        %v4349 = vld [vmem:[%s3 + $0x28] sm:$0xff]
        %v4350 = vld [vmem:[%s3 + $0x30] sm:$0xff]
        %v4351 = vld [vmem:[%s3 + $0x38] sm:$0xff]
        %v4352 = vld [vmem:[%s3 + $0x40] sm:$0xff]
        %v4353 = vld [vmem:[%s4] sm:$0x1]
        %v4355 = vlaneseq
        %v4356 = vshrl.u32 %v4355, 7
        %v4357 = vsub.s32 0, %v4356
        %v4358 = vrot.slane %v4353, %v4357
        %v4361 = vsel %vm2260, %v4312, 0
        %v4364 = vsel %vm2260, %v4313, 0
        %v4367 = vsel %vm2260, %v4314, 0
        %v4370 = vsel %vm2260, %v4315, 0
        %v4373 = vsel %vm2260, %v4316, 0
        %v4376 = vsel %vm2260, %v4317, 0
        %v4379 = vsel %vm2260, %v4318, 0
        %v4382 = vsel %vm2260, %v4319, 0
        %v4385 = vsel %vm2260, %v4320, 0
        %v4388 = vsel %vm2260, %v4321, 0
        %v4391 = vsel %vm2260, %v4322, 0
        %v4394 = vsel %vm2260, %v4323, 0
        %v4397 = vsel %vm2260, %v4324, 0
        %v4400 = vsel %vm2260, %v4325, 0
        %v4403 = vsel %vm2260, %v4326, 0
        %v4406 = vsel %vm2260, %v4327, 0
        %v4409 = vsel %vm2260, %v4328, 0
        %v4412 = vsel %vm2260, %v4329, 0
        %v4415 = vsel %vm2260, %v4330, 0
        %v4418 = vsel %vm2260, %v4331, 0
        %v4421 = vsel %vm2260, %v4332, 0
        %v4424 = vsel %vm2260, %v4333, 0
        %v4427 = vsel %vm2260, %v4334, 0
        %v4430 = vsel %vm2260, %v4335, 0
        %v4433 = vsel %vm2260, %v4336, 0
        %v4436 = vsel %vm2260, %v4337, 0
        %v4439 = vsel %vm2260, %v4338, 0
        %v4442 = vsel %vm2260, %v4339, 0
        %v4445 = vsel %vm2260, %v4340, 0
        %v4448 = vsel %vm2260, %v4341, 0
        %v4451 = vsel %vm2260, %v4342, 0
        %v4454 = vsel %vm2260, %v4343, 0
        %4456 = vmatprep.subr.mxu0 0.0
        %4457 = vmatpush1.msra.mxu0 0.0
        %4458 = vmatprep.subr.mxu0 0.0
        %4459 = vmatpush1.msra.mxu0 0.0
        %4460 = vmatprep.subr.mxu0 0.0
        %4461 = vmatpush1.msra.mxu0 0.0
        %4462 = vmatprep.subr.mxu0 0.0
        %4463 = vmatpush1.msra.mxu0 0.0
        %4464 = vmatprep.subr.mxu0 0.0
        %4465 = vmatpush1.msra.mxu0 0.0
        %4466 = vmatprep.subr.mxu0 0.0
        %4467 = vmatpush1.msra.mxu0 0.0
        %4468 = vmatprep.subr.mxu0 0.0
        %4469 = vmatpush1.msra.mxu0 0.0
        %4470 = vmatprep.subr.mxu0 0.0
        %4471 = vmatpush1.msra.mxu0 %v4352
        %4472 = vmatprep.subr.mxu0 0.0
        %4473 = vmatpush1.msra.mxu0 %v4351
        %4474 = vmatprep.subr.mxu0 0.0
        %4475 = vmatpush1.msra.mxu0 %v4350
        %4476 = vmatprep.subr.mxu0 0.0
        %4477 = vmatpush1.msra.mxu0 %v4349
        %4478 = vmatprep.subr.mxu0 0.0
        %4479 = vmatpush1.msra.mxu0 %v4348
        %4480 = vmatprep.subr.mxu0 0.0
        %4481 = vmatpush1.msra.mxu0 %v4347
        %4482 = vmatprep.subr.mxu0 0.0
        %4483 = vmatpush1.msra.mxu0 %v4346
        %4484 = vmatprep.subr.mxu0 0.0
        %4485 = vmatpush1.msra.mxu0 %v4345
        %4486 = vmatprep.subr.mxu0 0.0
        %4487 = vmatpush1.msra.mxu0 %v4344
        %4488 = vmatprep.subr.mxu0 0.0
        %4489 = vmatpush2.msra.mxu0 0.0
        %4490 = vmatprep.subr.mxu0 0.0
        %4491 = vmatpush2.msra.mxu0 0.0
        %4492 = vmatprep.subr.mxu0 0.0
        %4493 = vmatpush2.msra.mxu0 0.0
        %4494 = vmatprep.subr.mxu0 0.0
        %4495 = vmatpush2.msra.mxu0 0.0
        %4496 = vmatprep.subr.mxu0 0.0
        %4497 = vmatpush2.msra.mxu0 0.0
        %4498 = vmatprep.subr.mxu0 0.0
        %4499 = vmatpush2.msra.mxu0 0.0
        %4500 = vmatprep.subr.mxu0 0.0
        %4501 = vmatpush2.msra.mxu0 0.0
        %4502 = vmatprep.subr.mxu0 0.0
        %4503 = vmatpush2.msra.mxu0 0.0
        %4504 = vmatprep.subr.mxu0 0.0
        %4505 = vmatpush2.msra.mxu0 0.0
        %4506 = vmatprep.subr.mxu0 0.0
        %4507 = vmatpush2.msra.mxu0 0.0
        %4508 = vmatprep.subr.mxu0 0.0
        %4509 = vmatpush2.msra.mxu0 0.0
        %4510 = vmatprep.subr.mxu0 0.0
        %4511 = vmatpush2.msra.mxu0 0.0
        %4512 = vmatprep.subr.mxu0 0.0
        %4513 = vmatpush2.msra.mxu0 0.0
        %4514 = vmatprep.subr.mxu0 0.0
        %4515 = vmatpush2.msra.mxu0 0.0
        %4516 = vmatprep.subr.mxu0 0.0
        %4517 = vmatpush2.msra.mxu0 0.0
        %4518 = vmatprep.subr.mxu0 0.0
        %4519 = vmatpush2.msra.mxu0 0.0
        %4520 = vmatprep.mubr.f32.mxu0 0.0
        %4521 = vmatmul.mubr.f32.gmra.mxu0 %v4361
        %v4522 = vpop.f32.mrf.mxu0
        %v4523 = vadd.f32 %v4358, %v4522
        %v4524 = vpop.f32.mrf.mxu0
        %4525 = vmatprep.mubr.f32.mxu0 0.0
        %4526 = vmatmul.mubr.f32.gmra.mxu0 %v4364
        %v4527 = vpop.f32.mrf.mxu0
        %v4528 = vadd.f32 %v4358, %v4527
        %v4529 = vpop.f32.mrf.mxu0
        %4530 = vmatprep.mubr.f32.mxu0 0.0
        %4531 = vmatmul.mubr.f32.gmra.mxu0 %v4367
        %v4532 = vpop.f32.mrf.mxu0
        %v4533 = vadd.f32 %v4358, %v4532
        %v4534 = vpop.f32.mrf.mxu0
        %4535 = vmatprep.mubr.f32.mxu0 0.0
        %4536 = vmatmul.mubr.f32.gmra.mxu0 %v4370
        %v4537 = vpop.f32.mrf.mxu0
        %v4538 = vadd.f32 %v4358, %v4537
        %v4539 = vpop.f32.mrf.mxu0
        %4540 = vmatprep.mubr.f32.mxu0 0.0
        %4541 = vmatmul.mubr.f32.gmra.mxu0 %v4373
        %v4542 = vpop.f32.mrf.mxu0
        %v4543 = vadd.f32 %v4358, %v4542
        %v4544 = vpop.f32.mrf.mxu0
        %4545 = vmatprep.mubr.f32.mxu0 0.0
        %4546 = vmatmul.mubr.f32.gmra.mxu0 %v4376
        %v4547 = vpop.f32.mrf.mxu0
        %v4548 = vadd.f32 %v4358, %v4547
        %v4549 = vpop.f32.mrf.mxu0
        %4550 = vmatprep.mubr.f32.mxu0 0.0
        %4551 = vmatmul.mubr.f32.gmra.mxu0 %v4379
        %v4552 = vpop.f32.mrf.mxu0
        %v4553 = vadd.f32 %v4358, %v4552
        %v4554 = vpop.f32.mrf.mxu0
        %4555 = vmatprep.mubr.f32.mxu0 0.0
        %4556 = vmatmul.mubr.f32.gmra.mxu0 %v4382
        %v4557 = vpop.f32.mrf.mxu0
        %v4558 = vadd.f32 %v4358, %v4557
        %v4559 = vpop.f32.mrf.mxu0
        %4560 = vmatprep.mubr.f32.mxu0 0.0
        %4561 = vmatmul.mubr.f32.gmra.mxu0 %v4385
        %v4562 = vpop.f32.mrf.mxu0
        %v4563 = vadd.f32 %v4358, %v4562
        %v4564 = vpop.f32.mrf.mxu0
        %4565 = vmatprep.mubr.f32.mxu0 0.0
        %4566 = vmatmul.mubr.f32.gmra.mxu0 %v4388
        %v4567 = vpop.f32.mrf.mxu0
        %v4568 = vadd.f32 %v4358, %v4567
        %v4569 = vpop.f32.mrf.mxu0
        %4570 = vmatprep.mubr.f32.mxu0 0.0
        %4571 = vmatmul.mubr.f32.gmra.mxu0 %v4391
        %v4572 = vpop.f32.mrf.mxu0
        %v4573 = vadd.f32 %v4358, %v4572
        %v4574 = vpop.f32.mrf.mxu0
        %4575 = vmatprep.mubr.f32.mxu0 0.0
        %4576 = vmatmul.mubr.f32.gmra.mxu0 %v4394
        %v4577 = vpop.f32.mrf.mxu0
        %v4578 = vadd.f32 %v4358, %v4577
        %v4579 = vpop.f32.mrf.mxu0
        %4580 = vmatprep.mubr.f32.mxu0 0.0
        %4581 = vmatmul.mubr.f32.gmra.mxu0 %v4397
        %v4582 = vpop.f32.mrf.mxu0
        %v4583 = vadd.f32 %v4358, %v4582
        %v4584 = vpop.f32.mrf.mxu0
        %4585 = vmatprep.mubr.f32.mxu0 0.0
        %4586 = vmatmul.mubr.f32.gmra.mxu0 %v4400
        %v4587 = vpop.f32.mrf.mxu0
        %v4588 = vadd.f32 %v4358, %v4587
        %v4589 = vpop.f32.mrf.mxu0
        %4590 = vmatprep.mubr.f32.mxu0 0.0
        %4591 = vmatmul.mubr.f32.gmra.mxu0 %v4403
        %v4592 = vpop.f32.mrf.mxu0
        %v4593 = vadd.f32 %v4358, %v4592
        %v4594 = vpop.f32.mrf.mxu0
        %4595 = vmatprep.mubr.f32.mxu0 0.0
        %4596 = vmatmul.mubr.f32.gmra.mxu0 %v4406
        %v4597 = vpop.f32.mrf.mxu0
        %v4598 = vadd.f32 %v4358, %v4597
        %v4599 = vpop.f32.mrf.mxu0
        %4600 = vmatprep.mubr.f32.mxu0 0.0
        %4601 = vmatmul.mubr.f32.gmra.mxu0 %v4409
        %v4602 = vpop.f32.mrf.mxu0
        %v4603 = vadd.f32 %v4358, %v4602
        %v4604 = vpop.f32.mrf.mxu0
        %4605 = vmatprep.mubr.f32.mxu0 0.0
        %4606 = vmatmul.mubr.f32.gmra.mxu0 %v4412
        %v4607 = vpop.f32.mrf.mxu0
        %v4608 = vadd.f32 %v4358, %v4607
        %v4609 = vpop.f32.mrf.mxu0
        %4610 = vmatprep.mubr.f32.mxu0 0.0
        %4611 = vmatmul.mubr.f32.gmra.mxu0 %v4415
        %v4612 = vpop.f32.mrf.mxu0
        %v4613 = vadd.f32 %v4358, %v4612
        %v4614 = vpop.f32.mrf.mxu0
        %4615 = vmatprep.mubr.f32.mxu0 0.0
        %4616 = vmatmul.mubr.f32.gmra.mxu0 %v4418
        %v4617 = vpop.f32.mrf.mxu0
        %v4618 = vadd.f32 %v4358, %v4617
        %v4619 = vpop.f32.mrf.mxu0
        %4620 = vmatprep.mubr.f32.mxu0 0.0
        %4621 = vmatmul.mubr.f32.gmra.mxu0 %v4421
        %v4622 = vpop.f32.mrf.mxu0
        %v4623 = vadd.f32 %v4358, %v4622
        %v4624 = vpop.f32.mrf.mxu0
        %4625 = vmatprep.mubr.f32.mxu0 0.0
        %4626 = vmatmul.mubr.f32.gmra.mxu0 %v4424
        %v4627 = vpop.f32.mrf.mxu0
        %v4628 = vadd.f32 %v4358, %v4627
        %v4629 = vpop.f32.mrf.mxu0
        %4630 = vmatprep.mubr.f32.mxu0 0.0
        %4631 = vmatmul.mubr.f32.gmra.mxu0 %v4427
        %v4632 = vpop.f32.mrf.mxu0
        %v4633 = vadd.f32 %v4358, %v4632
        %v4634 = vpop.f32.mrf.mxu0
        %4635 = vmatprep.mubr.f32.mxu0 0.0
        %4636 = vmatmul.mubr.f32.gmra.mxu0 %v4430
        %v4637 = vpop.f32.mrf.mxu0
        %v4638 = vadd.f32 %v4358, %v4637
        %v4639 = vpop.f32.mrf.mxu0
        %4640 = vmatprep.mubr.f32.mxu0 0.0
        %4641 = vmatmul.mubr.f32.gmra.mxu0 %v4433
        %v4642 = vpop.f32.mrf.mxu0
        %v4643 = vadd.f32 %v4358, %v4642
        %v4644 = vpop.f32.mrf.mxu0
        %4645 = vmatprep.mubr.f32.mxu0 0.0
        %4646 = vmatmul.mubr.f32.gmra.mxu0 %v4436
        %v4647 = vpop.f32.mrf.mxu0
        %v4648 = vadd.f32 %v4358, %v4647
        %v4649 = vpop.f32.mrf.mxu0
        %4650 = vmatprep.mubr.f32.mxu0 0.0
        %4651 = vmatmul.mubr.f32.gmra.mxu0 %v4439
        %v4652 = vpop.f32.mrf.mxu0
        %v4653 = vadd.f32 %v4358, %v4652
        %v4654 = vpop.f32.mrf.mxu0
        %4655 = vmatprep.mubr.f32.mxu0 0.0
        %4656 = vmatmul.mubr.f32.gmra.mxu0 %v4442
        %v4657 = vpop.f32.mrf.mxu0
        %v4658 = vadd.f32 %v4358, %v4657
        %v4659 = vpop.f32.mrf.mxu0
        %4660 = vmatprep.mubr.f32.mxu0 0.0
        %4661 = vmatmul.mubr.f32.gmra.mxu0 %v4445
        %v4662 = vpop.f32.mrf.mxu0
        %v4663 = vadd.f32 %v4358, %v4662
        %v4664 = vpop.f32.mrf.mxu0
        %4665 = vmatprep.mubr.f32.mxu0 0.0
        %4666 = vmatmul.mubr.f32.gmra.mxu0 %v4448
        %v4667 = vpop.f32.mrf.mxu0
        %v4668 = vadd.f32 %v4358, %v4667
        %v4669 = vpop.f32.mrf.mxu0
        %4670 = vmatprep.mubr.f32.mxu0 0.0
        %4671 = vmatmul.mubr.f32.gmra.mxu0 %v4451
        %v4672 = vpop.f32.mrf.mxu0
        %v4673 = vadd.f32 %v4358, %v4672
        %v4674 = vpop.f32.mrf.mxu0
        %4675 = vmatprep.mubr.f32.mxu0 0.0
        %4676 = vmatmul.mubr.f32.gmra.mxu0 %v4454
        %v4677 = vpop.f32.mrf.mxu0
        %v4678 = vadd.f32 %v4358, %v4677
        %v4679 = vpop.f32.mrf.mxu0
        %4680 = vdwg.mxu0
        %v4681 = vsel %vm482, %v4523, -inf
        %v4682 = vsel %vm482, %v4528, -inf
        %v4683 = vsel %vm482, %v4533, -inf
        %v4684 = vsel %vm482, %v4538, -inf
        %v4685 = vsel %vm482, %v4543, -inf
        %v4686 = vmax.f32 %v4681, %v4685
        %v4687 = vsel %vm482, %v4548, -inf
        %v4688 = vmax.f32 %v4682, %v4687
        %v4689 = vsel %vm482, %v4553, -inf
        %v4690 = vmax.f32 %v4683, %v4689
        %v4691 = vsel %vm482, %v4558, -inf
        %v4692 = vmax.f32 %v4684, %v4691
        %v4693 = vsel %vm482, %v4563, -inf
        %v4694 = vmax.f32 %v4686, %v4693
        %v4695 = vsel %vm482, %v4568, -inf
        %v4696 = vmax.f32 %v4688, %v4695
        %v4697 = vsel %vm482, %v4573, -inf
        %v4698 = vmax.f32 %v4690, %v4697
        %v4699 = vsel %vm482, %v4578, -inf
        %v4700 = vmax.f32 %v4692, %v4699
        %v4701 = vsel %vm482, %v4583, -inf
        %v4702 = vmax.f32 %v4694, %v4701
        %v4703 = vsel %vm482, %v4588, -inf
        %v4704 = vmax.f32 %v4696, %v4703
        %v4705 = vsel %vm482, %v4593, -inf
        %v4706 = vmax.f32 %v4698, %v4705
        %v4707 = vsel %vm482, %v4598, -inf
        %v4708 = vmax.f32 %v4700, %v4707
        %v4709 = vsel %vm482, %v4603, -inf
        %v4710 = vmax.f32 %v4702, %v4709
        %v4711 = vsel %vm482, %v4608, -inf
        %v4712 = vmax.f32 %v4704, %v4711
        %v4713 = vsel %vm482, %v4613, -inf
        %v4714 = vmax.f32 %v4706, %v4713
        %v4715 = vsel %vm482, %v4618, -inf
        %v4716 = vmax.f32 %v4708, %v4715
        %v4717 = vsel %vm482, %v4623, -inf
        %v4718 = vmax.f32 %v4710, %v4717
        %v4719 = vsel %vm482, %v4628, -inf
        %v4720 = vmax.f32 %v4712, %v4719
        %v4721 = vsel %vm482, %v4633, -inf
        %v4722 = vmax.f32 %v4714, %v4721
        %v4723 = vsel %vm482, %v4638, -inf
        %v4724 = vmax.f32 %v4716, %v4723
        %v4725 = vsel %vm482, %v4643, -inf
        %v4726 = vmax.f32 %v4718, %v4725
        %v4727 = vsel %vm482, %v4648, -inf
        %v4728 = vmax.f32 %v4720, %v4727
        %v4729 = vsel %vm482, %v4653, -inf
        %v4730 = vmax.f32 %v4722, %v4729
        %v4731 = vsel %vm482, %v4658, -inf
        %v4732 = vmax.f32 %v4724, %v4731
        %v4733 = vsel %vm482, %v4663, -inf
        %v4734 = vmax.f32 %v4726, %v4733
        %v4735 = vsel %vm482, %v4668, -inf
        %v4736 = vmax.f32 %v4728, %v4735
        %v4737 = vsel %vm482, %v4673, -inf
        %v4738 = vmax.f32 %v4730, %v4737
        %v4739 = vsel %vm482, %v4678, -inf
        %v4740 = vmax.f32 %v4732, %v4739
        %v4741 = vmax.f32 %v4734, %v4736
        %v4742 = vmax.f32 %v4738, %v4740
        %v4743 = vmax.f32 %v4741, %v4742
        %v4744 = vrot.slane %v4743, 4
        %v4745 = vmax.f32 %v4743, %v4744
        %v4746 = vrot.slane %v4745, 2
        %v4747 = vmax.f32 %v4745, %v4746
        %v4748 = vrot.slane %v4747, 1
        %v4749 = vmax.f32 %v4747, %v4748
        %v4750 = vsel %vm482, %v4523, 0.0
        %v4751 = vsel %vm482, %v4528, 0.0
        %v4752 = vadd.f32 %v4750, %v4751
        %v4753 = vsel %vm482, %v4533, 0.0
        %v4754 = vadd.f32 %v4752, %v4753
        %v4755 = vsel %vm482, %v4538, 0.0
        %v4756 = vadd.f32 %v4754, %v4755
        %v4757 = vsel %vm482, %v4543, 0.0
        %v4758 = vadd.f32 %v4756, %v4757
        %v4759 = vsel %vm482, %v4548, 0.0
        %v4760 = vadd.f32 %v4758, %v4759
        %v4761 = vsel %vm482, %v4553, 0.0
        %v4762 = vadd.f32 %v4760, %v4761
        %v4763 = vsel %vm482, %v4558, 0.0
        %v4764 = vadd.f32 %v4762, %v4763
        %v4765 = vsel %vm482, %v4563, 0.0
        %v4766 = vadd.f32 %v4764, %v4765
        %v4767 = vsel %vm482, %v4568, 0.0
        %v4768 = vadd.f32 %v4766, %v4767
        %v4769 = vsel %vm482, %v4573, 0.0
        %v4770 = vadd.f32 %v4768, %v4769
        %v4771 = vsel %vm482, %v4578, 0.0
        %v4772 = vadd.f32 %v4770, %v4771
        %v4773 = vsel %vm482, %v4583, 0.0
        %v4774 = vadd.f32 %v4772, %v4773
        %v4775 = vsel %vm482, %v4588, 0.0
        %v4776 = vadd.f32 %v4774, %v4775
        %v4777 = vsel %vm482, %v4593, 0.0
        %v4778 = vadd.f32 %v4776, %v4777
        %v4779 = vsel %vm482, %v4598, 0.0
        %v4780 = vadd.f32 %v4778, %v4779
        %v4781 = vsel %vm482, %v4603, 0.0
        %v4782 = vadd.f32 %v4780, %v4781
        %v4783 = vsel %vm482, %v4608, 0.0
        %v4784 = vadd.f32 %v4782, %v4783
        %v4785 = vsel %vm482, %v4613, 0.0
        %v4786 = vadd.f32 %v4784, %v4785
        %v4787 = vsel %vm482, %v4618, 0.0
        %v4788 = vadd.f32 %v4786, %v4787
        %v4789 = vsel %vm482, %v4623, 0.0
        %v4790 = vadd.f32 %v4788, %v4789
        %v4791 = vsel %vm482, %v4628, 0.0
        %v4792 = vadd.f32 %v4790, %v4791
        %v4793 = vsel %vm482, %v4633, 0.0
        %v4794 = vadd.f32 %v4792, %v4793
        %v4795 = vsel %vm482, %v4638, 0.0
        %v4796 = vadd.f32 %v4794, %v4795
        %v4797 = vsel %vm482, %v4643, 0.0
        %v4798 = vadd.f32 %v4796, %v4797
        %v4799 = vsel %vm482, %v4648, 0.0
        %v4800 = vadd.f32 %v4798, %v4799
        %v4801 = vsel %vm482, %v4653, 0.0
        %v4802 = vadd.f32 %v4800, %v4801
        %v4803 = vsel %vm482, %v4658, 0.0
        %v4804 = vadd.f32 %v4802, %v4803
        %v4805 = vsel %vm482, %v4663, 0.0
        %v4806 = vadd.f32 %v4804, %v4805
        %v4807 = vsel %vm482, %v4668, 0.0
        %v4808 = vadd.f32 %v4806, %v4807
        %v4809 = vsel %vm482, %v4673, 0.0
        %v4810 = vadd.f32 %v4808, %v4809
        %v4811 = vsel %vm482, %v4678, 0.0
        %v4812 = vadd.f32 %v4810, %v4811
        %v4813 = vrot.slane %v4812, 4
        %v4814 = vadd.f32 %v4812, %v4813
        %v4815 = vrot.slane %v4814, 2
        %v4816 = vadd.f32 %v4814, %v4815
        %v4817 = vrot.slane %v4816, 1
        %v4818 = vadd.f32 %v4816, %v4817
        %v4819 = vrcp.pop 256.0
        %v4820 = vmul.f32 %v4818, %v4819
        %s4821 = sld [smem:[#allocation4 + $0x1]]
        %v4822 = vld [vmem:[%s5] sm:$0xff]
        %v4823 = vld [vmem:[%s6] sm:$0x1]
        %v4825 = vsel %vm482, %v4749, 0
        %4827 = vmatprep.subr.mxu0 0.0
        %4828 = vmatpush1.msra.mxu0 0.0
        %4829 = vmatprep.subr.mxu0 0.0
        %4830 = vmatpush1.msra.mxu0 0.0
        %4831 = vmatprep.subr.mxu0 0.0
        %4832 = vmatpush1.msra.mxu0 0.0
        %4833 = vmatprep.subr.mxu0 0.0
        %4834 = vmatpush1.msra.mxu0 0.0
        %4835 = vmatprep.subr.mxu0 0.0
        %4836 = vmatpush1.msra.mxu0 0.0
        %4837 = vmatprep.subr.mxu0 0.0
        %4838 = vmatpush1.msra.mxu0 0.0
        %4839 = vmatprep.subr.mxu0 0.0
        %4840 = vmatpush1.msra.mxu0 0.0
        %4841 = vmatprep.subr.mxu0 0.0
        %4842 = vmatpush1.msra.mxu0 0.0
        %4843 = vmatprep.subr.mxu0 0.0
        %4844 = vmatpush1.msra.mxu0 0.0
        %4845 = vmatprep.subr.mxu0 0.0
        %4846 = vmatpush1.msra.mxu0 0.0
        %4847 = vmatprep.subr.mxu0 0.0
        %4848 = vmatpush1.msra.mxu0 0.0
        %4849 = vmatprep.subr.mxu0 0.0
        %4850 = vmatpush1.msra.mxu0 0.0
        %4851 = vmatprep.subr.mxu0 0.0
        %4852 = vmatpush1.msra.mxu0 0.0
        %4853 = vmatprep.subr.mxu0 0.0
        %4854 = vmatpush1.msra.mxu0 0.0
        %4855 = vmatprep.subr.mxu0 0.0
        %4856 = vmatpush1.msra.mxu0 0.0
        %4857 = vmatprep.subr.mxu0 0.0
        %4858 = vmatpush1.msra.mxu0 %v4822
        %4859 = vmatprep.subr.mxu0 0.0
        %4860 = vmatpush2.msra.mxu0 0.0
        %4861 = vmatprep.subr.mxu0 0.0
        %4862 = vmatpush2.msra.mxu0 0.0
        %4863 = vmatprep.subr.mxu0 0.0
        %4864 = vmatpush2.msra.mxu0 0.0
        %4865 = vmatprep.subr.mxu0 0.0
        %4866 = vmatpush2.msra.mxu0 0.0
        %4867 = vmatprep.subr.mxu0 0.0
        %4868 = vmatpush2.msra.mxu0 0.0
        %4869 = vmatprep.subr.mxu0 0.0
        %4870 = vmatpush2.msra.mxu0 0.0
        %4871 = vmatprep.subr.mxu0 0.0
        %4872 = vmatpush2.msra.mxu0 0.0
        %4873 = vmatprep.subr.mxu0 0.0
        %4874 = vmatpush2.msra.mxu0 0.0
        %4875 = vmatprep.subr.mxu0 0.0
        %4876 = vmatpush2.msra.mxu0 0.0
        %4877 = vmatprep.subr.mxu0 0.0
        %4878 = vmatpush2.msra.mxu0 0.0
        %4879 = vmatprep.subr.mxu0 0.0
        %4880 = vmatpush2.msra.mxu0 0.0
        %4881 = vmatprep.subr.mxu0 0.0
        %4882 = vmatpush2.msra.mxu0 0.0
        %4883 = vmatprep.subr.mxu0 0.0
        %4884 = vmatpush2.msra.mxu0 0.0
        %4885 = vmatprep.subr.mxu0 0.0
        %4886 = vmatpush2.msra.mxu0 0.0
        %4887 = vmatprep.subr.mxu0 0.0
        %4888 = vmatpush2.msra.mxu0 0.0
        %4889 = vmatprep.subr.mxu0 0.0
        %4890 = vmatpush2.msra.mxu0 0.0
        %4891 = vmatprep.mubr.f32.mxu0 0.0
        %4892 = vmatmul.mubr.f32.gmra.mxu0 %v4825
        %v4893 = vpop.f32.mrf.mxu0
        %v4894 = vadd.f32 %v4823, %v4893
        %v4895 = vpop.f32.mrf.mxu0
        %4896 = vdwg.mxu0
        %vm4897 = vcmp.ge.f32.partialorder %v4894, 0.0
        %v4898 = vstv %s4821
        %v4899 = vmul.f32 %v4898, %v4894
        %v4900 = vsel %vm4897, %v4894, %v4899
        %v4901 = vld [vmem:[%s7] sm:$0x3]
        %v4902 = vld [vmem:[%s8] sm:$0x1]
        %vm4903 = vcmask 15360
        %v4905 = vsel %vm4903, %v4900, 0
        %vm4907 = vcmask 1041408
        %v4909 = vsel %vm4907, %v4901, 0
        %4911 = vmatprep.subr.mxu0 0.0
        %4912 = vmatpush1.msra.mxu0 0.0
        %4913 = vmatprep.subr.mxu0 0.0
        %4914 = vmatpush1.msra.mxu0 0.0
        %4915 = vmatprep.subr.mxu0 0.0
        %4916 = vmatpush1.msra.mxu0 0.0
        %4917 = vmatprep.subr.mxu0 0.0
        %4918 = vmatpush1.msra.mxu0 0.0
        %4919 = vmatprep.subr.mxu0 0.0
        %4920 = vmatpush1.msra.mxu0 0.0
        %4921 = vmatprep.subr.mxu0 0.0
        %4922 = vmatpush1.msra.mxu0 0.0
        %4923 = vmatprep.subr.mxu0 0.0
        %4924 = vmatpush1.msra.mxu0 0.0
        %4925 = vmatprep.subr.mxu0 0.0
        %4926 = vmatpush1.msra.mxu0 0.0
        %4927 = vmatprep.subr.mxu0 0.0
        %4928 = vmatpush1.msra.mxu0 0.0
        %4929 = vmatprep.subr.mxu0 0.0
        %4930 = vmatpush1.msra.mxu0 0.0
        %4931 = vmatprep.subr.mxu0 0.0
        %4932 = vmatpush1.msra.mxu0 0.0
        %4933 = vmatprep.subr.mxu0 0.0
        %4934 = vmatpush1.msra.mxu0 0.0
        %4935 = vmatprep.subr.mxu0 0.0
        %4936 = vmatpush1.msra.mxu0 0.0
        %4937 = vmatprep.subr.mxu0 0.0
        %4938 = vmatpush1.msra.mxu0 0.0
        %4939 = vmatprep.subr.mxu0 0.0
        %4940 = vmatpush1.msra.mxu0 0.0
        %4941 = vmatprep.subr.mxu0 0.0
        %4942 = vmatpush1.msra.mxu0 %v4909
        %4943 = vmatprep.subr.mxu0 0.0
        %4944 = vmatpush2.msra.mxu0 0.0
        %4945 = vmatprep.subr.mxu0 0.0
        %4946 = vmatpush2.msra.mxu0 0.0
        %4947 = vmatprep.subr.mxu0 0.0
        %4948 = vmatpush2.msra.mxu0 0.0
        %4949 = vmatprep.subr.mxu0 0.0
        %4950 = vmatpush2.msra.mxu0 0.0
        %4951 = vmatprep.subr.mxu0 0.0
        %4952 = vmatpush2.msra.mxu0 0.0
        %4953 = vmatprep.subr.mxu0 0.0
        %4954 = vmatpush2.msra.mxu0 0.0
        %4955 = vmatprep.subr.mxu0 0.0
        %4956 = vmatpush2.msra.mxu0 0.0
        %4957 = vmatprep.subr.mxu0 0.0
        %4958 = vmatpush2.msra.mxu0 0.0
        %4959 = vmatprep.subr.mxu0 0.0
        %4960 = vmatpush2.msra.mxu0 0.0
        %4961 = vmatprep.subr.mxu0 0.0
        %4962 = vmatpush2.msra.mxu0 0.0
        %4963 = vmatprep.subr.mxu0 0.0
        %4964 = vmatpush2.msra.mxu0 0.0
        %4965 = vmatprep.subr.mxu0 0.0
        %4966 = vmatpush2.msra.mxu0 0.0
        %4967 = vmatprep.subr.mxu0 0.0
        %4968 = vmatpush2.msra.mxu0 0.0
        %4969 = vmatprep.subr.mxu0 0.0
        %4970 = vmatpush2.msra.mxu0 0.0
        %4971 = vmatprep.subr.mxu0 0.0
        %4972 = vmatpush2.msra.mxu0 0.0
        %4973 = vmatprep.subr.mxu0 0.0
        %4974 = vmatpush2.msra.mxu0 0.0
        %4975 = vmatprep.mubr.f32.mxu0 0.0
        %4976 = vmatmul.mubr.f32.gmra.mxu0 %v4905
        %v4977 = vpop.f32.mrf.mxu0
        %v4978 = vadd.f32 %v4902, %v4977
        %v4979 = vpop.f32.mrf.mxu0
        %4980 = vdwg.mxu0
        %s4981 = sld [smem:[#allocation4 + $0x2]]
        %v4982 = vld [vmem:[%s9] sm:$0xff]
        %v4983 = vld [vmem:[%s10] sm:$0x1]
        %v4985 = vsel %vm482, %v4820, 0
        %4987 = vmatprep.subr.mxu0 0.0
        %4988 = vmatpush1.msra.mxu0 0.0
        %4989 = vmatprep.subr.mxu0 0.0
        %4990 = vmatpush1.msra.mxu0 0.0
        %4991 = vmatprep.subr.mxu0 0.0
        %4992 = vmatpush1.msra.mxu0 0.0
        %4993 = vmatprep.subr.mxu0 0.0
        %4994 = vmatpush1.msra.mxu0 0.0
        %4995 = vmatprep.subr.mxu0 0.0
        %4996 = vmatpush1.msra.mxu0 0.0
        %4997 = vmatprep.subr.mxu0 0.0
        %4998 = vmatpush1.msra.mxu0 0.0
        %4999 = vmatprep.subr.mxu0 0.0
        %5000 = vmatpush1.msra.mxu0 0.0
        %5001 = vmatprep.subr.mxu0 0.0
        %5002 = vmatpush1.msra.mxu0 0.0
        %5003 = vmatprep.subr.mxu0 0.0
        %5004 = vmatpush1.msra.mxu0 0.0
        %5005 = vmatprep.subr.mxu0 0.0
        %5006 = vmatpush1.msra.mxu0 0.0
        %5007 = vmatprep.subr.mxu0 0.0
        %5008 = vmatpush1.msra.mxu0 0.0
        %5009 = vmatprep.subr.mxu0 0.0
        %5010 = vmatpush1.msra.mxu0 0.0
        %5011 = vmatprep.subr.mxu0 0.0
        %5012 = vmatpush1.msra.mxu0 0.0
        %5013 = vmatprep.subr.mxu0 0.0
        %5014 = vmatpush1.msra.mxu0 0.0
        %5015 = vmatprep.subr.mxu0 0.0
        %5016 = vmatpush1.msra.mxu0 0.0
        %5017 = vmatprep.subr.mxu0 0.0
        %5018 = vmatpush1.msra.mxu0 %v4982
        %5019 = vmatprep.subr.mxu0 0.0
        %5020 = vmatpush2.msra.mxu0 0.0
        %5021 = vmatprep.subr.mxu0 0.0
        %5022 = vmatpush2.msra.mxu0 0.0
        %5023 = vmatprep.subr.mxu0 0.0
        %5024 = vmatpush2.msra.mxu0 0.0
        %5025 = vmatprep.subr.mxu0 0.0
        %5026 = vmatpush2.msra.mxu0 0.0
        %5027 = vmatprep.subr.mxu0 0.0
        %5028 = vmatpush2.msra.mxu0 0.0
        %5029 = vmatprep.subr.mxu0 0.0
        %5030 = vmatpush2.msra.mxu0 0.0
        %5031 = vmatprep.subr.mxu0 0.0
        %5032 = vmatpush2.msra.mxu0 0.0
        %5033 = vmatprep.subr.mxu0 0.0
        %5034 = vmatpush2.msra.mxu0 0.0
        %5035 = vmatprep.subr.mxu0 0.0
        %5036 = vmatpush2.msra.mxu0 0.0
        %5037 = vmatprep.subr.mxu0 0.0
        %5038 = vmatpush2.msra.mxu0 0.0
        %5039 = vmatprep.subr.mxu0 0.0
        %5040 = vmatpush2.msra.mxu0 0.0
        %5041 = vmatprep.subr.mxu0 0.0
        %5042 = vmatpush2.msra.mxu0 0.0
        %5043 = vmatprep.subr.mxu0 0.0
        %5044 = vmatpush2.msra.mxu0 0.0
        %5045 = vmatprep.subr.mxu0 0.0
        %5046 = vmatpush2.msra.mxu0 0.0
        %5047 = vmatprep.subr.mxu0 0.0
        %5048 = vmatpush2.msra.mxu0 0.0
        %5049 = vmatprep.subr.mxu0 0.0
        %5050 = vmatpush2.msra.mxu0 0.0
        %5051 = vmatprep.mubr.f32.mxu0 0.0
        %5052 = vmatmul.mubr.f32.gmra.mxu0 %v4985
        %v5053 = vpop.f32.mrf.mxu0
        %v5054 = vadd.f32 %v4983, %v5053
        %v5055 = vpop.f32.mrf.mxu0
        %5056 = vdwg.mxu0
        %vm5057 = vcmp.ge.f32.partialorder %v5054, 0.0
        %v5058 = vstv %s4981
        %v5059 = vmul.f32 %v5058, %v5054
        %v5060 = vsel %vm5057, %v5054, %v5059
        %v5061 = vld [vmem:[%s11] sm:$0x3]
        %v5062 = vld [vmem:[%s12] sm:$0x1]
        %v5064 = vsel %vm4903, %v5060, 0
        %v5067 = vsel %vm4907, %v5061, 0
        %5069 = vmatprep.subr.mxu0 0.0
        %5070 = vmatpush1.msra.mxu0 0.0
        %5071 = vmatprep.subr.mxu0 0.0
        %5072 = vmatpush1.msra.mxu0 0.0
        %5073 = vmatprep.subr.mxu0 0.0
        %5074 = vmatpush1.msra.mxu0 0.0
        %5075 = vmatprep.subr.mxu0 0.0
        %5076 = vmatpush1.msra.mxu0 0.0
        %5077 = vmatprep.subr.mxu0 0.0
        %5078 = vmatpush1.msra.mxu0 0.0
        %5079 = vmatprep.subr.mxu0 0.0
        %5080 = vmatpush1.msra.mxu0 0.0
        %5081 = vmatprep.subr.mxu0 0.0
        %5082 = vmatpush1.msra.mxu0 0.0
        %5083 = vmatprep.subr.mxu0 0.0
        %5084 = vmatpush1.msra.mxu0 0.0
        %5085 = vmatprep.subr.mxu0 0.0
        %5086 = vmatpush1.msra.mxu0 0.0
        %5087 = vmatprep.subr.mxu0 0.0
        %5088 = vmatpush1.msra.mxu0 0.0
        %5089 = vmatprep.subr.mxu0 0.0
        %5090 = vmatpush1.msra.mxu0 0.0
        %5091 = vmatprep.subr.mxu0 0.0
        %5092 = vmatpush1.msra.mxu0 0.0
        %5093 = vmatprep.subr.mxu0 0.0
        %5094 = vmatpush1.msra.mxu0 0.0
        %5095 = vmatprep.subr.mxu0 0.0
        %5096 = vmatpush1.msra.mxu0 0.0
        %5097 = vmatprep.subr.mxu0 0.0
        %5098 = vmatpush1.msra.mxu0 0.0
        %5099 = vmatprep.subr.mxu0 0.0
        %5100 = vmatpush1.msra.mxu0 %v5067
        %5101 = vmatprep.subr.mxu0 0.0
        %5102 = vmatpush2.msra.mxu0 0.0
        %5103 = vmatprep.subr.mxu0 0.0
        %5104 = vmatpush2.msra.mxu0 0.0
        %5105 = vmatprep.subr.mxu0 0.0
        %5106 = vmatpush2.msra.mxu0 0.0
        %5107 = vmatprep.subr.mxu0 0.0
        %5108 = vmatpush2.msra.mxu0 0.0
        %5109 = vmatprep.subr.mxu0 0.0
        %5110 = vmatpush2.msra.mxu0 0.0
        %5111 = vmatprep.subr.mxu0 0.0
        %5112 = vmatpush2.msra.mxu0 0.0
        %5113 = vmatprep.subr.mxu0 0.0
        %5114 = vmatpush2.msra.mxu0 0.0
        %5115 = vmatprep.subr.mxu0 0.0
        %5116 = vmatpush2.msra.mxu0 0.0
        %5117 = vmatprep.subr.mxu0 0.0
        %5118 = vmatpush2.msra.mxu0 0.0
        %5119 = vmatprep.subr.mxu0 0.0
        %5120 = vmatpush2.msra.mxu0 0.0
        %5121 = vmatprep.subr.mxu0 0.0
        %5122 = vmatpush2.msra.mxu0 0.0
        %5123 = vmatprep.subr.mxu0 0.0
        %5124 = vmatpush2.msra.mxu0 0.0
        %5125 = vmatprep.subr.mxu0 0.0
        %5126 = vmatpush2.msra.mxu0 0.0
        %5127 = vmatprep.subr.mxu0 0.0
        %5128 = vmatpush2.msra.mxu0 0.0
        %5129 = vmatprep.subr.mxu0 0.0
        %5130 = vmatpush2.msra.mxu0 0.0
        %5131 = vmatprep.subr.mxu0 0.0
        %5132 = vmatpush2.msra.mxu0 0.0
        %5133 = vmatprep.mubr.f32.mxu0 0.0
        %5134 = vmatmul.mubr.f32.gmra.mxu0 %v5064
        %v5135 = vpop.f32.mrf.mxu0
        %v5136 = vadd.f32 %v5062, %v5135
        %v5137 = vpop.f32.mrf.mxu0
        %5138 = vdwg.mxu0
        %v5139 = vadd.f32 %v4978, %v5136
        %v5140 = vxor.u32 %v5139, 2147483648
        %v5141 = vmul.f32 %v5140, 1.442695
        %v5142 = vpow.pop %v5141
        %v5143 = vadd.f32 %v5142, 1.0
        %v5144 = vrcp.pop %v5143
        %v5145 = vmul.f32 1.0, %v5144
        %v5146 = vlaneseq
        %v5147 = vshrl.u32 %v5146, 7
        %v5148 = vsub.s32 0, %v5147
        %v5149 = vrot.slane %v5145, %v5148
        %v5150 = vmul.f32 %v5149, %v4523
        %v5151 = vmul.f32 %v5149, %v4528
        %v5152 = vmul.f32 %v5149, %v4533
        %v5153 = vmul.f32 %v5149, %v4538
        %v5154 = vmul.f32 %v5149, %v4543
        %v5155 = vmul.f32 %v5149, %v4548
        %v5156 = vmul.f32 %v5149, %v4553
        %v5157 = vmul.f32 %v5149, %v4558
        %v5158 = vmul.f32 %v5149, %v4563
        %v5159 = vmul.f32 %v5149, %v4568
        %v5160 = vmul.f32 %v5149, %v4573
        %v5161 = vmul.f32 %v5149, %v4578
        %v5162 = vmul.f32 %v5149, %v4583
        %v5163 = vmul.f32 %v5149, %v4588
        %v5164 = vmul.f32 %v5149, %v4593
        %v5165 = vmul.f32 %v5149, %v4598
        %v5166 = vmul.f32 %v5149, %v4603
        %v5167 = vmul.f32 %v5149, %v4608
        %v5168 = vmul.f32 %v5149, %v4613
        %v5169 = vmul.f32 %v5149, %v4618
        %v5170 = vmul.f32 %v5149, %v4623
        %v5171 = vmul.f32 %v5149, %v4628
        %v5172 = vmul.f32 %v5149, %v4633
        %v5173 = vmul.f32 %v5149, %v4638
        %v5174 = vmul.f32 %v5149, %v4643
        %v5175 = vmul.f32 %v5149, %v4648
        %v5176 = vmul.f32 %v5149, %v4653
        %v5177 = vmul.f32 %v5149, %v4658
        %v5178 = vmul.f32 %v5149, %v4663
        %v5179 = vmul.f32 %v5149, %v4668
        %v5180 = vmul.f32 %v5149, %v4673
        %v5181 = vmul.f32 %v5149, %v4678
        %v5182 = vadd.f32 %v538, %v5150
        %v5183 = vadd.f32 %v539, %v5151
        %v5184 = vadd.f32 %v540, %v5152
        %v5185 = vadd.f32 %v541, %v5153
        %v5186 = vadd.f32 %v542, %v5154
        %v5187 = vadd.f32 %v543, %v5155
        %v5188 = vadd.f32 %v544, %v5156
        %v5189 = vadd.f32 %v545, %v5157
        %v5190 = vadd.f32 %v546, %v5158
        %v5191 = vadd.f32 %v547, %v5159
        %v5192 = vadd.f32 %v548, %v5160
        %v5193 = vadd.f32 %v549, %v5161
        %v5194 = vadd.f32 %v550, %v5162
        %v5195 = vadd.f32 %v551, %v5163
        %v5196 = vadd.f32 %v552, %v5164
        %v5197 = vadd.f32 %v553, %v5165
        %v5198 = vadd.f32 %v554, %v5166
        %v5199 = vadd.f32 %v555, %v5167
        %v5200 = vadd.f32 %v556, %v5168
        %v5201 = vadd.f32 %v557, %v5169
        %v5202 = vadd.f32 %v558, %v5170
        %v5203 = vadd.f32 %v559, %v5171
        %v5204 = vadd.f32 %v560, %v5172
        %v5205 = vadd.f32 %v561, %v5173
        %v5206 = vadd.f32 %v562, %v5174
        %v5207 = vadd.f32 %v563, %v5175
        %v5208 = vadd.f32 %v564, %v5176
        %v5209 = vadd.f32 %v565, %v5177
        %v5210 = vadd.f32 %v566, %v5178
        %v5211 = vadd.f32 %v567, %v5179
        %v5212 = vadd.f32 %v568, %v5180
        %v5213 = vadd.f32 %v569, %v5181
        %5214 = vst.msk [vmem:[%s481] sm:$0xff] %vm482, %v5182
        %5215 = vst.msk [vmem:[%s481 + $0x8] sm:$0xff] %vm482, %v5183
        %5216 = vst.msk [vmem:[%s481 + $0x10] sm:$0xff] %vm482, %v5184
        %5217 = vst.msk [vmem:[%s481 + $0x18] sm:$0xff] %vm482, %v5185
        %5218 = vst.msk [vmem:[%s481 + $0x20] sm:$0xff] %vm482, %v5186
        %5219 = vst.msk [vmem:[%s481 + $0x28] sm:$0xff] %vm482, %v5187
        %5220 = vst.msk [vmem:[%s481 + $0x30] sm:$0xff] %vm482, %v5188
        %5221 = vst.msk [vmem:[%s481 + $0x38] sm:$0xff] %vm482, %v5189
        %5222 = vst.msk [vmem:[%s481 + $0x40] sm:$0xff] %vm482, %v5190
        %5223 = vst.msk [vmem:[%s481 + $0x48] sm:$0xff] %vm482, %v5191
        %5224 = vst.msk [vmem:[%s481 + $0x50] sm:$0xff] %vm482, %v5192
        %5225 = vst.msk [vmem:[%s481 + $0x58] sm:$0xff] %vm482, %v5193
        %5226 = vst.msk [vmem:[%s481 + $0x60] sm:$0xff] %vm482, %v5194
        %5227 = vst.msk [vmem:[%s481 + $0x68] sm:$0xff] %vm482, %v5195
        %5228 = vst.msk [vmem:[%s481 + $0x70] sm:$0xff] %vm482, %v5196
        %5229 = vst.msk [vmem:[%s481 + $0x78] sm:$0xff] %vm482, %v5197
        %5230 = vst.msk [vmem:[%s481 + $0x80] sm:$0xff] %vm482, %v5198
        %5231 = vst.msk [vmem:[%s481 + $0x88] sm:$0xff] %vm482, %v5199
        %5232 = vst.msk [vmem:[%s481 + $0x90] sm:$0xff] %vm482, %v5200
        %5233 = vst.msk [vmem:[%s481 + $0x98] sm:$0xff] %vm482, %v5201
        %5234 = vst.msk [vmem:[%s481 + $0xa0] sm:$0xff] %vm482, %v5202
        %5235 = vst.msk [vmem:[%s481 + $0xa8] sm:$0xff] %vm482, %v5203
        %5236 = vst.msk [vmem:[%s481 + $0xb0] sm:$0xff] %vm482, %v5204
        %5237 = vst.msk [vmem:[%s481 + $0xb8] sm:$0xff] %vm482, %v5205
        %5238 = vst.msk [vmem:[%s481 + $0xc0] sm:$0xff] %vm482, %v5206
        %5239 = vst.msk [vmem:[%s481 + $0xc8] sm:$0xff] %vm482, %v5207
        %5240 = vst.msk [vmem:[%s481 + $0xd0] sm:$0xff] %vm482, %v5208
        %5241 = vst.msk [vmem:[%s481 + $0xd8] sm:$0xff] %vm482, %v5209
        %5242 = vst.msk [vmem:[%s481 + $0xe0] sm:$0xff] %vm482, %v5210
        %5243 = vst.msk [vmem:[%s481 + $0xe8] sm:$0xff] %vm482, %v5211
        %5244 = vst.msk [vmem:[%s481 + $0xf0] sm:$0xff] %vm482, %v5212
        %5245 = vst.msk [vmem:[%s481 + $0xf8] sm:$0xff] %vm482, %v5213
        %p5246 = scmp.lt.s32.totalorder %s26, 1
        %s5247 = scalar_select %p5246, %s26, 1
        %s5248 = smul.addr %s5247, 32
        %s5249 = smul.addr %s5248, 8
        %s5250 = scalar_lea.vmem %s14, %s5249
        // Predicated region
        $region81: #{rescab_forward.1} parent=75 // pred_check
          %p5251 = pneg %p343
        $region82: #{rescab_forward.1} parent=75 // pred_check_branch
          %5253 = sbr.rel (%p5251) target = $region84
        $region83: #{rescab_forward.1} parent=75 // pred_region
          _
        $region84: #{rescab_forward.1} parent=75 // pred_fallthru
          _
      $region76: #{rescab_forward.1} parent=5 // pred_fallthru
        _
      %p5254 = scmp.le.s32.totalorder 2, %s21
      // Predicated region
      $region85: #{rescab_forward.1} parent=5 // pred_check
        %p5255 = pneg %p5254
      $region86: #{rescab_forward.1} parent=5 // pred_check_branch
        %5257 = sbr.rel (%p5255) target = $region88
      $region87: #{rescab_forward.1} parent=5 // pred_region
        %s5258 = ssub.s32 %s21, 2
        // Predicated region
        $region89: #{rescab_forward.1} parent=87 // pred_check
          %p5259 = pneg %p349
        $region90: #{rescab_forward.1} parent=87 // pred_check_branch
          %5261 = sbr.rel (%p5259) target = $region92
        $region91: #{rescab_forward.1} parent=87 // pred_region
          %p5262 = scmp.lt.s32.totalorder %s27, 1
          %s5263 = scalar_select %p5262, %s27, 1
          %s5264 = smul.addr %s5263, 32
          %s5265 = smul.addr %s5264, 8
          %s5266 = scalar_lea.vmem %s14, %s5265
        $region92: #{rescab_forward.1} parent=87 // pred_fallthru
          _
      $region88: #{rescab_forward.1} parent=5 // pred_fallthru
        _
    $region6: #{rescab_forward.1} parent=1 // loop_footer
      %s25 = sadd.s32 1, %s21
    $region7: #{rescab_forward.1} parent=1 // loop_footer_branch
      %20 = sbr.rel target = $region3
    $region8: #{rescab_forward.1} parent=1 // loop_exit
      _
    %5267 = vsyncpa [#allocation5], 1
    %s5268 = scalar_lea.sflag [#allocation5], 1
    %5269 = vsyncpa %s5268, 1

</llo_original>
